<compile_context>
chip_gen: v7x
topology: tpu7x:2x2x1
jax: 0.10.0
libtpu: 0.0.40
codegen_flags: <defaults>
</compile_context>

<pallas_src>
import jax
import jax.numpy as jnp
from jax.experimental import pallas as pl
from jax.experimental.pallas import tpu as pltpu

HEAD_WIDTH = 128      # lane-dense padded Q width (one full vreg of lanes)
STREAM_HIDDEN = 256   # value / advantage stream hidden width (per the module)


# ---------------------------------------------------------------------------
# Kernel
# ---------------------------------------------------------------------------
def dueling_dqn_kernel(x_ref,
                       w1_ref, b1_ref,
                       w2_ref, b2_ref,
                       wva1_ref, bva1_ref,
                       whead_ref, bhead_ref,
                       q_ref):
    """One batch tile: 4 bf16 MXU GEMMs with f32 accumulation, fused bias+ReLU.

    The dueling combine is pre-folded into (whead, bhead), so lanes 0..A-1 of
    the output already hold Q(s, a); padded lanes have zero weight columns and
    are sliced off by the wrapper.
    """
    f32, bf16 = jnp.float32, jnp.bfloat16

    x = x_ref[...]                                                  # bf16
    # feature MLP: Linear -> ReLU, Linear -> ReLU (only bf16 activations live)
    h = jnp.maximum(
        jnp.dot(x, w1_ref[...], preferred_element_type=f32) + b1_ref[...],
        0.0).astype(bf16)
    h = jnp.maximum(
        jnp.dot(h, w2_ref[...], preferred_element_type=f32) + b2_ref[...],
        0.0).astype(bf16)
    # fused value+advantage first layers: one (h2, 512) GEMM, cols 0..255 value,
    # cols 256..511 advantage
    va = jnp.maximum(
        jnp.dot(h, wva1_ref[...], preferred_element_type=f32) + bva1_ref[...],
        0.0).astype(bf16)
    # fused heads with the dueling combine folded into the (512, 128) weight
    q = jnp.dot(va, whead_ref[...], preferred_element_type=f32) + bhead_ref[...]
    q_ref[...] = q.astype(q_ref.dtype)


# ---------------------------------------------------------------------------
# Wrapper
# ---------------------------------------------------------------------------
def _round_up(n, m):
    return -(-n // m) * m


def _pick_tile_b(batch):
    """Big tiles to amortize per-grid-step overhead; >=2 tiles once batch is
    large enough so v7x's two TensorCores both get work."""
    if batch < 256:
        return _round_up(batch, 8)                       # single tile
    return min(512, _round_up(_round_up(batch, 8) // 2, 8))


def dueling_dqn_forward(x, params, action_size, *, tile_b=None):
    """Batch-tiled pallas_call; weights stay VMEM-resident across grid steps."""
    w1, b1, w2, b2, wva1, bva1, whead, bhead = params
    batch, state_size = x.shape
    assert action_size <= HEAD_WIDTH

    if tile_b is None:
        tile_b = _pick_tile_b(batch)

    # cast input to bf16 in the wrapper (halves input DMA), pad batch to tile
    x = x.astype(jnp.bfloat16)
    pad = (-batch) % tile_b
    if pad:
        x = jnp.pad(x, ((0, pad), (0, 0)))
    padded_batch = x.shape[0]
    grid = (padded_batch // tile_b,)

    def resident(arr):
        # full-array block, same block index every grid step -> DMA'd once,
        # stays VMEM-resident for all batch tiles
        return pl.BlockSpec(arr.shape, lambda i: (0, 0))

    flops = 2 * padded_batch * (
        w1.shape[0] * w1.shape[1] + w2.shape[0] * w2.shape[1]
        + wva1.shape[0] * wva1.shape[1] + whead.shape[0] * whead.shape[1])
    param_bytes = sum(int(p.size) * p.dtype.itemsize for p in params)
    bytes_accessed = (int(x.size) * x.dtype.itemsize + param_bytes
                      + padded_batch * HEAD_WIDTH * 2)
    cost = pl.CostEstimate(flops=int(flops), transcendentals=0,
                           bytes_accessed=int(bytes_accessed))

    q_padded = pl.pallas_call(
        dueling_dqn_kernel,
        out_shape=jax.ShapeDtypeStruct((padded_batch, HEAD_WIDTH), jnp.bfloat16),
        grid=grid,
        in_specs=[
            pl.BlockSpec((tile_b, state_size), lambda i: (i, 0)),
            resident(w1), resident(b1),
            resident(w2), resident(b2),
            resident(wva1), resident(bva1),
            resident(whead), resident(bhead),
        ],
        out_specs=pl.BlockSpec((tile_b, HEAD_WIDTH), lambda i: (i, 0)),
        compiler_params=pltpu.CompilerParams(
            dimension_semantics=("parallel",)),
        cost_estimate=cost,
    )(x, w1, b1, w2, b2, wva1, bva1, whead, bhead)

    return q_padded[:batch, :action_size]


# ---------------------------------------------------------------------------
# Parameter init (matches the PyTorch module) + fusion for the kernel
# ---------------------------------------------------------------------------
def init_raw_params(key, state_size, action_size, hidden_sizes=None):
    """He (kaiming_normal, fan_in, relu) init, bias = 0.01 — f32, unfused,
    exactly mirroring the PyTorch module's layers (weights stored (in, out))."""
    if hidden_sizes is None:
        hidden_sizes = [512, 512]
    assert len(hidden_sizes) == 2, "kernel is specialized to two feature layers"
    h1, h2 = hidden_sizes

    def he(k, fan_in, fan_out):
        std = (2.0 / fan_in) ** 0.5
        return jax.random.normal(k, (fan_in, fan_out), dtype=jnp.float32) * std

    ks = jax.random.split(key, 6)
    w1 = he(ks[0], state_size, h1);        b1 = jnp.full((1, h1), 0.01, jnp.float32)
    w2 = he(ks[1], h1, h2);                b2 = jnp.full((1, h2), 0.01, jnp.float32)
    wv1 = he(ks[2], h2, STREAM_HIDDEN);    bv1 = jnp.full((1, STREAM_HIDDEN), 0.01, jnp.float32)
    wv2 = he(ks[3], STREAM_HIDDEN, 1);     bv2 = jnp.full((1, 1), 0.01, jnp.float32)
    wa1 = he(ks[4], h2, STREAM_HIDDEN);    ba1 = jnp.full((1, STREAM_HIDDEN), 0.01, jnp.float32)
    wa2 = he(ks[5], STREAM_HIDDEN, action_size)
    ba2 = jnp.full((1, action_size), 0.01, jnp.float32)
    return (w1, b1, w2, b2, wv1, bv1, wv2, bv2, wa1, ba1, wa2, ba2)


def fuse_params(raw_params, action_size, weight_dtype=jnp.bfloat16):
    """Fuse value/advantage stream-1 layers, fuse heads block-wise, and fold the
    dueling combine Q = V + (A - mean A) into the head weights. All algebra in
    f32; weights cast to `weight_dtype` last; biases stay f32."""
    (w1, b1, w2, b2, wv1, bv1, wv2, bv2, wa1, ba1, wa2, ba2) = raw_params
    A = action_size
    assert A <= HEAD_WIDTH

    # fused stream-1 layers: cols 0..255 value, cols 256..511 advantage
    wva1 = jnp.concatenate([wv1, wa1], axis=1)              # (h2, 512)
    bva1 = jnp.concatenate([bv1, ba1], axis=1)              # (1, 512)

    # fused head with dueling combine folded in:
    #   Q[:, j] = va_v @ wv2 + bv2 + va_a @ (wa2[:, j] - mean_k wa2[:, k])
    #             + (ba2[j] - mean_k ba2[k])
    wa2_c = wa2 - jnp.mean(wa2, axis=1, keepdims=True)      # (256, A)
    ba2_c = ba2 - jnp.mean(ba2, axis=1, keepdims=True)      # (1, A)
    head_in = wva1.shape[1]                                  # 512
    whead = jnp.zeros((head_in, HEAD_WIDTH), jnp.float32)
    whead = whead.at[:STREAM_HIDDEN, :A].set(jnp.broadcast_to(wv2, (STREAM_HIDDEN, A)))
    whead = whead.at[STREAM_HIDDEN:, :A].set(wa2_c)
    bhead = jnp.zeros((1, HEAD_WIDTH), jnp.float32)
    bhead = bhead.at[:, :A].set(bv2 + ba2_c)

    bf = lambda w: w.astype(weight_dtype)
    return (bf(w1), b1, bf(w2), b2, bf(wva1), bva1, bf(whead), bhead)


# ---------------------------------------------------------------------------
# Pure-JAX references
# ---------------------------------------------------------------------------
def dueling_dqn_module_ref(x, raw_params):
    """Faithful f32 port of the PyTorch module's forward (the spec)."""
    (w1, b1, w2, b2, wv1, bv1, wv2, bv2, wa1, ba1, wa2, ba2) = raw_params
    dot = lambda a, b: jnp.dot(a, b, precision=jax.lax.Precision.HIGHEST)
    h = jnp.maximum(dot(x, w1) + b1, 0.0)
    h = jnp.maximum(dot(h, w2) + b2, 0.0)
    v = dot(jnp.maximum(dot(h, wv1) + bv1, 0.0), wv2) + bv2
    a = dot(jnp.maximum(dot(h, wa1) + ba1, 0.0), wa2) + ba2
    return v + (a - jnp.mean(a, axis=1, keepdims=True))


def dueling_dqn_fused_math(x, fused_params, compute_dtype, precision=None):
    """Same math as the kernel in plain JAX, at a chosen compute dtype."""
    w1, b1, w2, b2, wva1, bva1, whead, bhead = fused_params
    f32 = jnp.float32
    c = compute_dtype
    dot = lambda a, b: jnp.dot(a.astype(c), b.astype(c),
                               preferred_element_type=f32, precision=precision)
    h = jnp.maximum(dot(x, w1) + b1, 0.0)
    h = jnp.maximum(dot(h, w2) + b2, 0.0)
    h = jnp.maximum(dot(h, wva1) + bva1, 0.0)
    return dot(h, whead) + bhead                              # (batch, 128) f32


# ---------------------------------------------------------------------------
if __name__ == "__main__":
    # Module-consistent shapes: default hidden_sizes=[512, 512]; a replay-batch
    # sized input so the batch grid (2 tiles of 128) is actually exercised.
    batch, state_size, action_size = 256, 32, 8

    key = jax.random.PRNGKey(0)
    k_x, k_p = jax.random.split(key)
    x = jax.random.normal(k_x, (batch, state_size), dtype=jnp.float32)

    raw = init_raw_params(k_p, state_size, action_size)
    params = fuse_params(raw, action_size)                    # bf16 weights

    q = dueling_dqn_forward(x, params, action_size)
    q = jax.block_until_ready(q)
    assert q.shape == (batch, action_size)
    assert q.dtype == jnp.bfloat16
    q_f32 = q.astype(jnp.float32)

    # 1) kernel vs same-numerics (bf16 weights / f32 accumulation) reference
    q_fused_ref = dueling_dqn_fused_math(x, params, jnp.bfloat16)[:, :action_size]
    assert jnp.allclose(q_f32, q_fused_ref, atol=2e-2, rtol=2e-2), \
        "kernel mismatch vs fused-numerics reference"

    # 2) the dueling-combine fold is exact algebra: f32 fused math == module math
    params_f32 = fuse_params(raw, action_size, weight_dtype=jnp.float32)
    q_fold = dueling_dqn_fused_math(
        x, params_f32, jnp.float32,
        precision=jax.lax.Precision.HIGHEST)[:, :action_size]
    q_module = dueling_dqn_module_ref(x, raw)
    assert jnp.allclose(q_fold, q_module, atol=1e-3, rtol=1e-3), \
        "weight-fold algebra mismatch vs PyTorch-style module reference"

    # TODO(synk): weights are deliberately bf16 (vs the fp32 PyTorch module);
    # kernel-vs-module agreement is therefore only to bf16 accuracy (checks 1+2
    # together bound it), so no direct tight assert against the f32 module.
    print("KERNEL_OK")
</pallas_src>

<mosaic_0001>
module attributes {stable_mosaic.version = 11 : i64} {
  func.func @dueling_dqn_kernel(%arg0: i32, %arg1: memref<128x32xbf16, #tpu.memory_space<vmem>>, %arg2: memref<32x512xbf16, #tpu.memory_space<vmem>>, %arg3: memref<1x512xf32, #tpu.memory_space<vmem>>, %arg4: memref<512x512xbf16, #tpu.memory_space<vmem>>, %arg5: memref<1x512xf32, #tpu.memory_space<vmem>>, %arg6: memref<512x512xbf16, #tpu.memory_space<vmem>>, %arg7: memref<1x512xf32, #tpu.memory_space<vmem>>, %arg8: memref<512x128xbf16, #tpu.memory_space<vmem>>, %arg9: memref<1x128xf32, #tpu.memory_space<vmem>>, %arg10: memref<128x128xbf16, #tpu.memory_space<vmem>>) attributes {dimension_semantics = [#tpu.dimension_semantics<parallel>], iteration_bounds = array<i64: 2>, scalar_prefetch = 0 : i64, scratch_operands = 0 : i64, tpu.core_type = #tpu.core_type<tc>, window_params = [{transform_indices = @transform_0, window_bounds = array<i64: 128, 32>}, {pipeline_mode = #tpu.pipeline_mode<synchronous>, transform_indices = @transform_1, window_bounds = array<i64: 32, 512>}, {pipeline_mode = #tpu.pipeline_mode<synchronous>, transform_indices = @transform_2, window_bounds = array<i64: 1, 512>}, {pipeline_mode = #tpu.pipeline_mode<synchronous>, transform_indices = @transform_3, window_bounds = array<i64: 512, 512>}, {pipeline_mode = #tpu.pipeline_mode<synchronous>, transform_indices = @transform_4, window_bounds = array<i64: 1, 512>}, {pipeline_mode = #tpu.pipeline_mode<synchronous>, transform_indices = @transform_5, window_bounds = array<i64: 512, 512>}, {pipeline_mode = #tpu.pipeline_mode<synchronous>, transform_indices = @transform_6, window_bounds = array<i64: 1, 512>}, {pipeline_mode = #tpu.pipeline_mode<synchronous>, transform_indices = @transform_7, window_bounds = array<i64: 512, 128>}, {pipeline_mode = #tpu.pipeline_mode<synchronous>, transform_indices = @transform_8, window_bounds = array<i64: 1, 128>}, {transform_indices = @transform_9, window_bounds = array<i64: 128, 128>}]} {
    %c0 = arith.constant 0 : index
    %c0_0 = arith.constant 0 : index
    %0 = vector.load %arg1[%c0, %c0_0] : memref<128x32xbf16, #tpu.memory_space<vmem>>, vector<128x32xbf16>
    %c0_1 = arith.constant 0 : index
    %c0_2 = arith.constant 0 : index
    %1 = vector.load %arg2[%c0_1, %c0_2] : memref<32x512xbf16, #tpu.memory_space<vmem>>, vector<32x512xbf16>
    %cst = arith.constant dense<0.000000e+00> : vector<128x512xf32>
    %2 = tpu.matmul %0, %1, %cst {dimension_numbers = #tpu.dot_dimension_numbers<[1], [0], [0], [1], [0, 0, 1, 1], [], []>} : vector<128x32xbf16>, vector<32x512xbf16>, vector<128x512xf32> -> vector<128x512xf32>
    %c0_3 = arith.constant 0 : index
    %c0_4 = arith.constant 0 : index
    %3 = vector.load %arg3[%c0_3, %c0_4] : memref<1x512xf32, #tpu.memory_space<vmem>>, vector<1x512xf32>
    %4 = vector.broadcast %3 : vector<1x512xf32> to vector<128x512xf32>
    %5 = arith.addf %2, %4 : vector<128x512xf32>
    %cst_5 = arith.constant 0.000000e+00 : f32
    %6 = vector.broadcast %cst_5 : f32 to vector<128x512xf32>
    %7 = arith.maximumf %5, %6 : vector<128x512xf32>
    %8 = arith.truncf %7 : vector<128x512xf32> to vector<128x512xbf16>
    %c0_6 = arith.constant 0 : index
    %c0_7 = arith.constant 0 : index
    %9 = vector.load %arg4[%c0_6, %c0_7] : memref<512x512xbf16, #tpu.memory_space<vmem>>, vector<512x512xbf16>
    %cst_8 = arith.constant dense<0.000000e+00> : vector<128x512xf32>
    %10 = tpu.matmul %8, %9, %cst_8 {dimension_numbers = #tpu.dot_dimension_numbers<[1], [0], [0], [1], [0, 0, 1, 1], [], []>} : vector<128x512xbf16>, vector<512x512xbf16>, vector<128x512xf32> -> vector<128x512xf32>
    %c0_9 = arith.constant 0 : index
    %c0_10 = arith.constant 0 : index
    %11 = vector.load %arg5[%c0_9, %c0_10] : memref<1x512xf32, #tpu.memory_space<vmem>>, vector<1x512xf32>
    %12 = vector.broadcast %11 : vector<1x512xf32> to vector<128x512xf32>
    %13 = arith.addf %10, %12 : vector<128x512xf32>
    %cst_11 = arith.constant 0.000000e+00 : f32
    %14 = vector.broadcast %cst_11 : f32 to vector<128x512xf32>
    %15 = arith.maximumf %13, %14 : vector<128x512xf32>
    %16 = arith.truncf %15 : vector<128x512xf32> to vector<128x512xbf16>
    %c0_12 = arith.constant 0 : index
    %c0_13 = arith.constant 0 : index
    %17 = vector.load %arg6[%c0_12, %c0_13] : memref<512x512xbf16, #tpu.memory_space<vmem>>, vector<512x512xbf16>
    %cst_14 = arith.constant dense<0.000000e+00> : vector<128x512xf32>
    %18 = tpu.matmul %16, %17, %cst_14 {dimension_numbers = #tpu.dot_dimension_numbers<[1], [0], [0], [1], [0, 0, 1, 1], [], []>} : vector<128x512xbf16>, vector<512x512xbf16>, vector<128x512xf32> -> vector<128x512xf32>
    %c0_15 = arith.constant 0 : index
    %c0_16 = arith.constant 0 : index
    %19 = vector.load %arg7[%c0_15, %c0_16] : memref<1x512xf32, #tpu.memory_space<vmem>>, vector<1x512xf32>
    %20 = vector.broadcast %19 : vector<1x512xf32> to vector<128x512xf32>
    %21 = arith.addf %18, %20 : vector<128x512xf32>
    %cst_17 = arith.constant 0.000000e+00 : f32
    %22 = vector.broadcast %cst_17 : f32 to vector<128x512xf32>
    %23 = arith.maximumf %21, %22 : vector<128x512xf32>
    %24 = arith.truncf %23 : vector<128x512xf32> to vector<128x512xbf16>
    %c0_18 = arith.constant 0 : index
    %c0_19 = arith.constant 0 : index
    %25 = vector.load %arg8[%c0_18, %c0_19] : memref<512x128xbf16, #tpu.memory_space<vmem>>, vector<512x128xbf16>
    %cst_20 = arith.constant dense<0.000000e+00> : vector<128x128xf32>
    %26 = tpu.matmul %24, %25, %cst_20 {dimension_numbers = #tpu.dot_dimension_numbers<[1], [0], [0], [1], [0, 0, 1, 1], [], []>} : vector<128x512xbf16>, vector<512x128xbf16>, vector<128x128xf32> -> vector<128x128xf32>
    %c0_21 = arith.constant 0 : index
    %c0_22 = arith.constant 0 : index
    %27 = vector.load %arg9[%c0_21, %c0_22] : memref<1x128xf32, #tpu.memory_space<vmem>>, vector<1x128xf32>
    %28 = vector.broadcast %27 : vector<1x128xf32> to vector<128x128xf32>
    %29 = arith.addf %26, %28 : vector<128x128xf32>
    %30 = arith.truncf %29 : vector<128x128xf32> to vector<128x128xbf16>
    %c0_23 = arith.constant 0 : index
    %c0_24 = arith.constant 0 : index
    %31 = vector.load %arg10[%c0_23, %c0_24] : memref<128x128xbf16, #tpu.memory_space<vmem>>, vector<128x128xbf16>
    tpu.vector_store %arg10[%c0_23, %c0_24], %30 {strides = array<i32>} : memref<128x128xbf16, #tpu.memory_space<vmem>>, vector<128x128xbf16>,
    return
  }
  func.func @transform_0(%arg0: i32) -> (i32, i32) {
    %c0_i32 = arith.constant 0 : i32
    %c0_i32_0 = arith.constant 0 : i32
    return %arg0, %c0_i32 : i32, i32
  }
  func.func @transform_1(%arg0: i32) -> (i32, i32) {
    %c0_i32 = arith.constant 0 : i32
    %c0_i32_0 = arith.constant 0 : i32
    %c0_i32_1 = arith.constant 0 : i32
    return %c0_i32, %c0_i32_0 : i32, i32
  }
  func.func @transform_2(%arg0: i32) -> (i32, i32) {
    %c0_i32 = arith.constant 0 : i32
    %c0_i32_0 = arith.constant 0 : i32
    %c0_i32_1 = arith.constant 0 : i32
    return %c0_i32, %c0_i32_0 : i32, i32
  }
  func.func @transform_3(%arg0: i32) -> (i32, i32) {
    %c0_i32 = arith.constant 0 : i32
    %c0_i32_0 = arith.constant 0 : i32
    %c0_i32_1 = arith.constant 0 : i32
    return %c0_i32, %c0_i32_0 : i32, i32
  }
  func.func @transform_4(%arg0: i32) -> (i32, i32) {
    %c0_i32 = arith.constant 0 : i32
    %c0_i32_0 = arith.constant 0 : i32
    %c0_i32_1 = arith.constant 0 : i32
    return %c0_i32, %c0_i32_0 : i32, i32
  }
  func.func @transform_5(%arg0: i32) -> (i32, i32) {
    %c0_i32 = arith.constant 0 : i32
    %c0_i32_0 = arith.constant 0 : i32
    %c0_i32_1 = arith.constant 0 : i32
    return %c0_i32, %c0_i32_0 : i32, i32
  }
  func.func @transform_6(%arg0: i32) -> (i32, i32) {
    %c0_i32 = arith.constant 0 : i32
    %c0_i32_0 = arith.constant 0 : i32
    %c0_i32_1 = arith.constant 0 : i32
    return %c0_i32, %c0_i32_0 : i32, i32
  }
  func.func @transform_7(%arg0: i32) -> (i32, i32) {
    %c0_i32 = arith.constant 0 : i32
    %c0_i32_0 = arith.constant 0 : i32
    %c0_i32_1 = arith.constant 0 : i32
    return %c0_i32, %c0_i32_0 : i32, i32
  }
  func.func @transform_8(%arg0: i32) -> (i32, i32) {
    %c0_i32 = arith.constant 0 : i32
    %c0_i32_0 = arith.constant 0 : i32
    %c0_i32_1 = arith.constant 0 : i32
    return %c0_i32, %c0_i32_0 : i32, i32
  }
  func.func @transform_9(%arg0: i32) -> (i32, i32) {
    %c0_i32 = arith.constant 0 : i32
    %c0_i32_0 = arith.constant 0 : i32
    return %arg0, %c0_i32 : i32, i32
  }
}

</mosaic_0001>

<llo_original>
// kernel: tpu_custom_call.1
$region0: #{tpu_custom_call.1}
  #allocation0 [shape = 'u32[]', space=smem, size = 0x4, offset = 0x4, fixed_abs, tag = 'smem constant byte address 0x4 - core index']
  #allocation1 [shape = 'u32[144,128]{1,0:T(1,128)}', space=vmem, size = 0x12000, scoped, tag = 'internal scratch']
  %s0 = inlined_call_operand.vmem [shape: bf16[256,32], index: 0, kind: input, shape index: {}]
  %s1 = inlined_call_operand.vmem [shape: bf16[32,512], index: 1, kind: input, shape index: {}]
  %s2 = inlined_call_operand.vmem [shape: f32[1,512], index: 2, kind: input, shape index: {}]
  %s3 = inlined_call_operand.hbm [shape: bf16[512,512], index: 3, kind: input, shape index: {}]
  %s4 = inlined_call_operand.vmem [shape: f32[1,512], index: 4, kind: input, shape index: {}]
  %s5 = inlined_call_operand.hbm [shape: bf16[512,512], index: 5, kind: input, shape index: {}]
  %s6 = inlined_call_operand.vmem [shape: f32[1,512], index: 6, kind: input, shape index: {}]
  %s7 = inlined_call_operand.hbm [shape: bf16[512,128], index: 7, kind: input, shape index: {}]
  %s8 = inlined_call_operand.vmem [shape: f32[1,128], index: 8, kind: input, shape index: {}]
  %s9 = inlined_call_operand.hbm [shape: bf16[256,128], index: 9, kind: output, shape index: {}]
  %s10 = sld [smem:[#allocation0]]
  $region81: #{tpu_custom_call.1} parent=0
    _
  %s12 = ssub.s32 1, %s10
  %s13 = scalar_select 0, %s12, %s10
  $region1: #{tpu_custom_call.1} parent=0
    #allocation2 [shape = 'u8[524288]{0}', space=vmem, size = 0x80000, scoped, tag = 'input window, operand 3, single buffered']
    #allocation3 [shape = 's32[2]{0}', space=sflag, size = 0x8, scoped, tag = 'scoped memory for tpu_custom_call.1']
    #allocation4 [shape = 's32[2]{0}', space=sflag, size = 0x8, scoped, tag = 'scoped memory for tpu_custom_call.1']
    #allocation5 [shape = 'u8[524288]{0}', space=vmem, size = 0x80000, scoped, tag = 'input window, operand 5, single buffered']
    #allocation6 [shape = 's32[1]{0}', space=sflag, size = 0x4, scoped, tag = 'scoped memory for tpu_custom_call.1']
    #allocation7 [shape = 'u8[131072]{0}', space=vmem, size = 0x20000, scoped, tag = 'input window, operand 7, single buffered']
    #allocation8 [shape = 'u8[65536]{0}', space=vmem, size = 0x10000, scoped, tag = 'output window, operand 0']
    %14 = vsyncpa [#allocation3], 0
    %15 = vsyncpa [#allocation6], 0
    %16 = vsyncpa [#allocation4], 0
    %s17 = scalar_lea.sflag [#allocation4], 1
    %18 = vsyncpa %s17, 0
    loop: start=0, step=1, limit=4
    $region2: #{tpu_custom_call.1} parent=1 // loop_pre_header
      _
    $region3: #{tpu_custom_call.1} parent=1 // loop_header
      %s20 = sphi 0, %s24
      %p21 = scmp.ge.s32.totalorder %s20, 4
      %s30 = sphi 0, %s32
      %s33 = sphi 0, %s30
      %s34 = sphi 0, %s33
      %s50 = sphi 0, %s34
      %s54 = sphi 0, %s54
      %s56 = sphi 0, %s54
      %s57 = sphi 0, %s56
      %s71 = sphi 0, %s57
      %s75 = sphi 0, %s75
      %s77 = sphi 0, %s75
      %s78 = sphi 0, %s77
      %s92 = sphi 0, %s78
      %s96 = sphi 0, %s96
      %s98 = sphi 0, %s96
      %s99 = sphi 0, %s98
      %s113 = sphi 0, %s99
      %s117 = sphi 0, %s117
      %s119 = sphi 0, %s117
      %s120 = sphi 0, %s119
      %s134 = sphi 0, %s120
      %s138 = sphi 0, %s138
      %s140 = sphi 0, %s138
      %s141 = sphi 0, %s140
      %s155 = sphi 0, %s141
      %s159 = sphi 0, %s159
      %s161 = sphi 0, %s159
      %s162 = sphi 0, %s161
      %s176 = sphi 0, %s162
      %s180 = sphi 0, %s180
      %s182 = sphi 0, %s180
      %s183 = sphi 0, %s182
      %s197 = sphi 0, %s183
      %s201 = sphi 0, %s201
      %s203 = sphi 0, %s201
      %s204 = sphi 0, %s203
      %s218 = sphi 0, %s204
      %s224 = sphi 0, %s226
      %s227 = sphi 0, %s224
      %s228 = sphi 0, %s227
      %s244 = sphi 0, %s228
    $region4: #{tpu_custom_call.1} parent=1 // loop_header_branch
      %23 = sbr.rel (%p21) target = $region8
    $region5: #{tpu_custom_call.1} parent=1 // loop_body
      %s25 = ssub.s32 %s20, 1
      %s26 = ssub.s32 %s20, 2
      %s27 = sadd.s32 %s20, 1
      %s28 = ssub.s32 %s20, %s27
      %p29 = scmp.eq.s32.totalorder %s28, 0
      %s31 = sadd.s32 %s30, 1
      %s32 = scalar_select %p29, %s30, %s31
      %p35 = pneg %p29
      %p36 = scmp.eq.s32.totalorder %s20, 1
      %p37 = por %p35, %p36
      %p38 = scmp.ne.s32.totalorder %s30, %s33
      %p39 = scmp.eq.s32.totalorder %s20, 0
      %p40 = por %p38, %p39
      %p41 = scmp.ne.s32.totalorder %s30, %s33
      %p42 = scmp.eq.s32.totalorder %s25, 1
      %p43 = por %p41, %p42
      %p44 = scmp.ne.s32.totalorder %s33, %s34
      %p45 = scmp.eq.s32.totalorder %s25, 0
      %p46 = por %p44, %p45
      %p47 = scmp.ne.s32.totalorder %s33, %s34
      %p48 = scmp.eq.s32.totalorder %s26, 1
      %p49 = por %p47, %p48
      %p51 = scmp.ne.s32.totalorder %s34, %s50
      %p52 = scmp.eq.s32.totalorder %s26, 0
      %p53 = por %p51, %p52
      %s55 = sadd.s32 %s54, 1
      %p58 = scmp.eq.s32.totalorder %s20, 1
      %p59 = scmp.ne.s32.totalorder %s54, %s56
      %p60 = scmp.eq.s32.totalorder %s20, 0
      %p61 = por %p59, %p60
      %p62 = scmp.ne.s32.totalorder %s54, %s56
      %p63 = scmp.eq.s32.totalorder %s25, 1
      %p64 = por %p62, %p63
      %p65 = scmp.ne.s32.totalorder %s56, %s57
      %p66 = scmp.eq.s32.totalorder %s25, 0
      %p67 = por %p65, %p66
      %p68 = scmp.ne.s32.totalorder %s56, %s57
      %p69 = scmp.eq.s32.totalorder %s26, 1
      %p70 = por %p68, %p69
      %p72 = scmp.ne.s32.totalorder %s57, %s71
      %p73 = scmp.eq.s32.totalorder %s26, 0
      %p74 = por %p72, %p73
      %s76 = sadd.s32 %s75, 1
      %p79 = scmp.eq.s32.totalorder %s20, 1
      %p80 = scmp.ne.s32.totalorder %s75, %s77
      %p81 = scmp.eq.s32.totalorder %s20, 0
      %p82 = por %p80, %p81
      %p83 = scmp.ne.s32.totalorder %s75, %s77
      %p84 = scmp.eq.s32.totalorder %s25, 1
      %p85 = por %p83, %p84
      %p86 = scmp.ne.s32.totalorder %s77, %s78
      %p87 = scmp.eq.s32.totalorder %s25, 0
      %p88 = por %p86, %p87
      %p89 = scmp.ne.s32.totalorder %s77, %s78
      %p90 = scmp.eq.s32.totalorder %s26, 1
      %p91 = por %p89, %p90
      %p93 = scmp.ne.s32.totalorder %s78, %s92
      %p94 = scmp.eq.s32.totalorder %s26, 0
      %p95 = por %p93, %p94
      %s97 = sadd.s32 %s96, 1
      %p100 = scmp.eq.s32.totalorder %s20, 1
      %p101 = scmp.ne.s32.totalorder %s96, %s98
      %p102 = scmp.eq.s32.totalorder %s20, 0
      %p103 = por %p101, %p102
      %p104 = scmp.ne.s32.totalorder %s96, %s98
      %p105 = scmp.eq.s32.totalorder %s25, 1
      %p106 = por %p104, %p105
      %p107 = scmp.ne.s32.totalorder %s98, %s99
      %p108 = scmp.eq.s32.totalorder %s25, 0
      %p109 = por %p107, %p108
      %p110 = scmp.ne.s32.totalorder %s98, %s99
      %p111 = scmp.eq.s32.totalorder %s26, 1
      %p112 = por %p110, %p111
      %p114 = scmp.ne.s32.totalorder %s99, %s113
      %p115 = scmp.eq.s32.totalorder %s26, 0
      %p116 = por %p114, %p115
      %s118 = sadd.s32 %s117, 1
      %p121 = scmp.eq.s32.totalorder %s20, 1
      %p122 = scmp.ne.s32.totalorder %s117, %s119
      %p123 = scmp.eq.s32.totalorder %s20, 0
      %p124 = por %p122, %p123
      %p125 = scmp.ne.s32.totalorder %s117, %s119
      %p126 = scmp.eq.s32.totalorder %s25, 1
      %p127 = por %p125, %p126
      %p128 = scmp.ne.s32.totalorder %s119, %s120
      %p129 = scmp.eq.s32.totalorder %s25, 0
      %p130 = por %p128, %p129
      %p131 = scmp.ne.s32.totalorder %s119, %s120
      %p132 = scmp.eq.s32.totalorder %s26, 1
      %p133 = por %p131, %p132
      %p135 = scmp.ne.s32.totalorder %s120, %s134
      %p136 = scmp.eq.s32.totalorder %s26, 0
      %p137 = por %p135, %p136
      %s139 = sadd.s32 %s138, 1
      %p142 = scmp.eq.s32.totalorder %s20, 1
      %p143 = scmp.ne.s32.totalorder %s138, %s140
      %p144 = scmp.eq.s32.totalorder %s20, 0
      %p145 = por %p143, %p144
      %p146 = scmp.ne.s32.totalorder %s138, %s140
      %p147 = scmp.eq.s32.totalorder %s25, 1
      %p148 = por %p146, %p147
      %p149 = scmp.ne.s32.totalorder %s140, %s141
      %p150 = scmp.eq.s32.totalorder %s25, 0
      %p151 = por %p149, %p150
      %p152 = scmp.ne.s32.totalorder %s140, %s141
      %p153 = scmp.eq.s32.totalorder %s26, 1
      %p154 = por %p152, %p153
      %p156 = scmp.ne.s32.totalorder %s141, %s155
      %p157 = scmp.eq.s32.totalorder %s26, 0
      %p158 = por %p156, %p157
      %s160 = sadd.s32 %s159, 1
      %p163 = scmp.eq.s32.totalorder %s20, 1
      %p164 = scmp.ne.s32.totalorder %s159, %s161
      %p165 = scmp.eq.s32.totalorder %s20, 0
      %p166 = por %p164, %p165
      %p167 = scmp.ne.s32.totalorder %s159, %s161
      %p168 = scmp.eq.s32.totalorder %s25, 1
      %p169 = por %p167, %p168
      %p170 = scmp.ne.s32.totalorder %s161, %s162
      %p171 = scmp.eq.s32.totalorder %s25, 0
      %p172 = por %p170, %p171
      %p173 = scmp.ne.s32.totalorder %s161, %s162
      %p174 = scmp.eq.s32.totalorder %s26, 1
      %p175 = por %p173, %p174
      %p177 = scmp.ne.s32.totalorder %s162, %s176
      %p178 = scmp.eq.s32.totalorder %s26, 0
      %p179 = por %p177, %p178
      %s181 = sadd.s32 %s180, 1
      %p184 = scmp.eq.s32.totalorder %s20, 1
      %p185 = scmp.ne.s32.totalorder %s180, %s182
      %p186 = scmp.eq.s32.totalorder %s20, 0
      %p187 = por %p185, %p186
      %p188 = scmp.ne.s32.totalorder %s180, %s182
      %p189 = scmp.eq.s32.totalorder %s25, 1
      %p190 = por %p188, %p189
      %p191 = scmp.ne.s32.totalorder %s182, %s183
      %p192 = scmp.eq.s32.totalorder %s25, 0
      %p193 = por %p191, %p192
      %p194 = scmp.ne.s32.totalorder %s182, %s183
      %p195 = scmp.eq.s32.totalorder %s26, 1
      %p196 = por %p194, %p195
      %p198 = scmp.ne.s32.totalorder %s183, %s197
      %p199 = scmp.eq.s32.totalorder %s26, 0
      %p200 = por %p198, %p199
      %s202 = sadd.s32 %s201, 1
      %p205 = scmp.eq.s32.totalorder %s20, 1
      %p206 = scmp.ne.s32.totalorder %s201, %s203
      %p207 = scmp.eq.s32.totalorder %s20, 0
      %p208 = por %p206, %p207
      %p209 = scmp.ne.s32.totalorder %s201, %s203
      %p210 = scmp.eq.s32.totalorder %s25, 1
      %p211 = por %p209, %p210
      %p212 = scmp.ne.s32.totalorder %s203, %s204
      %p213 = scmp.eq.s32.totalorder %s25, 0
      %p214 = por %p212, %p213
      %p215 = scmp.ne.s32.totalorder %s203, %s204
      %p216 = scmp.eq.s32.totalorder %s26, 1
      %p217 = por %p215, %p216
      %p219 = scmp.ne.s32.totalorder %s204, %s218
      %p220 = scmp.eq.s32.totalorder %s26, 0
      %p221 = por %p219, %p220
      %s222 = ssub.s32 %s20, %s27
      %p223 = scmp.eq.s32.totalorder %s222, 0
      %s225 = sadd.s32 %s224, 1
      %s226 = scalar_select %p223, %s224, %s225
      %p229 = pneg %p223
      %p230 = scmp.eq.s32.totalorder %s20, 1
      %p231 = por %p229, %p230
      %p232 = scmp.ne.s32.totalorder %s224, %s227
      %p233 = scmp.eq.s32.totalorder %s20, 0
      %p234 = por %p232, %p233
      %p235 = scmp.ne.s32.totalorder %s224, %s227
      %p236 = scmp.eq.s32.totalorder %s25, 1
      %p237 = por %p235, %p236
      %p238 = scmp.ne.s32.totalorder %s227, %s228
      %p239 = scmp.eq.s32.totalorder %s25, 0
      %p240 = por %p238, %p239
      %p241 = scmp.ne.s32.totalorder %s227, %s228
      %p242 = scmp.eq.s32.totalorder %s26, 1
      %p243 = por %p241, %p242
      %p245 = scmp.ne.s32.totalorder %s228, %s244
      %p246 = scmp.eq.s32.totalorder %s26, 0
      %p247 = por %p245, %p246
      %p248 = scmp.le.s32.totalorder 1, %s20
      %p249 = scmp.lt.s32.totalorder %s20, 3
      %p250 = pnand %p248, %p249
      %p251 = pneg %p250
      // Predicated region
      $region9: #{tpu_custom_call.1} parent=5 // pred_check
        _
      $region10: #{tpu_custom_call.1} parent=5 // pred_check_branch
        %253 = sbr.rel (%p250) target = $region12
      $region11: #{tpu_custom_call.1} parent=5 // pred_region
        %s254 = ssub.s32 %s20, 1
        // Predicated region
        $region13: #{tpu_custom_call.1} parent=11 // pred_check
          %p255 = pneg %p67
        $region14: #{tpu_custom_call.1} parent=11 // pred_check_branch
          %257 = sbr.rel (%p255) target = $region16
        $region15: #{tpu_custom_call.1} parent=11 // pred_region
          _
        $region16: #{tpu_custom_call.1} parent=11 // pred_fallthru
          _
        // Predicated region
        $region17: #{tpu_custom_call.1} parent=11 // pred_check
          %p258 = pneg %p88
        $region18: #{tpu_custom_call.1} parent=11 // pred_check_branch
          %260 = sbr.rel (%p258) target = $region20
        $region19: #{tpu_custom_call.1} parent=11 // pred_region
          _
        $region20: #{tpu_custom_call.1} parent=11 // pred_fallthru
          _
        // Predicated region
        $region21: #{tpu_custom_call.1} parent=11 // pred_check
          %p261 = pneg %p109
        $region22: #{tpu_custom_call.1} parent=11 // pred_check_branch
          %263 = sbr.rel (%p261) target = $region24
        $region23: #{tpu_custom_call.1} parent=11 // pred_region
          %s265 = ssub.s32 16384, 16384
          %266 = vsyncadd [#allocation3], %s265
          %s267 = sshll.u32 [#allocation2], 4
          %s268 = int_to_ptr.vmem [resolvable:$true] %s267
          %273 = dma.hbm_to_vmem [thread:$0]  %s3, 16384, %s268, [#allocation3], 256, 256, 16
        $region24: #{tpu_custom_call.1} parent=11 // pred_fallthru
          _
        // Predicated region
        $region25: #{tpu_custom_call.1} parent=11 // pred_check
          %p274 = pneg %p130
        $region26: #{tpu_custom_call.1} parent=11 // pred_check_branch
          %276 = sbr.rel (%p274) target = $region28
        $region27: #{tpu_custom_call.1} parent=11 // pred_region
          _
        $region28: #{tpu_custom_call.1} parent=11 // pred_fallthru
          _
        // Predicated region
        $region29: #{tpu_custom_call.1} parent=11 // pred_check
          %p277 = pneg %p151
        $region30: #{tpu_custom_call.1} parent=11 // pred_check_branch
          %279 = sbr.rel (%p277) target = $region32
        $region31: #{tpu_custom_call.1} parent=11 // pred_region
          %s281 = ssub.s32 16384, 16384
          %282 = vsyncadd [#allocation6], %s281
          %s283 = sshll.u32 [#allocation5], 4
          %s284 = int_to_ptr.vmem [resolvable:$true] %s283
          %289 = dma.hbm_to_vmem [thread:$0]  %s5, 16384, %s284, [#allocation6], 256, 256, 16
        $region32: #{tpu_custom_call.1} parent=11 // pred_fallthru
          _
        // Predicated region
        $region33: #{tpu_custom_call.1} parent=11 // pred_check
          %p290 = pneg %p172
        $region34: #{tpu_custom_call.1} parent=11 // pred_check_branch
          %292 = sbr.rel (%p290) target = $region36
        $region35: #{tpu_custom_call.1} parent=11 // pred_region
          _
        $region36: #{tpu_custom_call.1} parent=11 // pred_fallthru
          _
        // Predicated region
        $region37: #{tpu_custom_call.1} parent=11 // pred_check
          %p293 = pneg %p193
        $region38: #{tpu_custom_call.1} parent=11 // pred_check_branch
          %295 = sbr.rel (%p293) target = $region40
        $region39: #{tpu_custom_call.1} parent=11 // pred_region
          %s297 = ssub.s32 4096, 4096
          %298 = vsyncadd [#allocation6], %s297
          %s299 = sshll.u32 [#allocation7], 4
          %s300 = int_to_ptr.vmem [resolvable:$true] %s299
          %305 = dma.hbm_to_vmem [thread:$0]  %s7, 4096, %s300, [#allocation6], 64, 64, 4
        $region40: #{tpu_custom_call.1} parent=11 // pred_fallthru
          _
        // Predicated region
        $region41: #{tpu_custom_call.1} parent=11 // pred_check
          %p306 = pneg %p214
        $region42: #{tpu_custom_call.1} parent=11 // pred_check_branch
          %308 = sbr.rel (%p306) target = $region44
        $region43: #{tpu_custom_call.1} parent=11 // pred_region
          _
        $region44: #{tpu_custom_call.1} parent=11 // pred_fallthru
          _
      $region12: #{tpu_custom_call.1} parent=5 // pred_fallthru
        _
      %p309 = scmp.lt.s32.totalorder %s20, 2
      // Predicated region
      $region45: #{tpu_custom_call.1} parent=5 // pred_check
        %p310 = pneg %p309
      $region46: #{tpu_custom_call.1} parent=5 // pred_check_branch
        %312 = sbr.rel (%p310) target = $region48
      $region47: #{tpu_custom_call.1} parent=5 // pred_region
        // Predicated region
        $region49: #{tpu_custom_call.1} parent=47 // pred_check
          %p313 = pneg %p40
        $region50: #{tpu_custom_call.1} parent=47 // pred_check_branch
          %315 = sbr.rel (%p313) target = $region52
        $region51: #{tpu_custom_call.1} parent=47 // pred_region
          %s316 = smul.u32 16, %s20
          %p317 = scmp.lt.s32.totalorder %s316, 31
          %s318 = scalar_select %p317, %s316, 31
          %s319 = smul.addr %s318, 4
          %s320 = scalar_lea.vmem %s0, %s319
          %s321 = smul.u32 16, %s20
        $region52: #{tpu_custom_call.1} parent=47 // pred_fallthru
          _
      $region48: #{tpu_custom_call.1} parent=5 // pred_fallthru
        _
      %p322 = scmp.le.s32.totalorder 1, %s20
      %p323 = scmp.lt.s32.totalorder %s20, 3
      %p324 = pnand %p322, %p323
      %p325 = pneg %p324
      // Predicated region
      $region53: #{tpu_custom_call.1} parent=5 // pred_check
        _
      $region54: #{tpu_custom_call.1} parent=5 // pred_check_branch
        %327 = sbr.rel (%p324) target = $region56
      $region55: #{tpu_custom_call.1} parent=5 // pred_region
        %s328 = ssub.s32 %s20, 1
        // Predicated region
        $region57: #{tpu_custom_call.1} parent=55 // pred_check
          %p329 = pneg %p109
        $region58: #{tpu_custom_call.1} parent=55 // pred_check_branch
          %331 = sbr.rel (%p329) target = $region60
        $region59: #{tpu_custom_call.1} parent=55 // pred_region
          %332 = dma.done [#allocation3], 16384
        $region60: #{tpu_custom_call.1} parent=55 // pred_fallthru
          _
        // Predicated region
        $region61: #{tpu_custom_call.1} parent=55 // pred_check
          %p333 = pneg %p151
        $region62: #{tpu_custom_call.1} parent=55 // pred_check_branch
          %335 = sbr.rel (%p333) target = $region64
        $region63: #{tpu_custom_call.1} parent=55 // pred_region
          %336 = dma.done [#allocation6], 16384
        $region64: #{tpu_custom_call.1} parent=55 // pred_fallthru
          _
        // Predicated region
        $region65: #{tpu_custom_call.1} parent=55 // pred_check
          %p337 = pneg %p193
        $region66: #{tpu_custom_call.1} parent=55 // pred_check_branch
          %339 = sbr.rel (%p337) target = $region68
        $region67: #{tpu_custom_call.1} parent=55 // pred_region
          %340 = dma.done [#allocation6], 4096
        $region68: #{tpu_custom_call.1} parent=55 // pred_fallthru
          _
        %s341 = smul.u32 16, %s25
        %p342 = scmp.lt.s32.totalorder %s341, 31
        %s343 = scalar_select %p342, %s341, 31
        %s344 = smul.addr %s343, 4
        %s345 = scalar_lea.vmem %s0, %s344
        %p346 = pneg %p46
        %p347 = pneg %p43
        %p348 = pneg %p67
        %p349 = pneg %p64
        %p350 = pneg %p88
        %p351 = pneg %p85
        %p352 = pneg %p109
        %p353 = pneg %p106
        %p354 = pneg %p130
        %p355 = pneg %p127
        %p356 = pneg %p151
        %p357 = pneg %p148
        %p358 = pneg %p172
        %p359 = pneg %p169
        %p360 = pneg %p193
        %p361 = pneg %p190
        %p362 = pneg %p214
        %p363 = pneg %p211
        %p364 = pneg %p240
        %p365 = pneg %p237
        %s366 = sand.u32 %s227, 1
        %s367 = scalar_lea.sflag [#allocation4], %s366
        %s368 = sand.u32 %s227, 1
        %s369 = smul.addr %s368, 64
        %s370 = scalar_lea.vmem [#allocation8], %s369
        %s371 = smul.u32 16, %s25
        %p372 = scmp.lt.s32.totalorder %s371, 31
        %s373 = scalar_select %p372, %s371, 31
        %s374 = smul.addr %s373, 4
        %s375 = scalar_lea.vmem %s0, %s374
        %s376 = smul.u32 16, %s25
        %s377 = smul.u32 16, %s25
        %v379 = vld [vmem:[%s375] sm:$0xf]
        %v380 = vld [vmem:[%s375 + $0x4] sm:$0xf]
        %v381 = vld [vmem:[%s375 + $0x8] sm:$0xf]
        %v382 = vld [vmem:[%s375 + $0xc] sm:$0xf]
        %v383 = vld [vmem:[%s375 + $0x10] sm:$0xf]
        %v384 = vld [vmem:[%s375 + $0x14] sm:$0xf]
        %v385 = vld [vmem:[%s375 + $0x18] sm:$0xf]
        %v386 = vld [vmem:[%s375 + $0x1c] sm:$0xf]
        %v387 = vld [vmem:[%s375 + $0x20] sm:$0xf]
        %v388 = vld [vmem:[%s375 + $0x24] sm:$0xf]
        %v389 = vld [vmem:[%s375 + $0x28] sm:$0xf]
        %v390 = vld [vmem:[%s375 + $0x2c] sm:$0xf]
        %v391 = vld [vmem:[%s375 + $0x30] sm:$0xf]
        %v392 = vld [vmem:[%s375 + $0x34] sm:$0xf]
        %v393 = vld [vmem:[%s375 + $0x38] sm:$0xf]
        %v394 = vld [vmem:[%s375 + $0x3c] sm:$0xf]
        %v395 = vld [vmem:[%s1] sm:$0xff]
        %v396 = vld [vmem:[%s1 + $0x8] sm:$0xff]
        %v397 = vld [vmem:[%s1 + $0x10] sm:$0xff]
        %v398 = vld [vmem:[%s1 + $0x18] sm:$0xff]
        %v399 = vld [vmem:[%s1 + $0x20] sm:$0xff]
        %v400 = vld [vmem:[%s1 + $0x28] sm:$0xff]
        %v401 = vld [vmem:[%s1 + $0x30] sm:$0xff]
        %v402 = vld [vmem:[%s1 + $0x38] sm:$0xff]
        %v403 = vld [vmem:[%s2] sm:$0xf]
        %v405 = vlaneseq
        %v406 = vshrl.u32 %v405, 7
        %v407 = vsub.s32 0, %v406
        %v408 = vrot.slane %v403, %v407
        %v409 = vlaneseq
        %v410 = vshrl.u32 %v409, 7
        %v411 = vsub.s32 1, %v410
        %v412 = vrot.slane %v403, %v411
        %v413 = vlaneseq
        %v414 = vshrl.u32 %v413, 7
        %v415 = vsub.s32 2, %v414
        %v416 = vrot.slane %v403, %v415
        %v417 = vlaneseq
        %v418 = vshrl.u32 %v417, 7
        %v419 = vsub.s32 3, %v418
        %v420 = vrot.slane %v403, %v419
        %v441 = vunpack.c.l.b16 %v379
        %v442 = vunpack.c.l.b16 %v380
        %v443 = vunpack.c.l.b16 %v381
        %v444 = vunpack.c.l.b16 %v382
        %v445 = vunpack.c.l.b16 %v383
        %v446 = vunpack.c.l.b16 %v384
        %v447 = vunpack.c.l.b16 %v385
        %v448 = vunpack.c.l.b16 %v386
        %v449 = vunpack.c.l.b16 %v387
        %v450 = vunpack.c.l.b16 %v388
        %v451 = vunpack.c.l.b16 %v389
        %v452 = vunpack.c.l.b16 %v390
        %v453 = vunpack.c.l.b16 %v391
        %v454 = vunpack.c.l.b16 %v392
        %v455 = vunpack.c.l.b16 %v393
        %v456 = vunpack.c.l.b16 %v394
        %v457 = vpack.c.b16 %v442, %v441
        %v458 = vpack.c.b16 %v444, %v443
        %v459 = vpack.c.b16 %v446, %v445
        %v460 = vpack.c.b16 %v448, %v447
        %v461 = vpack.c.b16 %v450, %v449
        %v462 = vpack.c.b16 %v452, %v451
        %v463 = vpack.c.b16 %v454, %v453
        %v464 = vpack.c.b16 %v456, %v455
        %v473 = vunpack.c.l.b16 %v395
        %v474 = vunpack.c.h.b16 %v395
        %v475 = vunpack.c.l.b16 %v396
        %v476 = vunpack.c.h.b16 %v396
        %v477 = vunpack.c.l.b16 %v397
        %v478 = vunpack.c.h.b16 %v397
        %v479 = vunpack.c.l.b16 %v398
        %v480 = vunpack.c.h.b16 %v398
        %v481 = vunpack.c.l.b16 %v399
        %v482 = vunpack.c.h.b16 %v399
        %v483 = vunpack.c.l.b16 %v400
        %v484 = vunpack.c.h.b16 %v400
        %v485 = vunpack.c.l.b16 %v401
        %v486 = vunpack.c.h.b16 %v401
        %v487 = vunpack.c.l.b16 %v402
        %v488 = vunpack.c.h.b16 %v402
        %v489 = vpack.c.b16 %v477, %v473
        %v490 = vpack.c.b16 %v478, %v474
        %v491 = vpack.c.b16 %v479, %v475
        %v492 = vpack.c.b16 %v480, %v476
        %v493 = vpack.c.b16 %v485, %v481
        %v494 = vpack.c.b16 %v486, %v482
        %v495 = vpack.c.b16 %v487, %v483
        %v496 = vpack.c.b16 %v488, %v484
        %vm505 = vcmask 261120
        %v507 = vsel %vm505, %v457, 0
        %v510 = vsel %vm505, %v458, 0
        %v513 = vsel %vm505, %v459, 0
        %v516 = vsel %vm505, %v460, 0
        %v519 = vsel %vm505, %v461, 0
        %v522 = vsel %vm505, %v462, 0
        %v525 = vsel %vm505, %v463, 0
        %v528 = vsel %vm505, %v464, 0
        %530 = vmatprep.subr.bf16.mxu0 %v490
        %531 = vmatpush1.bf16.msra.mxu0 %v489
        %532 = vmatprep.subr.bf16.mxu0 %v494
        %533 = vmatpush1.bf16.msra.mxu0 %v493
        %534 = vmatprep.subr.bf16.mxu0 0
        %535 = vmatpush1.bf16.msra.mxu0 0
        %536 = vmatprep.subr.bf16.mxu0 0
        %537 = vmatpush1.bf16.msra.mxu0 0
        %538 = vmatprep.subr.bf16.mxu0 0
        %539 = vmatpush1.bf16.msra.mxu0 0
        %540 = vmatprep.subr.bf16.mxu0 0
        %541 = vmatpush1.bf16.msra.mxu0 0
        %542 = vmatprep.subr.bf16.mxu0 0
        %543 = vmatpush1.bf16.msra.mxu0 0
        %544 = vmatprep.subr.bf16.mxu0 0
        %545 = vmatpush1.bf16.msra.mxu0 0
        %546 = vmatprep.subr.bf16.mxu0 0
        %547 = vmatpush1.bf16.msra.mxu0 0
        %548 = vmatprep.subr.bf16.mxu0 0
        %549 = vmatpush1.bf16.msra.mxu0 0
        %550 = vmatprep.subr.bf16.mxu0 0
        %551 = vmatpush1.bf16.msra.mxu0 0
        %552 = vmatprep.subr.bf16.mxu0 0
        %553 = vmatpush1.bf16.msra.mxu0 0
        %554 = vmatprep.subr.bf16.mxu0 0
        %555 = vmatpush1.bf16.msra.mxu0 0
        %556 = vmatprep.subr.bf16.mxu0 0
        %557 = vmatpush1.bf16.msra.mxu0 0
        %558 = vmatprep.subr.bf16.mxu0 0
        %559 = vmatpush1.bf16.msra.mxu0 0
        %560 = vmatprep.subr.bf16.mxu0 0
        %561 = vmatpush1.bf16.msra.mxu0 0
        %562 = vmatprep.mubr.bf16.mxu0 0
        %563 = vmatmul.mubr.bf16.gmra.mrb[0].mxu0 %v507
        %v564 = vpop.f32.mrb[0].mxu0
        %v565 = vadd.f32 %v408, %v564
        %v566 = vpop.f32.mrb[0].mxu0
        %v567 = vadd.f32 %v412, %v566
        %v568 = vpop.f32.mrb[0].mxu0
        %v569 = vadd.f32 %v408, %v568
        %v570 = vpop.f32.mrb[0].mxu0
        %v571 = vadd.f32 %v412, %v570
        %572 = vmatprep.mubr.bf16.mxu0 0
        %573 = vmatmul.mubr.bf16.gmra.mrb[0].mxu0 %v510
        %v574 = vpop.f32.mrb[0].mxu0
        %v575 = vadd.f32 %v408, %v574
        %v576 = vpop.f32.mrb[0].mxu0
        %v577 = vadd.f32 %v412, %v576
        %v578 = vpop.f32.mrb[0].mxu0
        %v579 = vadd.f32 %v408, %v578
        %v580 = vpop.f32.mrb[0].mxu0
        %v581 = vadd.f32 %v412, %v580
        %582 = vmatprep.mubr.bf16.mxu0 0
        %583 = vmatmul.mubr.bf16.gmra.mrb[0].mxu0 %v513
        %v584 = vpop.f32.mrb[0].mxu0
        %v585 = vadd.f32 %v408, %v584
        %v586 = vpop.f32.mrb[0].mxu0
        %v587 = vadd.f32 %v412, %v586
        %v588 = vpop.f32.mrb[0].mxu0
        %v589 = vadd.f32 %v408, %v588
        %v590 = vpop.f32.mrb[0].mxu0
        %v591 = vadd.f32 %v412, %v590
        %592 = vmatprep.mubr.bf16.mxu0 0
        %593 = vmatmul.mubr.bf16.gmra.mrb[0].mxu0 %v516
        %v594 = vpop.f32.mrb[0].mxu0
        %v595 = vadd.f32 %v408, %v594
        %v596 = vpop.f32.mrb[0].mxu0
        %v597 = vadd.f32 %v412, %v596
        %v598 = vpop.f32.mrb[0].mxu0
        %v599 = vadd.f32 %v408, %v598
        %v600 = vpop.f32.mrb[0].mxu0
        %v601 = vadd.f32 %v412, %v600
        %602 = vmatprep.mubr.bf16.mxu0 0
        %603 = vmatmul.mubr.bf16.gmra.mrb[0].mxu0 %v519
        %v604 = vpop.f32.mrb[0].mxu0
        %v605 = vadd.f32 %v408, %v604
        %v606 = vpop.f32.mrb[0].mxu0
        %v607 = vadd.f32 %v412, %v606
        %v608 = vpop.f32.mrb[0].mxu0
        %v609 = vadd.f32 %v408, %v608
        %v610 = vpop.f32.mrb[0].mxu0
        %v611 = vadd.f32 %v412, %v610
        %612 = vmatprep.mubr.bf16.mxu0 0
        %613 = vmatmul.mubr.bf16.gmra.mrb[0].mxu0 %v522
        %v614 = vpop.f32.mrb[0].mxu0
        %v615 = vadd.f32 %v408, %v614
        %v616 = vpop.f32.mrb[0].mxu0
        %v617 = vadd.f32 %v412, %v616
        %v618 = vpop.f32.mrb[0].mxu0
        %v619 = vadd.f32 %v408, %v618
        %v620 = vpop.f32.mrb[0].mxu0
        %v621 = vadd.f32 %v412, %v620
        %622 = vmatprep.mubr.bf16.mxu0 0
        %623 = vmatmul.mubr.bf16.gmra.mrb[0].mxu0 %v525
        %v624 = vpop.f32.mrb[0].mxu0
        %v625 = vadd.f32 %v408, %v624
        %v626 = vpop.f32.mrb[0].mxu0
        %v627 = vadd.f32 %v412, %v626
        %v628 = vpop.f32.mrb[0].mxu0
        %v629 = vadd.f32 %v408, %v628
        %v630 = vpop.f32.mrb[0].mxu0
        %v631 = vadd.f32 %v412, %v630
        %632 = vmatprep.mubr.bf16.mxu0 0
        %633 = vmatmul.mubr.bf16.gmra.mrb[0].mxu0 %v528
        %v634 = vpop.f32.mrb[0].mxu0
        %v635 = vadd.f32 %v408, %v634
        %v636 = vpop.f32.mrb[0].mxu0
        %v637 = vadd.f32 %v412, %v636
        %v638 = vpop.f32.mrb[0].mxu0
        %v639 = vadd.f32 %v408, %v638
        %v640 = vpop.f32.mrb[0].mxu0
        %v641 = vadd.f32 %v412, %v640
        %642 = vdwg.mxu0
        %643 = vmatprep.subr.bf16.mxu0 %v492
        %644 = vmatpush1.bf16.msra.mxu0 %v491
        %645 = vmatprep.subr.bf16.mxu0 %v496
        %646 = vmatpush1.bf16.msra.mxu0 %v495
        %647 = vmatprep.subr.bf16.mxu0 0
        %648 = vmatpush1.bf16.msra.mxu0 0
        %649 = vmatprep.subr.bf16.mxu0 0
        %650 = vmatpush1.bf16.msra.mxu0 0
        %651 = vmatprep.subr.bf16.mxu0 0
        %652 = vmatpush1.bf16.msra.mxu0 0
        %653 = vmatprep.subr.bf16.mxu0 0
        %654 = vmatpush1.bf16.msra.mxu0 0
        %655 = vmatprep.subr.bf16.mxu0 0
        %656 = vmatpush1.bf16.msra.mxu0 0
        %657 = vmatprep.subr.bf16.mxu0 0
        %658 = vmatpush1.bf16.msra.mxu0 0
        %659 = vmatprep.subr.bf16.mxu0 0
        %660 = vmatpush1.bf16.msra.mxu0 0
        %661 = vmatprep.subr.bf16.mxu0 0
        %662 = vmatpush1.bf16.msra.mxu0 0
        %663 = vmatprep.subr.bf16.mxu0 0
        %664 = vmatpush1.bf16.msra.mxu0 0
        %665 = vmatprep.subr.bf16.mxu0 0
        %666 = vmatpush1.bf16.msra.mxu0 0
        %667 = vmatprep.subr.bf16.mxu0 0
        %668 = vmatpush1.bf16.msra.mxu0 0
        %669 = vmatprep.subr.bf16.mxu0 0
        %670 = vmatpush1.bf16.msra.mxu0 0
        %671 = vmatprep.subr.bf16.mxu0 0
        %672 = vmatpush1.bf16.msra.mxu0 0
        %673 = vmatprep.subr.bf16.mxu0 0
        %674 = vmatpush1.bf16.msra.mxu0 0
        %675 = vmatprep.mubr.bf16.mxu0 0
        %676 = vmatmul.mubr.bf16.gmra.mrb[0].mxu0 %v507
        %v677 = vpop.f32.mrb[0].mxu0
        %v678 = vadd.f32 %v416, %v677
        %v679 = vpop.f32.mrb[0].mxu0
        %v680 = vadd.f32 %v420, %v679
        %v681 = vpop.f32.mrb[0].mxu0
        %v682 = vadd.f32 %v416, %v681
        %v683 = vpop.f32.mrb[0].mxu0
        %v684 = vadd.f32 %v420, %v683
        %685 = vmatprep.mubr.bf16.mxu0 0
        %686 = vmatmul.mubr.bf16.gmra.mrb[0].mxu0 %v510
        %v687 = vpop.f32.mrb[0].mxu0
        %v688 = vadd.f32 %v416, %v687
        %v689 = vpop.f32.mrb[0].mxu0
        %v690 = vadd.f32 %v420, %v689
        %v691 = vpop.f32.mrb[0].mxu0
        %v692 = vadd.f32 %v416, %v691
        %v693 = vpop.f32.mrb[0].mxu0
        %v694 = vadd.f32 %v420, %v693
        %695 = vmatprep.mubr.bf16.mxu0 0
        %696 = vmatmul.mubr.bf16.gmra.mrb[0].mxu0 %v513
        %v697 = vpop.f32.mrb[0].mxu0
        %v698 = vadd.f32 %v416, %v697
        %v699 = vpop.f32.mrb[0].mxu0
        %v700 = vadd.f32 %v420, %v699
        %v701 = vpop.f32.mrb[0].mxu0
        %v702 = vadd.f32 %v416, %v701
        %v703 = vpop.f32.mrb[0].mxu0
        %v704 = vadd.f32 %v420, %v703
        %705 = vmatprep.mubr.bf16.mxu0 0
        %706 = vmatmul.mubr.bf16.gmra.mrb[0].mxu0 %v516
        %v707 = vpop.f32.mrb[0].mxu0
        %v708 = vadd.f32 %v416, %v707
        %v709 = vpop.f32.mrb[0].mxu0
        %v710 = vadd.f32 %v420, %v709
        %v711 = vpop.f32.mrb[0].mxu0
        %v712 = vadd.f32 %v416, %v711
        %v713 = vpop.f32.mrb[0].mxu0
        %v714 = vadd.f32 %v420, %v713
        %715 = vmatprep.mubr.bf16.mxu0 0
        %716 = vmatmul.mubr.bf16.gmra.mrb[0].mxu0 %v519
        %v717 = vpop.f32.mrb[0].mxu0
        %v718 = vadd.f32 %v416, %v717
        %v719 = vpop.f32.mrb[0].mxu0
        %v720 = vadd.f32 %v420, %v719
        %v721 = vpop.f32.mrb[0].mxu0
        %v722 = vadd.f32 %v416, %v721
        %v723 = vpop.f32.mrb[0].mxu0
        %v724 = vadd.f32 %v420, %v723
        %725 = vmatprep.mubr.bf16.mxu0 0
        %726 = vmatmul.mubr.bf16.gmra.mrb[0].mxu0 %v522
        %v727 = vpop.f32.mrb[0].mxu0
        %v728 = vadd.f32 %v416, %v727
        %v729 = vpop.f32.mrb[0].mxu0
        %v730 = vadd.f32 %v420, %v729
        %v731 = vpop.f32.mrb[0].mxu0
        %v732 = vadd.f32 %v416, %v731
        %v733 = vpop.f32.mrb[0].mxu0
        %v734 = vadd.f32 %v420, %v733
        %735 = vmatprep.mubr.bf16.mxu0 0
        %736 = vmatmul.mubr.bf16.gmra.mrb[0].mxu0 %v525
        %v737 = vpop.f32.mrb[0].mxu0
        %v738 = vadd.f32 %v416, %v737
        %v739 = vpop.f32.mrb[0].mxu0
        %v740 = vadd.f32 %v420, %v739
        %v741 = vpop.f32.mrb[0].mxu0
        %v742 = vadd.f32 %v416, %v741
        %v743 = vpop.f32.mrb[0].mxu0
        %v744 = vadd.f32 %v420, %v743
        %745 = vmatprep.mubr.bf16.mxu0 0
        %746 = vmatmul.mubr.bf16.gmra.mrb[0].mxu0 %v528
        %v747 = vpop.f32.mrb[0].mxu0
        %v748 = vadd.f32 %v416, %v747
        %v749 = vpop.f32.mrb[0].mxu0
        %v750 = vadd.f32 %v420, %v749
        %v751 = vpop.f32.mrb[0].mxu0
        %v752 = vadd.f32 %v416, %v751
        %v753 = vpop.f32.mrb[0].mxu0
        %v754 = vadd.f32 %v420, %v753
        %755 = vdwg.mxu0
        %v756 = vmax.f32 %v565, 0.0
        %v757 = vmax.f32 %v567, 0.0
        %v758 = vmax.f32 %v678, 0.0
        %v759 = vmax.f32 %v680, 0.0
        %v760 = vmax.f32 %v569, 0.0
        %v761 = vmax.f32 %v571, 0.0
        %v762 = vmax.f32 %v682, 0.0
        %v763 = vmax.f32 %v684, 0.0
        %v764 = vmax.f32 %v575, 0.0
        %v765 = vmax.f32 %v577, 0.0
        %v766 = vmax.f32 %v688, 0.0
        %v767 = vmax.f32 %v690, 0.0
        %v768 = vmax.f32 %v579, 0.0
        %v769 = vmax.f32 %v581, 0.0
        %v770 = vmax.f32 %v692, 0.0
        %v771 = vmax.f32 %v694, 0.0
        %v772 = vmax.f32 %v585, 0.0
        %v773 = vmax.f32 %v587, 0.0
        %v774 = vmax.f32 %v698, 0.0
        %v775 = vmax.f32 %v700, 0.0
        %v776 = vmax.f32 %v589, 0.0
        %v777 = vmax.f32 %v591, 0.0
        %v778 = vmax.f32 %v702, 0.0
        %v779 = vmax.f32 %v704, 0.0
        %v780 = vmax.f32 %v595, 0.0
        %v781 = vmax.f32 %v597, 0.0
        %v782 = vmax.f32 %v708, 0.0
        %v783 = vmax.f32 %v710, 0.0
        %v784 = vmax.f32 %v599, 0.0
        %v785 = vmax.f32 %v601, 0.0
        %v786 = vmax.f32 %v712, 0.0
        %v787 = vmax.f32 %v714, 0.0
        %v788 = vmax.f32 %v605, 0.0
        %v789 = vmax.f32 %v607, 0.0
        %v790 = vmax.f32 %v718, 0.0
        %v791 = vmax.f32 %v720, 0.0
        %v792 = vmax.f32 %v609, 0.0
        %v793 = vmax.f32 %v611, 0.0
        %v794 = vmax.f32 %v722, 0.0
        %v795 = vmax.f32 %v724, 0.0
        %v796 = vmax.f32 %v615, 0.0
        %v797 = vmax.f32 %v617, 0.0
        %v798 = vmax.f32 %v728, 0.0
        %v799 = vmax.f32 %v730, 0.0
        %v800 = vmax.f32 %v619, 0.0
        %v801 = vmax.f32 %v621, 0.0
        %v802 = vmax.f32 %v732, 0.0
        %v803 = vmax.f32 %v734, 0.0
        %v804 = vmax.f32 %v625, 0.0
        %v805 = vmax.f32 %v627, 0.0
        %v806 = vmax.f32 %v738, 0.0
        %v807 = vmax.f32 %v740, 0.0
        %v808 = vmax.f32 %v629, 0.0
        %v809 = vmax.f32 %v631, 0.0
        %v810 = vmax.f32 %v742, 0.0
        %v811 = vmax.f32 %v744, 0.0
        %v812 = vmax.f32 %v635, 0.0
        %v813 = vmax.f32 %v637, 0.0
        %v814 = vmax.f32 %v748, 0.0
        %v815 = vmax.f32 %v750, 0.0
        %v816 = vmax.f32 %v639, 0.0
        %v817 = vmax.f32 %v641, 0.0
        %v818 = vmax.f32 %v752, 0.0
        %v819 = vmax.f32 %v754, 0.0
        %v820 = vpack.c.bf16 %v760, %v756
        %v821 = vpack.c.bf16 %v761, %v757
        %v822 = vpack.c.bf16 %v762, %v758
        %v823 = vpack.c.bf16 %v763, %v759
        %v824 = vpack.c.bf16 %v768, %v764
        %v825 = vpack.c.bf16 %v769, %v765
        %v826 = vpack.c.bf16 %v770, %v766
        %v827 = vpack.c.bf16 %v771, %v767
        %v828 = vpack.c.bf16 %v776, %v772
        %v829 = vpack.c.bf16 %v777, %v773
        %v830 = vpack.c.bf16 %v778, %v774
        %v831 = vpack.c.bf16 %v779, %v775
        %v832 = vpack.c.bf16 %v784, %v780
        %v833 = vpack.c.bf16 %v785, %v781
        %v834 = vpack.c.bf16 %v786, %v782
        %v835 = vpack.c.bf16 %v787, %v783
        %v836 = vpack.c.bf16 %v792, %v788
        %v837 = vpack.c.bf16 %v793, %v789
        %v838 = vpack.c.bf16 %v794, %v790
        %v839 = vpack.c.bf16 %v795, %v791
        %v840 = vpack.c.bf16 %v800, %v796
        %v841 = vpack.c.bf16 %v801, %v797
        %v842 = vpack.c.bf16 %v802, %v798
        %v843 = vpack.c.bf16 %v803, %v799
        %v844 = vpack.c.bf16 %v808, %v804
        %v845 = vpack.c.bf16 %v809, %v805
        %v846 = vpack.c.bf16 %v810, %v806
        %v847 = vpack.c.bf16 %v811, %v807
        %v848 = vpack.c.bf16 %v816, %v812
        %v849 = vpack.c.bf16 %v817, %v813
        %v850 = vpack.c.bf16 %v818, %v814
        %v851 = vpack.c.bf16 %v819, %v815
        %v852 = vld [vmem:[#allocation2] sm:$0xff]
        %v853 = vld [vmem:[#allocation2 + $0x8] sm:$0xff]
        %v854 = vld [vmem:[#allocation2 + $0x10] sm:$0xff]
        %v855 = vld [vmem:[#allocation2 + $0x18] sm:$0xff]
        %v856 = vld [vmem:[#allocation2 + $0x20] sm:$0xff]
        %v857 = vld [vmem:[#allocation2 + $0x28] sm:$0xff]
        %v858 = vld [vmem:[#allocation2 + $0x30] sm:$0xff]
        %v859 = vld [vmem:[#allocation2 + $0x38] sm:$0xff]
        %v860 = vld [vmem:[#allocation2 + $0x40] sm:$0xff]
        %v861 = vld [vmem:[#allocation2 + $0x48] sm:$0xff]
        %v862 = vld [vmem:[#allocation2 + $0x50] sm:$0xff]
        %v863 = vld [vmem:[#allocation2 + $0x58] sm:$0xff]
        %v864 = vld [vmem:[#allocation2 + $0x60] sm:$0xff]
        %v865 = vld [vmem:[#allocation2 + $0x68] sm:$0xff]
        %v866 = vld [vmem:[#allocation2 + $0x70] sm:$0xff]
        %v867 = vld [vmem:[#allocation2 + $0x78] sm:$0xff]
        %v868 = vld [vmem:[#allocation2 + $0x80] sm:$0xff]
        %v869 = vld [vmem:[#allocation2 + $0x88] sm:$0xff]
        %v870 = vld [vmem:[#allocation2 + $0x90] sm:$0xff]
        %v871 = vld [vmem:[#allocation2 + $0x98] sm:$0xff]
        %v872 = vld [vmem:[#allocation2 + $0xa0] sm:$0xff]
        %v873 = vld [vmem:[#allocation2 + $0xa8] sm:$0xff]
        %v874 = vld [vmem:[#allocation2 + $0xb0] sm:$0xff]
        %v875 = vld [vmem:[#allocation2 + $0xb8] sm:$0xff]
        %v876 = vld [vmem:[#allocation2 + $0xc0] sm:$0xff]
        %v877 = vld [vmem:[#allocation2 + $0xc8] sm:$0xff]
        %v878 = vld [vmem:[#allocation2 + $0xd0] sm:$0xff]
        %v879 = vld [vmem:[#allocation2 + $0xd8] sm:$0xff]
        %v880 = vld [vmem:[#allocation2 + $0xe0] sm:$0xff]
        %v881 = vld [vmem:[#allocation2 + $0xe8] sm:$0xff]
        %v882 = vld [vmem:[#allocation2 + $0xf0] sm:$0xff]
        %v883 = vld [vmem:[#allocation2 + $0xf8] sm:$0xff]
        %v884 = vld [vmem:[#allocation2 + $0x100] sm:$0xff]
        %v885 = vld [vmem:[#allocation2 + $0x108] sm:$0xff]
        %v886 = vld [vmem:[#allocation2 + $0x110] sm:$0xff]
        %v887 = vld [vmem:[#allocation2 + $0x118] sm:$0xff]
        %v888 = vld [vmem:[#allocation2 + $0x120] sm:$0xff]
        %v889 = vld [vmem:[#allocation2 + $0x128] sm:$0xff]
        %v890 = vld [vmem:[#allocation2 + $0x130] sm:$0xff]
        %v891 = vld [vmem:[#allocation2 + $0x138] sm:$0xff]
        %v892 = vld [vmem:[#allocation2 + $0x140] sm:$0xff]
        %v893 = vld [vmem:[#allocation2 + $0x148] sm:$0xff]
        %v894 = vld [vmem:[#allocation2 + $0x150] sm:$0xff]
        %v895 = vld [vmem:[#allocation2 + $0x158] sm:$0xff]
        %v896 = vld [vmem:[#allocation2 + $0x160] sm:$0xff]
        %v897 = vld [vmem:[#allocation2 + $0x168] sm:$0xff]
        %v898 = vld [vmem:[#allocation2 + $0x170] sm:$0xff]
        %v899 = vld [vmem:[#allocation2 + $0x178] sm:$0xff]
        %v900 = vld [vmem:[#allocation2 + $0x180] sm:$0xff]
        %v901 = vld [vmem:[#allocation2 + $0x188] sm:$0xff]
        %v902 = vld [vmem:[#allocation2 + $0x190] sm:$0xff]
        %v903 = vld [vmem:[#allocation2 + $0x198] sm:$0xff]
        %v904 = vld [vmem:[#allocation2 + $0x1a0] sm:$0xff]
        %v905 = vld [vmem:[#allocation2 + $0x1a8] sm:$0xff]
        %v906 = vld [vmem:[#allocation2 + $0x1b0] sm:$0xff]
        %v907 = vld [vmem:[#allocation2 + $0x1b8] sm:$0xff]
        %v908 = vld [vmem:[#allocation2 + $0x1c0] sm:$0xff]
        %v909 = vld [vmem:[#allocation2 + $0x1c8] sm:$0xff]
        %v910 = vld [vmem:[#allocation2 + $0x1d0] sm:$0xff]
        %v911 = vld [vmem:[#allocation2 + $0x1d8] sm:$0xff]
        %v912 = vld [vmem:[#allocation2 + $0x1e0] sm:$0xff]
        %v913 = vld [vmem:[#allocation2 + $0x1e8] sm:$0xff]
        %v914 = vld [vmem:[#allocation2 + $0x1f0] sm:$0xff]
        %v915 = vld [vmem:[#allocation2 + $0x1f8] sm:$0xff]
        %v916 = vld [vmem:[#allocation2 + $0x200] sm:$0xff]
        %v917 = vld [vmem:[#allocation2 + $0x208] sm:$0xff]
        %v918 = vld [vmem:[#allocation2 + $0x210] sm:$0xff]
        %v919 = vld [vmem:[#allocation2 + $0x218] sm:$0xff]
        %v920 = vld [vmem:[#allocation2 + $0x220] sm:$0xff]
        %v921 = vld [vmem:[#allocation2 + $0x228] sm:$0xff]
        %v922 = vld [vmem:[#allocation2 + $0x230] sm:$0xff]
        %v923 = vld [vmem:[#allocation2 + $0x238] sm:$0xff]
        %v924 = vld [vmem:[#allocation2 + $0x240] sm:$0xff]
        %v925 = vld [vmem:[#allocation2 + $0x248] sm:$0xff]
        %v926 = vld [vmem:[#allocation2 + $0x250] sm:$0xff]
        %v927 = vld [vmem:[#allocation2 + $0x258] sm:$0xff]
        %v928 = vld [vmem:[#allocation2 + $0x260] sm:$0xff]
        %v929 = vld [vmem:[#allocation2 + $0x268] sm:$0xff]
        %v930 = vld [vmem:[#allocation2 + $0x270] sm:$0xff]
        %v931 = vld [vmem:[#allocation2 + $0x278] sm:$0xff]
        %v932 = vld [vmem:[#allocation2 + $0x280] sm:$0xff]
        %v933 = vld [vmem:[#allocation2 + $0x288] sm:$0xff]
        %v934 = vld [vmem:[#allocation2 + $0x290] sm:$0xff]
        %v935 = vld [vmem:[#allocation2 + $0x298] sm:$0xff]
        %v936 = vld [vmem:[#allocation2 + $0x2a0] sm:$0xff]
        %v937 = vld [vmem:[#allocation2 + $0x2a8] sm:$0xff]
        %v938 = vld [vmem:[#allocation2 + $0x2b0] sm:$0xff]
        %v939 = vld [vmem:[#allocation2 + $0x2b8] sm:$0xff]
        %v940 = vld [vmem:[#allocation2 + $0x2c0] sm:$0xff]
        %v941 = vld [vmem:[#allocation2 + $0x2c8] sm:$0xff]
        %v942 = vld [vmem:[#allocation2 + $0x2d0] sm:$0xff]
        %v943 = vld [vmem:[#allocation2 + $0x2d8] sm:$0xff]
        %v944 = vld [vmem:[#allocation2 + $0x2e0] sm:$0xff]
        %v945 = vld [vmem:[#allocation2 + $0x2e8] sm:$0xff]
        %v946 = vld [vmem:[#allocation2 + $0x2f0] sm:$0xff]
        %v947 = vld [vmem:[#allocation2 + $0x2f8] sm:$0xff]
        %v948 = vld [vmem:[#allocation2 + $0x300] sm:$0xff]
        %v949 = vld [vmem:[#allocation2 + $0x308] sm:$0xff]
        %v950 = vld [vmem:[#allocation2 + $0x310] sm:$0xff]
        %v951 = vld [vmem:[#allocation2 + $0x318] sm:$0xff]
        %v952 = vld [vmem:[#allocation2 + $0x320] sm:$0xff]
        %v953 = vld [vmem:[#allocation2 + $0x328] sm:$0xff]
        %v954 = vld [vmem:[#allocation2 + $0x330] sm:$0xff]
        %v955 = vld [vmem:[#allocation2 + $0x338] sm:$0xff]
        %v956 = vld [vmem:[#allocation2 + $0x340] sm:$0xff]
        %v957 = vld [vmem:[#allocation2 + $0x348] sm:$0xff]
        %v958 = vld [vmem:[#allocation2 + $0x350] sm:$0xff]
        %v959 = vld [vmem:[#allocation2 + $0x358] sm:$0xff]
        %v960 = vld [vmem:[#allocation2 + $0x360] sm:$0xff]
        %v961 = vld [vmem:[#allocation2 + $0x368] sm:$0xff]
        %v962 = vld [vmem:[#allocation2 + $0x370] sm:$0xff]
        %v963 = vld [vmem:[#allocation2 + $0x378] sm:$0xff]
        %v964 = vld [vmem:[#allocation2 + $0x380] sm:$0xff]
        %v965 = vld [vmem:[#allocation2 + $0x388] sm:$0xff]
        %v966 = vld [vmem:[#allocation2 + $0x390] sm:$0xff]
        %v967 = vld [vmem:[#allocation2 + $0x398] sm:$0xff]
        %v968 = vld [vmem:[#allocation2 + $0x3a0] sm:$0xff]
        %v969 = vld [vmem:[#allocation2 + $0x3a8] sm:$0xff]
        %v970 = vld [vmem:[#allocation2 + $0x3b0] sm:$0xff]
        %v971 = vld [vmem:[#allocation2 + $0x3b8] sm:$0xff]
        %v972 = vld [vmem:[#allocation2 + $0x3c0] sm:$0xff]
        %v973 = vld [vmem:[#allocation2 + $0x3c8] sm:$0xff]
        %v974 = vld [vmem:[#allocation2 + $0x3d0] sm:$0xff]
        %v975 = vld [vmem:[#allocation2 + $0x3d8] sm:$0xff]
        %v976 = vld [vmem:[#allocation2 + $0x3e0] sm:$0xff]
        %v977 = vld [vmem:[#allocation2 + $0x3e8] sm:$0xff]
        %v978 = vld [vmem:[#allocation2 + $0x3f0] sm:$0xff]
        %v979 = vld [vmem:[#allocation2 + $0x3f8] sm:$0xff]
        %v980 = vld [vmem:[%s4] sm:$0xf]
        %v982 = vlaneseq
        %v983 = vshrl.u32 %v982, 7
        %v984 = vsub.s32 0, %v983
        %v985 = vrot.slane %v980, %v984
        %v986 = vlaneseq
        %v987 = vshrl.u32 %v986, 7
        %v988 = vsub.s32 1, %v987
        %v989 = vrot.slane %v980, %v988
        %v990 = vlaneseq
        %v991 = vshrl.u32 %v990, 7
        %v992 = vsub.s32 2, %v991
        %v993 = vrot.slane %v980, %v992
        %v994 = vlaneseq
        %v995 = vshrl.u32 %v994, 7
        %v996 = vsub.s32 3, %v995
        %v997 = vrot.slane %v980, %v996
        %v1130 = vunpack.c.l.b16 %v852
        %v1131 = vunpack.c.h.b16 %v852
        %v1132 = vunpack.c.l.b16 %v853
        %v1133 = vunpack.c.h.b16 %v853
        %v1134 = vunpack.c.l.b16 %v854
        %v1135 = vunpack.c.h.b16 %v854
        %v1136 = vunpack.c.l.b16 %v855
        %v1137 = vunpack.c.h.b16 %v855
        %v1138 = vunpack.c.l.b16 %v856
        %v1139 = vunpack.c.h.b16 %v856
        %v1140 = vunpack.c.l.b16 %v857
        %v1141 = vunpack.c.h.b16 %v857
        %v1142 = vunpack.c.l.b16 %v858
        %v1143 = vunpack.c.h.b16 %v858
        %v1144 = vunpack.c.l.b16 %v859
        %v1145 = vunpack.c.h.b16 %v859
        %v1146 = vunpack.c.l.b16 %v860
        %v1147 = vunpack.c.h.b16 %v860
        %v1148 = vunpack.c.l.b16 %v861
        %v1149 = vunpack.c.h.b16 %v861
        %v1150 = vunpack.c.l.b16 %v862
        %v1151 = vunpack.c.h.b16 %v862
        %v1152 = vunpack.c.l.b16 %v863
        %v1153 = vunpack.c.h.b16 %v863
        %v1154 = vunpack.c.l.b16 %v864
        %v1155 = vunpack.c.h.b16 %v864
        %v1156 = vunpack.c.l.b16 %v865
        %v1157 = vunpack.c.h.b16 %v865
        %v1158 = vunpack.c.l.b16 %v866
        %v1159 = vunpack.c.h.b16 %v866
        %v1160 = vunpack.c.l.b16 %v867
        %v1161 = vunpack.c.h.b16 %v867
        %v1162 = vunpack.c.l.b16 %v868
        %v1163 = vunpack.c.h.b16 %v868
        %v1164 = vunpack.c.l.b16 %v869
        %v1165 = vunpack.c.h.b16 %v869
        %v1166 = vunpack.c.l.b16 %v870
        %v1167 = vunpack.c.h.b16 %v870
        %v1168 = vunpack.c.l.b16 %v871
        %v1169 = vunpack.c.h.b16 %v871
        %v1170 = vunpack.c.l.b16 %v872
        %v1171 = vunpack.c.h.b16 %v872
        %v1172 = vunpack.c.l.b16 %v873
        %v1173 = vunpack.c.h.b16 %v873
        %v1174 = vunpack.c.l.b16 %v874
        %v1175 = vunpack.c.h.b16 %v874
        %v1176 = vunpack.c.l.b16 %v875
        %v1177 = vunpack.c.h.b16 %v875
        %v1178 = vunpack.c.l.b16 %v876
        %v1179 = vunpack.c.h.b16 %v876
        %v1180 = vunpack.c.l.b16 %v877
        %v1181 = vunpack.c.h.b16 %v877
        %v1182 = vunpack.c.l.b16 %v878
        %v1183 = vunpack.c.h.b16 %v878
        %v1184 = vunpack.c.l.b16 %v879
        %v1185 = vunpack.c.h.b16 %v879
        %v1186 = vunpack.c.l.b16 %v880
        %v1187 = vunpack.c.h.b16 %v880
        %v1188 = vunpack.c.l.b16 %v881
        %v1189 = vunpack.c.h.b16 %v881
        %v1190 = vunpack.c.l.b16 %v882
        %v1191 = vunpack.c.h.b16 %v882
        %v1192 = vunpack.c.l.b16 %v883
        %v1193 = vunpack.c.h.b16 %v883
        %v1194 = vunpack.c.l.b16 %v884
        %v1195 = vunpack.c.h.b16 %v884
        %v1196 = vunpack.c.l.b16 %v885
        %v1197 = vunpack.c.h.b16 %v885
        %v1198 = vunpack.c.l.b16 %v886
        %v1199 = vunpack.c.h.b16 %v886
        %v1200 = vunpack.c.l.b16 %v887
        %v1201 = vunpack.c.h.b16 %v887
        %v1202 = vunpack.c.l.b16 %v888
        %v1203 = vunpack.c.h.b16 %v888
        %v1204 = vunpack.c.l.b16 %v889
        %v1205 = vunpack.c.h.b16 %v889
        %v1206 = vunpack.c.l.b16 %v890
        %v1207 = vunpack.c.h.b16 %v890
        %v1208 = vunpack.c.l.b16 %v891
        %v1209 = vunpack.c.h.b16 %v891
        %v1210 = vunpack.c.l.b16 %v892
        %v1211 = vunpack.c.h.b16 %v892
        %v1212 = vunpack.c.l.b16 %v893
        %v1213 = vunpack.c.h.b16 %v893
        %v1214 = vunpack.c.l.b16 %v894
        %v1215 = vunpack.c.h.b16 %v894
        %v1216 = vunpack.c.l.b16 %v895
        %v1217 = vunpack.c.h.b16 %v895
        %v1218 = vunpack.c.l.b16 %v896
        %v1219 = vunpack.c.h.b16 %v896
        %v1220 = vunpack.c.l.b16 %v897
        %v1221 = vunpack.c.h.b16 %v897
        %v1222 = vunpack.c.l.b16 %v898
        %v1223 = vunpack.c.h.b16 %v898
        %v1224 = vunpack.c.l.b16 %v899
        %v1225 = vunpack.c.h.b16 %v899
        %v1226 = vunpack.c.l.b16 %v900
        %v1227 = vunpack.c.h.b16 %v900
        %v1228 = vunpack.c.l.b16 %v901
        %v1229 = vunpack.c.h.b16 %v901
        %v1230 = vunpack.c.l.b16 %v902
        %v1231 = vunpack.c.h.b16 %v902
        %v1232 = vunpack.c.l.b16 %v903
        %v1233 = vunpack.c.h.b16 %v903
        %v1234 = vunpack.c.l.b16 %v904
        %v1235 = vunpack.c.h.b16 %v904
        %v1236 = vunpack.c.l.b16 %v905
        %v1237 = vunpack.c.h.b16 %v905
        %v1238 = vunpack.c.l.b16 %v906
        %v1239 = vunpack.c.h.b16 %v906
        %v1240 = vunpack.c.l.b16 %v907
        %v1241 = vunpack.c.h.b16 %v907
        %v1242 = vunpack.c.l.b16 %v908
        %v1243 = vunpack.c.h.b16 %v908
        %v1244 = vunpack.c.l.b16 %v909
        %v1245 = vunpack.c.h.b16 %v909
        %v1246 = vunpack.c.l.b16 %v910
        %v1247 = vunpack.c.h.b16 %v910
        %v1248 = vunpack.c.l.b16 %v911
        %v1249 = vunpack.c.h.b16 %v911
        %v1250 = vunpack.c.l.b16 %v912
        %v1251 = vunpack.c.h.b16 %v912
        %v1252 = vunpack.c.l.b16 %v913
        %v1253 = vunpack.c.h.b16 %v913
        %v1254 = vunpack.c.l.b16 %v914
        %v1255 = vunpack.c.h.b16 %v914
        %v1256 = vunpack.c.l.b16 %v915
        %v1257 = vunpack.c.h.b16 %v915
        %v1258 = vunpack.c.l.b16 %v916
        %v1259 = vunpack.c.h.b16 %v916
        %v1260 = vunpack.c.l.b16 %v917
        %v1261 = vunpack.c.h.b16 %v917
        %v1262 = vunpack.c.l.b16 %v918
        %v1263 = vunpack.c.h.b16 %v918
        %v1264 = vunpack.c.l.b16 %v919
        %v1265 = vunpack.c.h.b16 %v919
        %v1266 = vunpack.c.l.b16 %v920
        %v1267 = vunpack.c.h.b16 %v920
        %v1268 = vunpack.c.l.b16 %v921
        %v1269 = vunpack.c.h.b16 %v921
        %v1270 = vunpack.c.l.b16 %v922
        %v1271 = vunpack.c.h.b16 %v922
        %v1272 = vunpack.c.l.b16 %v923
        %v1273 = vunpack.c.h.b16 %v923
        %v1274 = vunpack.c.l.b16 %v924
        %v1275 = vunpack.c.h.b16 %v924
        %v1276 = vunpack.c.l.b16 %v925
        %v1277 = vunpack.c.h.b16 %v925
        %v1278 = vunpack.c.l.b16 %v926
        %v1279 = vunpack.c.h.b16 %v926
        %v1280 = vunpack.c.l.b16 %v927
        %v1281 = vunpack.c.h.b16 %v927
        %v1282 = vunpack.c.l.b16 %v928
        %v1283 = vunpack.c.h.b16 %v928
        %v1284 = vunpack.c.l.b16 %v929
        %v1285 = vunpack.c.h.b16 %v929
        %v1286 = vunpack.c.l.b16 %v930
        %v1287 = vunpack.c.h.b16 %v930
        %v1288 = vunpack.c.l.b16 %v931
        %v1289 = vunpack.c.h.b16 %v931
        %v1290 = vunpack.c.l.b16 %v932
        %v1291 = vunpack.c.h.b16 %v932
        %v1292 = vunpack.c.l.b16 %v933
        %v1293 = vunpack.c.h.b16 %v933
        %v1294 = vunpack.c.l.b16 %v934
        %v1295 = vunpack.c.h.b16 %v934
        %v1296 = vunpack.c.l.b16 %v935
        %v1297 = vunpack.c.h.b16 %v935
        %v1298 = vunpack.c.l.b16 %v936
        %v1299 = vunpack.c.h.b16 %v936
        %v1300 = vunpack.c.l.b16 %v937
        %v1301 = vunpack.c.h.b16 %v937
        %v1302 = vunpack.c.l.b16 %v938
        %v1303 = vunpack.c.h.b16 %v938
        %v1304 = vunpack.c.l.b16 %v939
        %v1305 = vunpack.c.h.b16 %v939
        %v1306 = vunpack.c.l.b16 %v940
        %v1307 = vunpack.c.h.b16 %v940
        %v1308 = vunpack.c.l.b16 %v941
        %v1309 = vunpack.c.h.b16 %v941
        %v1310 = vunpack.c.l.b16 %v942
        %v1311 = vunpack.c.h.b16 %v942
        %v1312 = vunpack.c.l.b16 %v943
        %v1313 = vunpack.c.h.b16 %v943
        %v1314 = vunpack.c.l.b16 %v944
        %v1315 = vunpack.c.h.b16 %v944
        %v1316 = vunpack.c.l.b16 %v945
        %v1317 = vunpack.c.h.b16 %v945
        %v1318 = vunpack.c.l.b16 %v946
        %v1319 = vunpack.c.h.b16 %v946
        %v1320 = vunpack.c.l.b16 %v947
        %v1321 = vunpack.c.h.b16 %v947
        %v1322 = vunpack.c.l.b16 %v948
        %v1323 = vunpack.c.h.b16 %v948
        %v1324 = vunpack.c.l.b16 %v949
        %v1325 = vunpack.c.h.b16 %v949
        %v1326 = vunpack.c.l.b16 %v950
        %v1327 = vunpack.c.h.b16 %v950
        %v1328 = vunpack.c.l.b16 %v951
        %v1329 = vunpack.c.h.b16 %v951
        %v1330 = vunpack.c.l.b16 %v952
        %v1331 = vunpack.c.h.b16 %v952
        %v1332 = vunpack.c.l.b16 %v953
        %v1333 = vunpack.c.h.b16 %v953
        %v1334 = vunpack.c.l.b16 %v954
        %v1335 = vunpack.c.h.b16 %v954
        %v1336 = vunpack.c.l.b16 %v955
        %v1337 = vunpack.c.h.b16 %v955
        %v1338 = vunpack.c.l.b16 %v956
        %v1339 = vunpack.c.h.b16 %v956
        %v1340 = vunpack.c.l.b16 %v957
        %v1341 = vunpack.c.h.b16 %v957
        %v1342 = vunpack.c.l.b16 %v958
        %v1343 = vunpack.c.h.b16 %v958
        %v1344 = vunpack.c.l.b16 %v959
        %v1345 = vunpack.c.h.b16 %v959
        %v1346 = vunpack.c.l.b16 %v960
        %v1347 = vunpack.c.h.b16 %v960
        %v1348 = vunpack.c.l.b16 %v961
        %v1349 = vunpack.c.h.b16 %v961
        %v1350 = vunpack.c.l.b16 %v962
        %v1351 = vunpack.c.h.b16 %v962
        %v1352 = vunpack.c.l.b16 %v963
        %v1353 = vunpack.c.h.b16 %v963
        %v1354 = vunpack.c.l.b16 %v964
        %v1355 = vunpack.c.h.b16 %v964
        %v1356 = vunpack.c.l.b16 %v965
        %v1357 = vunpack.c.h.b16 %v965
        %v1358 = vunpack.c.l.b16 %v966
        %v1359 = vunpack.c.h.b16 %v966
        %v1360 = vunpack.c.l.b16 %v967
        %v1361 = vunpack.c.h.b16 %v967
        %v1362 = vunpack.c.l.b16 %v968
        %v1363 = vunpack.c.h.b16 %v968
        %v1364 = vunpack.c.l.b16 %v969
        %v1365 = vunpack.c.h.b16 %v969
        %v1366 = vunpack.c.l.b16 %v970
        %v1367 = vunpack.c.h.b16 %v970
        %v1368 = vunpack.c.l.b16 %v971
        %v1369 = vunpack.c.h.b16 %v971
        %v1370 = vunpack.c.l.b16 %v972
        %v1371 = vunpack.c.h.b16 %v972
        %v1372 = vunpack.c.l.b16 %v973
        %v1373 = vunpack.c.h.b16 %v973
        %v1374 = vunpack.c.l.b16 %v974
        %v1375 = vunpack.c.h.b16 %v974
        %v1376 = vunpack.c.l.b16 %v975
        %v1377 = vunpack.c.h.b16 %v975
        %v1378 = vunpack.c.l.b16 %v976
        %v1379 = vunpack.c.h.b16 %v976
        %v1380 = vunpack.c.l.b16 %v977
        %v1381 = vunpack.c.h.b16 %v977
        %v1382 = vunpack.c.l.b16 %v978
        %v1383 = vunpack.c.h.b16 %v978
        %v1384 = vunpack.c.l.b16 %v979
        %v1385 = vunpack.c.h.b16 %v979
        %v1386 = vpack.c.b16 %v1134, %v1130
        %v1387 = vpack.c.b16 %v1135, %v1131
        %v1388 = vpack.c.b16 %v1136, %v1132
        %v1389 = vpack.c.b16 %v1137, %v1133
        %v1390 = vpack.c.b16 %v1142, %v1138
        %v1391 = vpack.c.b16 %v1143, %v1139
        %v1392 = vpack.c.b16 %v1144, %v1140
        %v1393 = vpack.c.b16 %v1145, %v1141
        %v1394 = vpack.c.b16 %v1150, %v1146
        %v1395 = vpack.c.b16 %v1151, %v1147
        %v1396 = vpack.c.b16 %v1152, %v1148
        %v1397 = vpack.c.b16 %v1153, %v1149
        %v1398 = vpack.c.b16 %v1158, %v1154
        %v1399 = vpack.c.b16 %v1159, %v1155
        %v1400 = vpack.c.b16 %v1160, %v1156
        %v1401 = vpack.c.b16 %v1161, %v1157
        %v1402 = vpack.c.b16 %v1166, %v1162
        %v1403 = vpack.c.b16 %v1167, %v1163
        %v1404 = vpack.c.b16 %v1168, %v1164
        %v1405 = vpack.c.b16 %v1169, %v1165
        %v1406 = vpack.c.b16 %v1174, %v1170
        %v1407 = vpack.c.b16 %v1175, %v1171
        %v1408 = vpack.c.b16 %v1176, %v1172
        %v1409 = vpack.c.b16 %v1177, %v1173
        %v1410 = vpack.c.b16 %v1182, %v1178
        %v1411 = vpack.c.b16 %v1183, %v1179
        %v1412 = vpack.c.b16 %v1184, %v1180
        %v1413 = vpack.c.b16 %v1185, %v1181
        %v1414 = vpack.c.b16 %v1190, %v1186
        %v1415 = vpack.c.b16 %v1191, %v1187
        %v1416 = vpack.c.b16 %v1192, %v1188
        %v1417 = vpack.c.b16 %v1193, %v1189
        %v1418 = vpack.c.b16 %v1198, %v1194
        %v1419 = vpack.c.b16 %v1199, %v1195
        %v1420 = vpack.c.b16 %v1200, %v1196
        %v1421 = vpack.c.b16 %v1201, %v1197
        %v1422 = vpack.c.b16 %v1206, %v1202
        %v1423 = vpack.c.b16 %v1207, %v1203
        %v1424 = vpack.c.b16 %v1208, %v1204
        %v1425 = vpack.c.b16 %v1209, %v1205
        %v1426 = vpack.c.b16 %v1214, %v1210
        %v1427 = vpack.c.b16 %v1215, %v1211
        %v1428 = vpack.c.b16 %v1216, %v1212
        %v1429 = vpack.c.b16 %v1217, %v1213
        %v1430 = vpack.c.b16 %v1222, %v1218
        %v1431 = vpack.c.b16 %v1223, %v1219
        %v1432 = vpack.c.b16 %v1224, %v1220
        %v1433 = vpack.c.b16 %v1225, %v1221
        %v1434 = vpack.c.b16 %v1230, %v1226
        %v1435 = vpack.c.b16 %v1231, %v1227
        %v1436 = vpack.c.b16 %v1232, %v1228
        %v1437 = vpack.c.b16 %v1233, %v1229
        %v1438 = vpack.c.b16 %v1238, %v1234
        %v1439 = vpack.c.b16 %v1239, %v1235
        %v1440 = vpack.c.b16 %v1240, %v1236
        %v1441 = vpack.c.b16 %v1241, %v1237
        %v1442 = vpack.c.b16 %v1246, %v1242
        %v1443 = vpack.c.b16 %v1247, %v1243
        %v1444 = vpack.c.b16 %v1248, %v1244
        %v1445 = vpack.c.b16 %v1249, %v1245
        %v1446 = vpack.c.b16 %v1254, %v1250
        %v1447 = vpack.c.b16 %v1255, %v1251
        %v1448 = vpack.c.b16 %v1256, %v1252
        %v1449 = vpack.c.b16 %v1257, %v1253
        %v1450 = vpack.c.b16 %v1262, %v1258
        %v1451 = vpack.c.b16 %v1263, %v1259
        %v1452 = vpack.c.b16 %v1264, %v1260
        %v1453 = vpack.c.b16 %v1265, %v1261
        %v1454 = vpack.c.b16 %v1270, %v1266
        %v1455 = vpack.c.b16 %v1271, %v1267
        %v1456 = vpack.c.b16 %v1272, %v1268
        %v1457 = vpack.c.b16 %v1273, %v1269
        %v1458 = vpack.c.b16 %v1278, %v1274
        %v1459 = vpack.c.b16 %v1279, %v1275
        %v1460 = vpack.c.b16 %v1280, %v1276
        %v1461 = vpack.c.b16 %v1281, %v1277
        %v1462 = vpack.c.b16 %v1286, %v1282
        %v1463 = vpack.c.b16 %v1287, %v1283
        %v1464 = vpack.c.b16 %v1288, %v1284
        %v1465 = vpack.c.b16 %v1289, %v1285
        %v1466 = vpack.c.b16 %v1294, %v1290
        %v1467 = vpack.c.b16 %v1295, %v1291
        %v1468 = vpack.c.b16 %v1296, %v1292
        %v1469 = vpack.c.b16 %v1297, %v1293
        %v1470 = vpack.c.b16 %v1302, %v1298
        %v1471 = vpack.c.b16 %v1303, %v1299
        %v1472 = vpack.c.b16 %v1304, %v1300
        %v1473 = vpack.c.b16 %v1305, %v1301
        %v1474 = vpack.c.b16 %v1310, %v1306
        %v1475 = vpack.c.b16 %v1311, %v1307
        %v1476 = vpack.c.b16 %v1312, %v1308
        %v1477 = vpack.c.b16 %v1313, %v1309
        %v1478 = vpack.c.b16 %v1318, %v1314
        %v1479 = vpack.c.b16 %v1319, %v1315
        %v1480 = vpack.c.b16 %v1320, %v1316
        %v1481 = vpack.c.b16 %v1321, %v1317
        %v1482 = vpack.c.b16 %v1326, %v1322
        %v1483 = vpack.c.b16 %v1327, %v1323
        %v1484 = vpack.c.b16 %v1328, %v1324
        %v1485 = vpack.c.b16 %v1329, %v1325
        %v1486 = vpack.c.b16 %v1334, %v1330
        %v1487 = vpack.c.b16 %v1335, %v1331
        %v1488 = vpack.c.b16 %v1336, %v1332
        %v1489 = vpack.c.b16 %v1337, %v1333
        %v1490 = vpack.c.b16 %v1342, %v1338
        %v1491 = vpack.c.b16 %v1343, %v1339
        %v1492 = vpack.c.b16 %v1344, %v1340
        %v1493 = vpack.c.b16 %v1345, %v1341
        %v1494 = vpack.c.b16 %v1350, %v1346
        %v1495 = vpack.c.b16 %v1351, %v1347
        %v1496 = vpack.c.b16 %v1352, %v1348
        %v1497 = vpack.c.b16 %v1353, %v1349
        %v1498 = vpack.c.b16 %v1358, %v1354
        %v1499 = vpack.c.b16 %v1359, %v1355
        %v1500 = vpack.c.b16 %v1360, %v1356
        %v1501 = vpack.c.b16 %v1361, %v1357
        %v1502 = vpack.c.b16 %v1366, %v1362
        %v1503 = vpack.c.b16 %v1367, %v1363
        %v1504 = vpack.c.b16 %v1368, %v1364
        %v1505 = vpack.c.b16 %v1369, %v1365
        %v1506 = vpack.c.b16 %v1374, %v1370
        %v1507 = vpack.c.b16 %v1375, %v1371
        %v1508 = vpack.c.b16 %v1376, %v1372
        %v1509 = vpack.c.b16 %v1377, %v1373
        %v1510 = vpack.c.b16 %v1382, %v1378
        %v1511 = vpack.c.b16 %v1383, %v1379
        %v1512 = vpack.c.b16 %v1384, %v1380
        %v1513 = vpack.c.b16 %v1385, %v1381
        %1642 = vmatprep.subr.bf16.mxu0 %v1387
        %1643 = vmatpush1.bf16.msra.mxu0 %v1386
        %1644 = vmatprep.subr.bf16.mxu0 %v1391
        %1645 = vmatpush1.bf16.msra.mxu0 %v1390
        %1646 = vmatprep.subr.bf16.mxu0 %v1395
        %1647 = vmatpush1.bf16.msra.mxu0 %v1394
        %1648 = vmatprep.subr.bf16.mxu0 %v1399
        %1649 = vmatpush1.bf16.msra.mxu0 %v1398
        %1650 = vmatprep.subr.bf16.mxu0 %v1403
        %1651 = vmatpush1.bf16.msra.mxu0 %v1402
        %1652 = vmatprep.subr.bf16.mxu0 %v1407
        %1653 = vmatpush1.bf16.msra.mxu0 %v1406
        %1654 = vmatprep.subr.bf16.mxu0 %v1411
        %1655 = vmatpush1.bf16.msra.mxu0 %v1410
        %1656 = vmatprep.subr.bf16.mxu0 %v1415
        %1657 = vmatpush1.bf16.msra.mxu0 %v1414
        %1658 = vmatprep.subr.bf16.mxu0 %v1419
        %1659 = vmatpush1.bf16.msra.mxu0 %v1418
        %1660 = vmatprep.subr.bf16.mxu0 %v1423
        %1661 = vmatpush1.bf16.msra.mxu0 %v1422
        %1662 = vmatprep.subr.bf16.mxu0 %v1427
        %1663 = vmatpush1.bf16.msra.mxu0 %v1426
        %1664 = vmatprep.subr.bf16.mxu0 %v1431
        %1665 = vmatpush1.bf16.msra.mxu0 %v1430
        %1666 = vmatprep.subr.bf16.mxu0 %v1435
        %1667 = vmatpush1.bf16.msra.mxu0 %v1434
        %1668 = vmatprep.subr.bf16.mxu0 %v1439
        %1669 = vmatpush1.bf16.msra.mxu0 %v1438
        %1670 = vmatprep.subr.bf16.mxu0 %v1443
        %1671 = vmatpush1.bf16.msra.mxu0 %v1442
        %1672 = vmatprep.subr.bf16.mxu0 %v1447
        %1673 = vmatpush1.bf16.msra.mxu0 %v1446
        %1674 = vmatprep.mubr.bf16.mxu0 %v821
        %1675 = vmatmul.mubr.bf16.gmra.mrb[0].mxu0 %v820
        %v1676 = vpop.f32.mrb[0].mxu0
        %v1677 = vadd.f32 %v985, %v1676
        %v1678 = vpop.f32.mrb[0].mxu0
        %v1679 = vadd.f32 %v989, %v1678
        %v1680 = vpop.f32.mrb[0].mxu0
        %v1681 = vadd.f32 %v985, %v1680
        %v1682 = vpop.f32.mrb[0].mxu0
        %v1683 = vadd.f32 %v989, %v1682
        %1684 = vmatprep.mubr.bf16.mxu0 %v825
        %1685 = vmatmul.mubr.bf16.gmra.mrb[0].mxu0 %v824
        %v1686 = vpop.f32.mrb[0].mxu0
        %v1687 = vadd.f32 %v985, %v1686
        %v1688 = vpop.f32.mrb[0].mxu0
        %v1689 = vadd.f32 %v989, %v1688
        %v1690 = vpop.f32.mrb[0].mxu0
        %v1691 = vadd.f32 %v985, %v1690
        %v1692 = vpop.f32.mrb[0].mxu0
        %v1693 = vadd.f32 %v989, %v1692
        %1694 = vmatprep.mubr.bf16.mxu0 %v829
        %1695 = vmatmul.mubr.bf16.gmra.mrb[0].mxu0 %v828
        %v1696 = vpop.f32.mrb[0].mxu0
        %v1697 = vadd.f32 %v985, %v1696
        %v1698 = vpop.f32.mrb[0].mxu0
        %v1699 = vadd.f32 %v989, %v1698
        %v1700 = vpop.f32.mrb[0].mxu0
        %v1701 = vadd.f32 %v985, %v1700
        %v1702 = vpop.f32.mrb[0].mxu0
        %v1703 = vadd.f32 %v989, %v1702
        %1704 = vmatprep.mubr.bf16.mxu0 %v833
        %1705 = vmatmul.mubr.bf16.gmra.mrb[0].mxu0 %v832
        %v1706 = vpop.f32.mrb[0].mxu0
        %v1707 = vadd.f32 %v985, %v1706
        %v1708 = vpop.f32.mrb[0].mxu0
        %v1709 = vadd.f32 %v989, %v1708
        %v1710 = vpop.f32.mrb[0].mxu0
        %v1711 = vadd.f32 %v985, %v1710
        %v1712 = vpop.f32.mrb[0].mxu0
        %v1713 = vadd.f32 %v989, %v1712
        %1714 = vmatprep.mubr.bf16.mxu0 %v837
        %1715 = vmatmul.mubr.bf16.gmra.mrb[0].mxu0 %v836
        %v1716 = vpop.f32.mrb[0].mxu0
        %v1717 = vadd.f32 %v985, %v1716
        %v1718 = vpop.f32.mrb[0].mxu0
        %v1719 = vadd.f32 %v989, %v1718
        %v1720 = vpop.f32.mrb[0].mxu0
        %v1721 = vadd.f32 %v985, %v1720
        %v1722 = vpop.f32.mrb[0].mxu0
        %v1723 = vadd.f32 %v989, %v1722
        %1724 = vmatprep.mubr.bf16.mxu0 %v841
        %1725 = vmatmul.mubr.bf16.gmra.mrb[0].mxu0 %v840
        %v1726 = vpop.f32.mrb[0].mxu0
        %v1727 = vadd.f32 %v985, %v1726
        %v1728 = vpop.f32.mrb[0].mxu0
        %v1729 = vadd.f32 %v989, %v1728
        %v1730 = vpop.f32.mrb[0].mxu0
        %v1731 = vadd.f32 %v985, %v1730
        %v1732 = vpop.f32.mrb[0].mxu0
        %v1733 = vadd.f32 %v989, %v1732
        %1734 = vmatprep.mubr.bf16.mxu0 %v845
        %1735 = vmatmul.mubr.bf16.gmra.mrb[0].mxu0 %v844
        %v1736 = vpop.f32.mrb[0].mxu0
        %v1737 = vadd.f32 %v985, %v1736
        %v1738 = vpop.f32.mrb[0].mxu0
        %v1739 = vadd.f32 %v989, %v1738
        %v1740 = vpop.f32.mrb[0].mxu0
        %v1741 = vadd.f32 %v985, %v1740
        %v1742 = vpop.f32.mrb[0].mxu0
        %v1743 = vadd.f32 %v989, %v1742
        %1744 = vmatprep.mubr.bf16.mxu0 %v849
        %1745 = vmatmul.mubr.bf16.gmra.mrb[0].mxu0 %v848
        %v1746 = vpop.f32.mrb[0].mxu0
        %v1747 = vadd.f32 %v985, %v1746
        %v1748 = vpop.f32.mrb[0].mxu0
        %v1749 = vadd.f32 %v989, %v1748
        %v1750 = vpop.f32.mrb[0].mxu0
        %v1751 = vadd.f32 %v985, %v1750
        %v1752 = vpop.f32.mrb[0].mxu0
        %v1753 = vadd.f32 %v989, %v1752
        %1754 = vdwg.mxu0
        %1755 = vmatprep.subr.bf16.mxu0 %v1451
        %1756 = vmatpush1.bf16.msra.mxu0 %v1450
        %1757 = vmatprep.subr.bf16.mxu0 %v1455
        %1758 = vmatpush1.bf16.msra.mxu0 %v1454
        %1759 = vmatprep.subr.bf16.mxu0 %v1459
        %1760 = vmatpush1.bf16.msra.mxu0 %v1458
        %1761 = vmatprep.subr.bf16.mxu0 %v1463
        %1762 = vmatpush1.bf16.msra.mxu0 %v1462
        %1763 = vmatprep.subr.bf16.mxu0 %v1467
        %1764 = vmatpush1.bf16.msra.mxu0 %v1466
        %1765 = vmatprep.subr.bf16.mxu0 %v1471
        %1766 = vmatpush1.bf16.msra.mxu0 %v1470
        %1767 = vmatprep.subr.bf16.mxu0 %v1475
        %1768 = vmatpush1.bf16.msra.mxu0 %v1474
        %1769 = vmatprep.subr.bf16.mxu0 %v1479
        %1770 = vmatpush1.bf16.msra.mxu0 %v1478
        %1771 = vmatprep.subr.bf16.mxu0 %v1483
        %1772 = vmatpush1.bf16.msra.mxu0 %v1482
        %1773 = vmatprep.subr.bf16.mxu0 %v1487
        %1774 = vmatpush1.bf16.msra.mxu0 %v1486
        %1775 = vmatprep.subr.bf16.mxu0 %v1491
        %1776 = vmatpush1.bf16.msra.mxu0 %v1490
        %1777 = vmatprep.subr.bf16.mxu0 %v1495
        %1778 = vmatpush1.bf16.msra.mxu0 %v1494
        %1779 = vmatprep.subr.bf16.mxu0 %v1499
        %1780 = vmatpush1.bf16.msra.mxu0 %v1498
        %1781 = vmatprep.subr.bf16.mxu0 %v1503
        %1782 = vmatpush1.bf16.msra.mxu0 %v1502
        %1783 = vmatprep.subr.bf16.mxu0 %v1507
        %1784 = vmatpush1.bf16.msra.mxu0 %v1506
        %1785 = vmatprep.subr.bf16.mxu0 %v1511
        %1786 = vmatpush1.bf16.msra.mxu0 %v1510
        %1787 = vmatprep.mubr.bf16.mxu0 %v823
        %1788 = vmatmul.mubr.bf16.gmra.mrb[0].mxu0 %v822
        %v1789 = vpop.f32.mrb[0].mxu0
        %v1790 = vadd.f32 %v1677, %v1789
        %v1791 = vpop.f32.mrb[0].mxu0
        %v1792 = vadd.f32 %v1679, %v1791
        %v1793 = vpop.f32.mrb[0].mxu0
        %v1794 = vadd.f32 %v1681, %v1793
        %v1795 = vpop.f32.mrb[0].mxu0
        %v1796 = vadd.f32 %v1683, %v1795
        %1797 = vmatprep.mubr.bf16.mxu0 %v827
        %1798 = vmatmul.mubr.bf16.gmra.mrb[0].mxu0 %v826
        %v1799 = vpop.f32.mrb[0].mxu0
        %v1800 = vadd.f32 %v1687, %v1799
        %v1801 = vpop.f32.mrb[0].mxu0
        %v1802 = vadd.f32 %v1689, %v1801
        %v1803 = vpop.f32.mrb[0].mxu0
        %v1804 = vadd.f32 %v1691, %v1803
        %v1805 = vpop.f32.mrb[0].mxu0
        %v1806 = vadd.f32 %v1693, %v1805
        %1807 = vmatprep.mubr.bf16.mxu0 %v831
        %1808 = vmatmul.mubr.bf16.gmra.mrb[0].mxu0 %v830
        %v1809 = vpop.f32.mrb[0].mxu0
        %v1810 = vadd.f32 %v1697, %v1809
        %v1811 = vpop.f32.mrb[0].mxu0
        %v1812 = vadd.f32 %v1699, %v1811
        %v1813 = vpop.f32.mrb[0].mxu0
        %v1814 = vadd.f32 %v1701, %v1813
        %v1815 = vpop.f32.mrb[0].mxu0
        %v1816 = vadd.f32 %v1703, %v1815
        %1817 = vmatprep.mubr.bf16.mxu0 %v835
        %1818 = vmatmul.mubr.bf16.gmra.mrb[0].mxu0 %v834
        %v1819 = vpop.f32.mrb[0].mxu0
        %v1820 = vadd.f32 %v1707, %v1819
        %v1821 = vpop.f32.mrb[0].mxu0
        %v1822 = vadd.f32 %v1709, %v1821
        %v1823 = vpop.f32.mrb[0].mxu0
        %v1824 = vadd.f32 %v1711, %v1823
        %v1825 = vpop.f32.mrb[0].mxu0
        %v1826 = vadd.f32 %v1713, %v1825
        %1827 = vmatprep.mubr.bf16.mxu0 %v839
        %1828 = vmatmul.mubr.bf16.gmra.mrb[0].mxu0 %v838
        %v1829 = vpop.f32.mrb[0].mxu0
        %v1830 = vadd.f32 %v1717, %v1829
        %v1831 = vpop.f32.mrb[0].mxu0
        %v1832 = vadd.f32 %v1719, %v1831
        %v1833 = vpop.f32.mrb[0].mxu0
        %v1834 = vadd.f32 %v1721, %v1833
        %v1835 = vpop.f32.mrb[0].mxu0
        %v1836 = vadd.f32 %v1723, %v1835
        %1837 = vmatprep.mubr.bf16.mxu0 %v843
        %1838 = vmatmul.mubr.bf16.gmra.mrb[0].mxu0 %v842
        %v1839 = vpop.f32.mrb[0].mxu0
        %v1840 = vadd.f32 %v1727, %v1839
        %v1841 = vpop.f32.mrb[0].mxu0
        %v1842 = vadd.f32 %v1729, %v1841
        %v1843 = vpop.f32.mrb[0].mxu0
        %v1844 = vadd.f32 %v1731, %v1843
        %v1845 = vpop.f32.mrb[0].mxu0
        %v1846 = vadd.f32 %v1733, %v1845
        %1847 = vmatprep.mubr.bf16.mxu0 %v847
        %1848 = vmatmul.mubr.bf16.gmra.mrb[0].mxu0 %v846
        %v1849 = vpop.f32.mrb[0].mxu0
        %v1850 = vadd.f32 %v1737, %v1849
        %v1851 = vpop.f32.mrb[0].mxu0
        %v1852 = vadd.f32 %v1739, %v1851
        %v1853 = vpop.f32.mrb[0].mxu0
        %v1854 = vadd.f32 %v1741, %v1853
        %v1855 = vpop.f32.mrb[0].mxu0
        %v1856 = vadd.f32 %v1743, %v1855
        %1857 = vmatprep.mubr.bf16.mxu0 %v851
        %1858 = vmatmul.mubr.bf16.gmra.mrb[0].mxu0 %v850
        %v1859 = vpop.f32.mrb[0].mxu0
        %v1860 = vadd.f32 %v1747, %v1859
        %v1861 = vpop.f32.mrb[0].mxu0
        %v1862 = vadd.f32 %v1749, %v1861
        %v1863 = vpop.f32.mrb[0].mxu0
        %v1864 = vadd.f32 %v1751, %v1863
        %v1865 = vpop.f32.mrb[0].mxu0
        %v1866 = vadd.f32 %v1753, %v1865
        %1867 = vdwg.mxu0
        %1868 = vmatprep.subr.bf16.mxu0 %v1389
        %1869 = vmatpush1.bf16.msra.mxu0 %v1388
        %1870 = vmatprep.subr.bf16.mxu0 %v1393
        %1871 = vmatpush1.bf16.msra.mxu0 %v1392
        %1872 = vmatprep.subr.bf16.mxu0 %v1397
        %1873 = vmatpush1.bf16.msra.mxu0 %v1396
        %1874 = vmatprep.subr.bf16.mxu0 %v1401
        %1875 = vmatpush1.bf16.msra.mxu0 %v1400
        %1876 = vmatprep.subr.bf16.mxu0 %v1405
        %1877 = vmatpush1.bf16.msra.mxu0 %v1404
        %1878 = vmatprep.subr.bf16.mxu0 %v1409
        %1879 = vmatpush1.bf16.msra.mxu0 %v1408
        %1880 = vmatprep.subr.bf16.mxu0 %v1413
        %1881 = vmatpush1.bf16.msra.mxu0 %v1412
        %1882 = vmatprep.subr.bf16.mxu0 %v1417
        %1883 = vmatpush1.bf16.msra.mxu0 %v1416
        %1884 = vmatprep.subr.bf16.mxu0 %v1421
        %1885 = vmatpush1.bf16.msra.mxu0 %v1420
        %1886 = vmatprep.subr.bf16.mxu0 %v1425
        %1887 = vmatpush1.bf16.msra.mxu0 %v1424
        %1888 = vmatprep.subr.bf16.mxu0 %v1429
        %1889 = vmatpush1.bf16.msra.mxu0 %v1428
        %1890 = vmatprep.subr.bf16.mxu0 %v1433
        %1891 = vmatpush1.bf16.msra.mxu0 %v1432
        %1892 = vmatprep.subr.bf16.mxu0 %v1437
        %1893 = vmatpush1.bf16.msra.mxu0 %v1436
        %1894 = vmatprep.subr.bf16.mxu0 %v1441
        %1895 = vmatpush1.bf16.msra.mxu0 %v1440
        %1896 = vmatprep.subr.bf16.mxu0 %v1445
        %1897 = vmatpush1.bf16.msra.mxu0 %v1444
        %1898 = vmatprep.subr.bf16.mxu0 %v1449
        %1899 = vmatpush1.bf16.msra.mxu0 %v1448
        %1900 = vmatprep.mubr.bf16.mxu0 %v821
        %1901 = vmatmul.mubr.bf16.gmra.mrb[0].mxu0 %v820
        %v1902 = vpop.f32.mrb[0].mxu0
        %v1903 = vadd.f32 %v993, %v1902
        %v1904 = vpop.f32.mrb[0].mxu0
        %v1905 = vadd.f32 %v997, %v1904
        %v1906 = vpop.f32.mrb[0].mxu0
        %v1907 = vadd.f32 %v993, %v1906
        %v1908 = vpop.f32.mrb[0].mxu0
        %v1909 = vadd.f32 %v997, %v1908
        %1910 = vmatprep.mubr.bf16.mxu0 %v825
        %1911 = vmatmul.mubr.bf16.gmra.mrb[0].mxu0 %v824
        %v1912 = vpop.f32.mrb[0].mxu0
        %v1913 = vadd.f32 %v993, %v1912
        %v1914 = vpop.f32.mrb[0].mxu0
        %v1915 = vadd.f32 %v997, %v1914
        %v1916 = vpop.f32.mrb[0].mxu0
        %v1917 = vadd.f32 %v993, %v1916
        %v1918 = vpop.f32.mrb[0].mxu0
        %v1919 = vadd.f32 %v997, %v1918
        %1920 = vmatprep.mubr.bf16.mxu0 %v829
        %1921 = vmatmul.mubr.bf16.gmra.mrb[0].mxu0 %v828
        %v1922 = vpop.f32.mrb[0].mxu0
        %v1923 = vadd.f32 %v993, %v1922
        %v1924 = vpop.f32.mrb[0].mxu0
        %v1925 = vadd.f32 %v997, %v1924
        %v1926 = vpop.f32.mrb[0].mxu0
        %v1927 = vadd.f32 %v993, %v1926
        %v1928 = vpop.f32.mrb[0].mxu0
        %v1929 = vadd.f32 %v997, %v1928
        %1930 = vmatprep.mubr.bf16.mxu0 %v833
        %1931 = vmatmul.mubr.bf16.gmra.mrb[0].mxu0 %v832
        %v1932 = vpop.f32.mrb[0].mxu0
        %v1933 = vadd.f32 %v993, %v1932
        %v1934 = vpop.f32.mrb[0].mxu0
        %v1935 = vadd.f32 %v997, %v1934
        %v1936 = vpop.f32.mrb[0].mxu0
        %v1937 = vadd.f32 %v993, %v1936
        %v1938 = vpop.f32.mrb[0].mxu0
        %v1939 = vadd.f32 %v997, %v1938
        %1940 = vmatprep.mubr.bf16.mxu0 %v837
        %1941 = vmatmul.mubr.bf16.gmra.mrb[0].mxu0 %v836
        %v1942 = vpop.f32.mrb[0].mxu0
        %v1943 = vadd.f32 %v993, %v1942
        %v1944 = vpop.f32.mrb[0].mxu0
        %v1945 = vadd.f32 %v997, %v1944
        %v1946 = vpop.f32.mrb[0].mxu0
        %v1947 = vadd.f32 %v993, %v1946
        %v1948 = vpop.f32.mrb[0].mxu0
        %v1949 = vadd.f32 %v997, %v1948
        %1950 = vmatprep.mubr.bf16.mxu0 %v841
        %1951 = vmatmul.mubr.bf16.gmra.mrb[0].mxu0 %v840
        %v1952 = vpop.f32.mrb[0].mxu0
        %v1953 = vadd.f32 %v993, %v1952
        %v1954 = vpop.f32.mrb[0].mxu0
        %v1955 = vadd.f32 %v997, %v1954
        %v1956 = vpop.f32.mrb[0].mxu0
        %v1957 = vadd.f32 %v993, %v1956
        %v1958 = vpop.f32.mrb[0].mxu0
        %v1959 = vadd.f32 %v997, %v1958
        %1960 = vmatprep.mubr.bf16.mxu0 %v845
        %1961 = vmatmul.mubr.bf16.gmra.mrb[0].mxu0 %v844
        %v1962 = vpop.f32.mrb[0].mxu0
        %v1963 = vadd.f32 %v993, %v1962
        %v1964 = vpop.f32.mrb[0].mxu0
        %v1965 = vadd.f32 %v997, %v1964
        %v1966 = vpop.f32.mrb[0].mxu0
        %v1967 = vadd.f32 %v993, %v1966
        %v1968 = vpop.f32.mrb[0].mxu0
        %v1969 = vadd.f32 %v997, %v1968
        %1970 = vmatprep.mubr.bf16.mxu0 %v849
        %1971 = vmatmul.mubr.bf16.gmra.mrb[0].mxu0 %v848
        %v1972 = vpop.f32.mrb[0].mxu0
        %v1973 = vadd.f32 %v993, %v1972
        %v1974 = vpop.f32.mrb[0].mxu0
        %v1975 = vadd.f32 %v997, %v1974
        %v1976 = vpop.f32.mrb[0].mxu0
        %v1977 = vadd.f32 %v993, %v1976
        %v1978 = vpop.f32.mrb[0].mxu0
        %v1979 = vadd.f32 %v997, %v1978
        %1980 = vdwg.mxu0
        %1981 = vmatprep.subr.bf16.mxu0 %v1453
        %1982 = vmatpush1.bf16.msra.mxu0 %v1452
        %1983 = vmatprep.subr.bf16.mxu0 %v1457
        %1984 = vmatpush1.bf16.msra.mxu0 %v1456
        %1985 = vmatprep.subr.bf16.mxu0 %v1461
        %1986 = vmatpush1.bf16.msra.mxu0 %v1460
        %1987 = vmatprep.subr.bf16.mxu0 %v1465
        %1988 = vmatpush1.bf16.msra.mxu0 %v1464
        %1989 = vmatprep.subr.bf16.mxu0 %v1469
        %1990 = vmatpush1.bf16.msra.mxu0 %v1468
        %1991 = vmatprep.subr.bf16.mxu0 %v1473
        %1992 = vmatpush1.bf16.msra.mxu0 %v1472
        %1993 = vmatprep.subr.bf16.mxu0 %v1477
        %1994 = vmatpush1.bf16.msra.mxu0 %v1476
        %1995 = vmatprep.subr.bf16.mxu0 %v1481
        %1996 = vmatpush1.bf16.msra.mxu0 %v1480
        %1997 = vmatprep.subr.bf16.mxu0 %v1485
        %1998 = vmatpush1.bf16.msra.mxu0 %v1484
        %1999 = vmatprep.subr.bf16.mxu0 %v1489
        %2000 = vmatpush1.bf16.msra.mxu0 %v1488
        %2001 = vmatprep.subr.bf16.mxu0 %v1493
        %2002 = vmatpush1.bf16.msra.mxu0 %v1492
        %2003 = vmatprep.subr.bf16.mxu0 %v1497
        %2004 = vmatpush1.bf16.msra.mxu0 %v1496
        %2005 = vmatprep.subr.bf16.mxu0 %v1501
        %2006 = vmatpush1.bf16.msra.mxu0 %v1500
        %2007 = vmatprep.subr.bf16.mxu0 %v1505
        %2008 = vmatpush1.bf16.msra.mxu0 %v1504
        %2009 = vmatprep.subr.bf16.mxu0 %v1509
        %2010 = vmatpush1.bf16.msra.mxu0 %v1508
        %2011 = vmatprep.subr.bf16.mxu0 %v1513
        %2012 = vmatpush1.bf16.msra.mxu0 %v1512
        %2013 = vmatprep.mubr.bf16.mxu0 %v823
        %2014 = vmatmul.mubr.bf16.gmra.mrb[0].mxu0 %v822
        %v2015 = vpop.f32.mrb[0].mxu0
        %v2016 = vadd.f32 %v1903, %v2015
        %v2017 = vpop.f32.mrb[0].mxu0
        %v2018 = vadd.f32 %v1905, %v2017
        %v2019 = vpop.f32.mrb[0].mxu0
        %v2020 = vadd.f32 %v1907, %v2019
        %v2021 = vpop.f32.mrb[0].mxu0
        %v2022 = vadd.f32 %v1909, %v2021
        %2023 = vmatprep.mubr.bf16.mxu0 %v827
        %2024 = vmatmul.mubr.bf16.gmra.mrb[0].mxu0 %v826
        %v2025 = vpop.f32.mrb[0].mxu0
        %v2026 = vadd.f32 %v1913, %v2025
        %v2027 = vpop.f32.mrb[0].mxu0
        %v2028 = vadd.f32 %v1915, %v2027
        %v2029 = vpop.f32.mrb[0].mxu0
        %v2030 = vadd.f32 %v1917, %v2029
        %v2031 = vpop.f32.mrb[0].mxu0
        %v2032 = vadd.f32 %v1919, %v2031
        %2033 = vmatprep.mubr.bf16.mxu0 %v831
        %2034 = vmatmul.mubr.bf16.gmra.mrb[0].mxu0 %v830
        %v2035 = vpop.f32.mrb[0].mxu0
        %v2036 = vadd.f32 %v1923, %v2035
        %v2037 = vpop.f32.mrb[0].mxu0
        %v2038 = vadd.f32 %v1925, %v2037
        %v2039 = vpop.f32.mrb[0].mxu0
        %v2040 = vadd.f32 %v1927, %v2039
        %v2041 = vpop.f32.mrb[0].mxu0
        %v2042 = vadd.f32 %v1929, %v2041
        %2043 = vmatprep.mubr.bf16.mxu0 %v835
        %2044 = vmatmul.mubr.bf16.gmra.mrb[0].mxu0 %v834
        %v2045 = vpop.f32.mrb[0].mxu0
        %v2046 = vadd.f32 %v1933, %v2045
        %v2047 = vpop.f32.mrb[0].mxu0
        %v2048 = vadd.f32 %v1935, %v2047
        %v2049 = vpop.f32.mrb[0].mxu0
        %v2050 = vadd.f32 %v1937, %v2049
        %v2051 = vpop.f32.mrb[0].mxu0
        %v2052 = vadd.f32 %v1939, %v2051
        %2053 = vmatprep.mubr.bf16.mxu0 %v839
        %2054 = vmatmul.mubr.bf16.gmra.mrb[0].mxu0 %v838
        %v2055 = vpop.f32.mrb[0].mxu0
        %v2056 = vadd.f32 %v1943, %v2055
        %v2057 = vpop.f32.mrb[0].mxu0
        %v2058 = vadd.f32 %v1945, %v2057
        %v2059 = vpop.f32.mrb[0].mxu0
        %v2060 = vadd.f32 %v1947, %v2059
        %v2061 = vpop.f32.mrb[0].mxu0
        %v2062 = vadd.f32 %v1949, %v2061
        %2063 = vmatprep.mubr.bf16.mxu0 %v843
        %2064 = vmatmul.mubr.bf16.gmra.mrb[0].mxu0 %v842
        %v2065 = vpop.f32.mrb[0].mxu0
        %v2066 = vadd.f32 %v1953, %v2065
        %v2067 = vpop.f32.mrb[0].mxu0
        %v2068 = vadd.f32 %v1955, %v2067
        %v2069 = vpop.f32.mrb[0].mxu0
        %v2070 = vadd.f32 %v1957, %v2069
        %v2071 = vpop.f32.mrb[0].mxu0
        %v2072 = vadd.f32 %v1959, %v2071
        %2073 = vmatprep.mubr.bf16.mxu0 %v847
        %2074 = vmatmul.mubr.bf16.gmra.mrb[0].mxu0 %v846
        %v2075 = vpop.f32.mrb[0].mxu0
        %v2076 = vadd.f32 %v1963, %v2075
        %v2077 = vpop.f32.mrb[0].mxu0
        %v2078 = vadd.f32 %v1965, %v2077
        %v2079 = vpop.f32.mrb[0].mxu0
        %v2080 = vadd.f32 %v1967, %v2079
        %v2081 = vpop.f32.mrb[0].mxu0
        %v2082 = vadd.f32 %v1969, %v2081
        %2083 = vmatprep.mubr.bf16.mxu0 %v851
        %2084 = vmatmul.mubr.bf16.gmra.mrb[0].mxu0 %v850
        %v2085 = vpop.f32.mrb[0].mxu0
        %v2086 = vadd.f32 %v1973, %v2085
        %v2087 = vpop.f32.mrb[0].mxu0
        %v2088 = vadd.f32 %v1975, %v2087
        %v2089 = vpop.f32.mrb[0].mxu0
        %v2090 = vadd.f32 %v1977, %v2089
        %v2091 = vpop.f32.mrb[0].mxu0
        %v2092 = vadd.f32 %v1979, %v2091
        %2093 = vdwg.mxu0
        %v2094 = vmax.f32 %v1790, 0.0
        %v2095 = vmax.f32 %v1792, 0.0
        %v2096 = vmax.f32 %v2016, 0.0
        %v2097 = vmax.f32 %v2018, 0.0
        %v2098 = vmax.f32 %v1794, 0.0
        %v2099 = vmax.f32 %v1796, 0.0
        %v2100 = vmax.f32 %v2020, 0.0
        %v2101 = vmax.f32 %v2022, 0.0
        %v2102 = vmax.f32 %v1800, 0.0
        %v2103 = vmax.f32 %v1802, 0.0
        %v2104 = vmax.f32 %v2026, 0.0
        %v2105 = vmax.f32 %v2028, 0.0
        %v2106 = vmax.f32 %v1804, 0.0
        %v2107 = vmax.f32 %v1806, 0.0
        %v2108 = vmax.f32 %v2030, 0.0
        %v2109 = vmax.f32 %v2032, 0.0
        %v2110 = vmax.f32 %v1810, 0.0
        %v2111 = vmax.f32 %v1812, 0.0
        %v2112 = vmax.f32 %v2036, 0.0
        %v2113 = vmax.f32 %v2038, 0.0
        %v2114 = vmax.f32 %v1814, 0.0
        %v2115 = vmax.f32 %v1816, 0.0
        %v2116 = vmax.f32 %v2040, 0.0
        %v2117 = vmax.f32 %v2042, 0.0
        %v2118 = vmax.f32 %v1820, 0.0
        %v2119 = vmax.f32 %v1822, 0.0
        %v2120 = vmax.f32 %v2046, 0.0
        %v2121 = vmax.f32 %v2048, 0.0
        %v2122 = vmax.f32 %v1824, 0.0
        %v2123 = vmax.f32 %v1826, 0.0
        %v2124 = vmax.f32 %v2050, 0.0
        %v2125 = vmax.f32 %v2052, 0.0
        %v2126 = vmax.f32 %v1830, 0.0
        %v2127 = vmax.f32 %v1832, 0.0
        %v2128 = vmax.f32 %v2056, 0.0
        %v2129 = vmax.f32 %v2058, 0.0
        %v2130 = vmax.f32 %v1834, 0.0
        %v2131 = vmax.f32 %v1836, 0.0
        %v2132 = vmax.f32 %v2060, 0.0
        %v2133 = vmax.f32 %v2062, 0.0
        %v2134 = vmax.f32 %v1840, 0.0
        %v2135 = vmax.f32 %v1842, 0.0
        %v2136 = vmax.f32 %v2066, 0.0
        %v2137 = vmax.f32 %v2068, 0.0
        %v2138 = vmax.f32 %v1844, 0.0
        %v2139 = vmax.f32 %v1846, 0.0
        %v2140 = vmax.f32 %v2070, 0.0
        %v2141 = vmax.f32 %v2072, 0.0
        %v2142 = vmax.f32 %v1850, 0.0
        %v2143 = vmax.f32 %v1852, 0.0
        %v2144 = vmax.f32 %v2076, 0.0
        %v2145 = vmax.f32 %v2078, 0.0
        %v2146 = vmax.f32 %v1854, 0.0
        %v2147 = vmax.f32 %v1856, 0.0
        %v2148 = vmax.f32 %v2080, 0.0
        %v2149 = vmax.f32 %v2082, 0.0
        %v2150 = vmax.f32 %v1860, 0.0
        %v2151 = vmax.f32 %v1862, 0.0
        %v2152 = vmax.f32 %v2086, 0.0
        %v2153 = vmax.f32 %v2088, 0.0
        %v2154 = vmax.f32 %v1864, 0.0
        %v2155 = vmax.f32 %v1866, 0.0
        %v2156 = vmax.f32 %v2090, 0.0
        %v2157 = vmax.f32 %v2092, 0.0
        %v2158 = vpack.c.bf16 %v2098, %v2094
        %v2159 = vpack.c.bf16 %v2099, %v2095
        %v2160 = vpack.c.bf16 %v2100, %v2096
        %v2161 = vpack.c.bf16 %v2101, %v2097
        %v2162 = vpack.c.bf16 %v2106, %v2102
        %v2163 = vpack.c.bf16 %v2107, %v2103
        %v2164 = vpack.c.bf16 %v2108, %v2104
        %v2165 = vpack.c.bf16 %v2109, %v2105
        %v2166 = vpack.c.bf16 %v2114, %v2110
        %v2167 = vpack.c.bf16 %v2115, %v2111
        %v2168 = vpack.c.bf16 %v2116, %v2112
        %v2169 = vpack.c.bf16 %v2117, %v2113
        %v2170 = vpack.c.bf16 %v2122, %v2118
        %v2171 = vpack.c.bf16 %v2123, %v2119
        %v2172 = vpack.c.bf16 %v2124, %v2120
        %v2173 = vpack.c.bf16 %v2125, %v2121
        %v2174 = vpack.c.bf16 %v2130, %v2126
        %v2175 = vpack.c.bf16 %v2131, %v2127
        %v2176 = vpack.c.bf16 %v2132, %v2128
        %v2177 = vpack.c.bf16 %v2133, %v2129
        %v2178 = vpack.c.bf16 %v2138, %v2134
        %v2179 = vpack.c.bf16 %v2139, %v2135
        %v2180 = vpack.c.bf16 %v2140, %v2136
        %v2181 = vpack.c.bf16 %v2141, %v2137
        %v2182 = vpack.c.bf16 %v2146, %v2142
        %v2183 = vpack.c.bf16 %v2147, %v2143
        %v2184 = vpack.c.bf16 %v2148, %v2144
        %v2185 = vpack.c.bf16 %v2149, %v2145
        %v2186 = vpack.c.bf16 %v2154, %v2150
        %v2187 = vpack.c.bf16 %v2155, %v2151
        %v2188 = vpack.c.bf16 %v2156, %v2152
        %v2189 = vpack.c.bf16 %v2157, %v2153
        %v2190 = vld [vmem:[#allocation5] sm:$0xff]
        %v2191 = vld [vmem:[#allocation5 + $0x8] sm:$0xff]
        %v2192 = vld [vmem:[#allocation5 + $0x10] sm:$0xff]
        %v2193 = vld [vmem:[#allocation5 + $0x18] sm:$0xff]
        %v2194 = vld [vmem:[#allocation5 + $0x20] sm:$0xff]
        %v2195 = vld [vmem:[#allocation5 + $0x28] sm:$0xff]
        %v2196 = vld [vmem:[#allocation5 + $0x30] sm:$0xff]
        %v2197 = vld [vmem:[#allocation5 + $0x38] sm:$0xff]
        %v2198 = vld [vmem:[#allocation5 + $0x40] sm:$0xff]
        %v2199 = vld [vmem:[#allocation5 + $0x48] sm:$0xff]
        %v2200 = vld [vmem:[#allocation5 + $0x50] sm:$0xff]
        %v2201 = vld [vmem:[#allocation5 + $0x58] sm:$0xff]
        %v2202 = vld [vmem:[#allocation5 + $0x60] sm:$0xff]
        %v2203 = vld [vmem:[#allocation5 + $0x68] sm:$0xff]
        %v2204 = vld [vmem:[#allocation5 + $0x70] sm:$0xff]
        %v2205 = vld [vmem:[#allocation5 + $0x78] sm:$0xff]
        %v2206 = vld [vmem:[#allocation5 + $0x80] sm:$0xff]
        %v2207 = vld [vmem:[#allocation5 + $0x88] sm:$0xff]
        %v2208 = vld [vmem:[#allocation5 + $0x90] sm:$0xff]
        %v2209 = vld [vmem:[#allocation5 + $0x98] sm:$0xff]
        %v2210 = vld [vmem:[#allocation5 + $0xa0] sm:$0xff]
        %v2211 = vld [vmem:[#allocation5 + $0xa8] sm:$0xff]
        %v2212 = vld [vmem:[#allocation5 + $0xb0] sm:$0xff]
        %v2213 = vld [vmem:[#allocation5 + $0xb8] sm:$0xff]
        %v2214 = vld [vmem:[#allocation5 + $0xc0] sm:$0xff]
        %v2215 = vld [vmem:[#allocation5 + $0xc8] sm:$0xff]
        %v2216 = vld [vmem:[#allocation5 + $0xd0] sm:$0xff]
        %v2217 = vld [vmem:[#allocation5 + $0xd8] sm:$0xff]
        %v2218 = vld [vmem:[#allocation5 + $0xe0] sm:$0xff]
        %v2219 = vld [vmem:[#allocation5 + $0xe8] sm:$0xff]
        %v2220 = vld [vmem:[#allocation5 + $0xf0] sm:$0xff]
        %v2221 = vld [vmem:[#allocation5 + $0xf8] sm:$0xff]
        %v2222 = vld [vmem:[#allocation5 + $0x100] sm:$0xff]
        %v2223 = vld [vmem:[#allocation5 + $0x108] sm:$0xff]
        %v2224 = vld [vmem:[#allocation5 + $0x110] sm:$0xff]
        %v2225 = vld [vmem:[#allocation5 + $0x118] sm:$0xff]
        %v2226 = vld [vmem:[#allocation5 + $0x120] sm:$0xff]
        %v2227 = vld [vmem:[#allocation5 + $0x128] sm:$0xff]
        %v2228 = vld [vmem:[#allocation5 + $0x130] sm:$0xff]
        %v2229 = vld [vmem:[#allocation5 + $0x138] sm:$0xff]
        %v2230 = vld [vmem:[#allocation5 + $0x140] sm:$0xff]
        %v2231 = vld [vmem:[#allocation5 + $0x148] sm:$0xff]
        %v2232 = vld [vmem:[#allocation5 + $0x150] sm:$0xff]
        %v2233 = vld [vmem:[#allocation5 + $0x158] sm:$0xff]
        %v2234 = vld [vmem:[#allocation5 + $0x160] sm:$0xff]
        %v2235 = vld [vmem:[#allocation5 + $0x168] sm:$0xff]
        %v2236 = vld [vmem:[#allocation5 + $0x170] sm:$0xff]
        %v2237 = vld [vmem:[#allocation5 + $0x178] sm:$0xff]
        %v2238 = vld [vmem:[#allocation5 + $0x180] sm:$0xff]
        %v2239 = vld [vmem:[#allocation5 + $0x188] sm:$0xff]
        %v2240 = vld [vmem:[#allocation5 + $0x190] sm:$0xff]
        %v2241 = vld [vmem:[#allocation5 + $0x198] sm:$0xff]
        %v2242 = vld [vmem:[#allocation5 + $0x1a0] sm:$0xff]
        %v2243 = vld [vmem:[#allocation5 + $0x1a8] sm:$0xff]
        %v2244 = vld [vmem:[#allocation5 + $0x1b0] sm:$0xff]
        %v2245 = vld [vmem:[#allocation5 + $0x1b8] sm:$0xff]
        %v2246 = vld [vmem:[#allocation5 + $0x1c0] sm:$0xff]
        %v2247 = vld [vmem:[#allocation5 + $0x1c8] sm:$0xff]
        %v2248 = vld [vmem:[#allocation5 + $0x1d0] sm:$0xff]
        %v2249 = vld [vmem:[#allocation5 + $0x1d8] sm:$0xff]
        %v2250 = vld [vmem:[#allocation5 + $0x1e0] sm:$0xff]
        %v2251 = vld [vmem:[#allocation5 + $0x1e8] sm:$0xff]
        %v2252 = vld [vmem:[#allocation5 + $0x1f0] sm:$0xff]
        %v2253 = vld [vmem:[#allocation5 + $0x1f8] sm:$0xff]
        %v2254 = vld [vmem:[#allocation5 + $0x200] sm:$0xff]
        %v2255 = vld [vmem:[#allocation5 + $0x208] sm:$0xff]
        %v2256 = vld [vmem:[#allocation5 + $0x210] sm:$0xff]
        %v2257 = vld [vmem:[#allocation5 + $0x218] sm:$0xff]
        %v2258 = vld [vmem:[#allocation5 + $0x220] sm:$0xff]
        %v2259 = vld [vmem:[#allocation5 + $0x228] sm:$0xff]
        %v2260 = vld [vmem:[#allocation5 + $0x230] sm:$0xff]
        %v2261 = vld [vmem:[#allocation5 + $0x238] sm:$0xff]
        %v2262 = vld [vmem:[#allocation5 + $0x240] sm:$0xff]
        %v2263 = vld [vmem:[#allocation5 + $0x248] sm:$0xff]
        %v2264 = vld [vmem:[#allocation5 + $0x250] sm:$0xff]
        %v2265 = vld [vmem:[#allocation5 + $0x258] sm:$0xff]
        %v2266 = vld [vmem:[#allocation5 + $0x260] sm:$0xff]
        %v2267 = vld [vmem:[#allocation5 + $0x268] sm:$0xff]
        %v2268 = vld [vmem:[#allocation5 + $0x270] sm:$0xff]
        %v2269 = vld [vmem:[#allocation5 + $0x278] sm:$0xff]
        %v2270 = vld [vmem:[#allocation5 + $0x280] sm:$0xff]
        %v2271 = vld [vmem:[#allocation5 + $0x288] sm:$0xff]
        %v2272 = vld [vmem:[#allocation5 + $0x290] sm:$0xff]
        %v2273 = vld [vmem:[#allocation5 + $0x298] sm:$0xff]
        %v2274 = vld [vmem:[#allocation5 + $0x2a0] sm:$0xff]
        %v2275 = vld [vmem:[#allocation5 + $0x2a8] sm:$0xff]
        %v2276 = vld [vmem:[#allocation5 + $0x2b0] sm:$0xff]
        %v2277 = vld [vmem:[#allocation5 + $0x2b8] sm:$0xff]
        %v2278 = vld [vmem:[#allocation5 + $0x2c0] sm:$0xff]
        %v2279 = vld [vmem:[#allocation5 + $0x2c8] sm:$0xff]
        %v2280 = vld [vmem:[#allocation5 + $0x2d0] sm:$0xff]
        %v2281 = vld [vmem:[#allocation5 + $0x2d8] sm:$0xff]
        %v2282 = vld [vmem:[#allocation5 + $0x2e0] sm:$0xff]
        %v2283 = vld [vmem:[#allocation5 + $0x2e8] sm:$0xff]
        %v2284 = vld [vmem:[#allocation5 + $0x2f0] sm:$0xff]
        %v2285 = vld [vmem:[#allocation5 + $0x2f8] sm:$0xff]
        %v2286 = vld [vmem:[#allocation5 + $0x300] sm:$0xff]
        %v2287 = vld [vmem:[#allocation5 + $0x308] sm:$0xff]
        %v2288 = vld [vmem:[#allocation5 + $0x310] sm:$0xff]
        %v2289 = vld [vmem:[#allocation5 + $0x318] sm:$0xff]
        %v2290 = vld [vmem:[#allocation5 + $0x320] sm:$0xff]
        %v2291 = vld [vmem:[#allocation5 + $0x328] sm:$0xff]
        %v2292 = vld [vmem:[#allocation5 + $0x330] sm:$0xff]
        %v2293 = vld [vmem:[#allocation5 + $0x338] sm:$0xff]
        %v2294 = vld [vmem:[#allocation5 + $0x340] sm:$0xff]
        %v2295 = vld [vmem:[#allocation5 + $0x348] sm:$0xff]
        %v2296 = vld [vmem:[#allocation5 + $0x350] sm:$0xff]
        %v2297 = vld [vmem:[#allocation5 + $0x358] sm:$0xff]
        %v2298 = vld [vmem:[#allocation5 + $0x360] sm:$0xff]
        %v2299 = vld [vmem:[#allocation5 + $0x368] sm:$0xff]
        %v2300 = vld [vmem:[#allocation5 + $0x370] sm:$0xff]
        %v2301 = vld [vmem:[#allocation5 + $0x378] sm:$0xff]
        %v2302 = vld [vmem:[#allocation5 + $0x380] sm:$0xff]
        %v2303 = vld [vmem:[#allocation5 + $0x388] sm:$0xff]
        %v2304 = vld [vmem:[#allocation5 + $0x390] sm:$0xff]
        %v2305 = vld [vmem:[#allocation5 + $0x398] sm:$0xff]
        %v2306 = vld [vmem:[#allocation5 + $0x3a0] sm:$0xff]
        %v2307 = vld [vmem:[#allocation5 + $0x3a8] sm:$0xff]
        %v2308 = vld [vmem:[#allocation5 + $0x3b0] sm:$0xff]
        %v2309 = vld [vmem:[#allocation5 + $0x3b8] sm:$0xff]
        %v2310 = vld [vmem:[#allocation5 + $0x3c0] sm:$0xff]
        %v2311 = vld [vmem:[#allocation5 + $0x3c8] sm:$0xff]
        %v2312 = vld [vmem:[#allocation5 + $0x3d0] sm:$0xff]
        %v2313 = vld [vmem:[#allocation5 + $0x3d8] sm:$0xff]
        %v2314 = vld [vmem:[#allocation5 + $0x3e0] sm:$0xff]
        %v2315 = vld [vmem:[#allocation5 + $0x3e8] sm:$0xff]
        %v2316 = vld [vmem:[#allocation5 + $0x3f0] sm:$0xff]
        %v2317 = vld [vmem:[#allocation5 + $0x3f8] sm:$0xff]
        %v2318 = vld [vmem:[%s6] sm:$0xf]
        %v2320 = vlaneseq
        %v2321 = vshrl.u32 %v2320, 7
        %v2322 = vsub.s32 0, %v2321
        %v2323 = vrot.slane %v2318, %v2322
        %v2324 = vlaneseq
        %v2325 = vshrl.u32 %v2324, 7
        %v2326 = vsub.s32 1, %v2325
        %v2327 = vrot.slane %v2318, %v2326
        %v2328 = vlaneseq
        %v2329 = vshrl.u32 %v2328, 7
        %v2330 = vsub.s32 2, %v2329
        %v2331 = vrot.slane %v2318, %v2330
        %v2332 = vlaneseq
        %v2333 = vshrl.u32 %v2332, 7
        %v2334 = vsub.s32 3, %v2333
        %v2335 = vrot.slane %v2318, %v2334
        %v2468 = vunpack.c.l.b16 %v2190
        %v2469 = vunpack.c.h.b16 %v2190
        %v2470 = vunpack.c.l.b16 %v2191
        %v2471 = vunpack.c.h.b16 %v2191
        %v2472 = vunpack.c.l.b16 %v2192
        %v2473 = vunpack.c.h.b16 %v2192
        %v2474 = vunpack.c.l.b16 %v2193
        %v2475 = vunpack.c.h.b16 %v2193
        %v2476 = vunpack.c.l.b16 %v2194
        %v2477 = vunpack.c.h.b16 %v2194
        %v2478 = vunpack.c.l.b16 %v2195
        %v2479 = vunpack.c.h.b16 %v2195
        %v2480 = vunpack.c.l.b16 %v2196
        %v2481 = vunpack.c.h.b16 %v2196
        %v2482 = vunpack.c.l.b16 %v2197
        %v2483 = vunpack.c.h.b16 %v2197
        %v2484 = vunpack.c.l.b16 %v2198
        %v2485 = vunpack.c.h.b16 %v2198
        %v2486 = vunpack.c.l.b16 %v2199
        %v2487 = vunpack.c.h.b16 %v2199
        %v2488 = vunpack.c.l.b16 %v2200
        %v2489 = vunpack.c.h.b16 %v2200
        %v2490 = vunpack.c.l.b16 %v2201
        %v2491 = vunpack.c.h.b16 %v2201
        %v2492 = vunpack.c.l.b16 %v2202
        %v2493 = vunpack.c.h.b16 %v2202
        %v2494 = vunpack.c.l.b16 %v2203
        %v2495 = vunpack.c.h.b16 %v2203
        %v2496 = vunpack.c.l.b16 %v2204
        %v2497 = vunpack.c.h.b16 %v2204
        %v2498 = vunpack.c.l.b16 %v2205
        %v2499 = vunpack.c.h.b16 %v2205
        %v2500 = vunpack.c.l.b16 %v2206
        %v2501 = vunpack.c.h.b16 %v2206
        %v2502 = vunpack.c.l.b16 %v2207
        %v2503 = vunpack.c.h.b16 %v2207
        %v2504 = vunpack.c.l.b16 %v2208
        %v2505 = vunpack.c.h.b16 %v2208
        %v2506 = vunpack.c.l.b16 %v2209
        %v2507 = vunpack.c.h.b16 %v2209
        %v2508 = vunpack.c.l.b16 %v2210
        %v2509 = vunpack.c.h.b16 %v2210
        %v2510 = vunpack.c.l.b16 %v2211
        %v2511 = vunpack.c.h.b16 %v2211
        %v2512 = vunpack.c.l.b16 %v2212
        %v2513 = vunpack.c.h.b16 %v2212
        %v2514 = vunpack.c.l.b16 %v2213
        %v2515 = vunpack.c.h.b16 %v2213
        %v2516 = vunpack.c.l.b16 %v2214
        %v2517 = vunpack.c.h.b16 %v2214
        %v2518 = vunpack.c.l.b16 %v2215
        %v2519 = vunpack.c.h.b16 %v2215
        %v2520 = vunpack.c.l.b16 %v2216
        %v2521 = vunpack.c.h.b16 %v2216
        %v2522 = vunpack.c.l.b16 %v2217
        %v2523 = vunpack.c.h.b16 %v2217
        %v2524 = vunpack.c.l.b16 %v2218
        %v2525 = vunpack.c.h.b16 %v2218
        %v2526 = vunpack.c.l.b16 %v2219
        %v2527 = vunpack.c.h.b16 %v2219
        %v2528 = vunpack.c.l.b16 %v2220
        %v2529 = vunpack.c.h.b16 %v2220
        %v2530 = vunpack.c.l.b16 %v2221
        %v2531 = vunpack.c.h.b16 %v2221
        %v2532 = vunpack.c.l.b16 %v2222
        %v2533 = vunpack.c.h.b16 %v2222
        %v2534 = vunpack.c.l.b16 %v2223
        %v2535 = vunpack.c.h.b16 %v2223
        %v2536 = vunpack.c.l.b16 %v2224
        %v2537 = vunpack.c.h.b16 %v2224
        %v2538 = vunpack.c.l.b16 %v2225
        %v2539 = vunpack.c.h.b16 %v2225
        %v2540 = vunpack.c.l.b16 %v2226
        %v2541 = vunpack.c.h.b16 %v2226
        %v2542 = vunpack.c.l.b16 %v2227
        %v2543 = vunpack.c.h.b16 %v2227
        %v2544 = vunpack.c.l.b16 %v2228
        %v2545 = vunpack.c.h.b16 %v2228
        %v2546 = vunpack.c.l.b16 %v2229
        %v2547 = vunpack.c.h.b16 %v2229
        %v2548 = vunpack.c.l.b16 %v2230
        %v2549 = vunpack.c.h.b16 %v2230
        %v2550 = vunpack.c.l.b16 %v2231
        %v2551 = vunpack.c.h.b16 %v2231
        %v2552 = vunpack.c.l.b16 %v2232
        %v2553 = vunpack.c.h.b16 %v2232
        %v2554 = vunpack.c.l.b16 %v2233
        %v2555 = vunpack.c.h.b16 %v2233
        %v2556 = vunpack.c.l.b16 %v2234
        %v2557 = vunpack.c.h.b16 %v2234
        %v2558 = vunpack.c.l.b16 %v2235
        %v2559 = vunpack.c.h.b16 %v2235
        %v2560 = vunpack.c.l.b16 %v2236
        %v2561 = vunpack.c.h.b16 %v2236
        %v2562 = vunpack.c.l.b16 %v2237
        %v2563 = vunpack.c.h.b16 %v2237
        %v2564 = vunpack.c.l.b16 %v2238
        %v2565 = vunpack.c.h.b16 %v2238
        %v2566 = vunpack.c.l.b16 %v2239
        %v2567 = vunpack.c.h.b16 %v2239
        %v2568 = vunpack.c.l.b16 %v2240
        %v2569 = vunpack.c.h.b16 %v2240
        %v2570 = vunpack.c.l.b16 %v2241
        %v2571 = vunpack.c.h.b16 %v2241
        %v2572 = vunpack.c.l.b16 %v2242
        %v2573 = vunpack.c.h.b16 %v2242
        %v2574 = vunpack.c.l.b16 %v2243
        %v2575 = vunpack.c.h.b16 %v2243
        %v2576 = vunpack.c.l.b16 %v2244
        %v2577 = vunpack.c.h.b16 %v2244
        %v2578 = vunpack.c.l.b16 %v2245
        %v2579 = vunpack.c.h.b16 %v2245
        %v2580 = vunpack.c.l.b16 %v2246
        %v2581 = vunpack.c.h.b16 %v2246
        %v2582 = vunpack.c.l.b16 %v2247
        %v2583 = vunpack.c.h.b16 %v2247
        %v2584 = vunpack.c.l.b16 %v2248
        %v2585 = vunpack.c.h.b16 %v2248
        %v2586 = vunpack.c.l.b16 %v2249
        %v2587 = vunpack.c.h.b16 %v2249
        %v2588 = vunpack.c.l.b16 %v2250
        %v2589 = vunpack.c.h.b16 %v2250
        %v2590 = vunpack.c.l.b16 %v2251
        %v2591 = vunpack.c.h.b16 %v2251
        %v2592 = vunpack.c.l.b16 %v2252
        %v2593 = vunpack.c.h.b16 %v2252
        %v2594 = vunpack.c.l.b16 %v2253
        %v2595 = vunpack.c.h.b16 %v2253
        %v2596 = vunpack.c.l.b16 %v2254
        %v2597 = vunpack.c.h.b16 %v2254
        %v2598 = vunpack.c.l.b16 %v2255
        %v2599 = vunpack.c.h.b16 %v2255
        %v2600 = vunpack.c.l.b16 %v2256
        %v2601 = vunpack.c.h.b16 %v2256
        %v2602 = vunpack.c.l.b16 %v2257
        %v2603 = vunpack.c.h.b16 %v2257
        %v2604 = vunpack.c.l.b16 %v2258
        %v2605 = vunpack.c.h.b16 %v2258
        %v2606 = vunpack.c.l.b16 %v2259
        %v2607 = vunpack.c.h.b16 %v2259
        %v2608 = vunpack.c.l.b16 %v2260
        %v2609 = vunpack.c.h.b16 %v2260
        %v2610 = vunpack.c.l.b16 %v2261
        %v2611 = vunpack.c.h.b16 %v2261
        %v2612 = vunpack.c.l.b16 %v2262
        %v2613 = vunpack.c.h.b16 %v2262
        %v2614 = vunpack.c.l.b16 %v2263
        %v2615 = vunpack.c.h.b16 %v2263
        %v2616 = vunpack.c.l.b16 %v2264
        %v2617 = vunpack.c.h.b16 %v2264
        %v2618 = vunpack.c.l.b16 %v2265
        %v2619 = vunpack.c.h.b16 %v2265
        %v2620 = vunpack.c.l.b16 %v2266
        %v2621 = vunpack.c.h.b16 %v2266
        %v2622 = vunpack.c.l.b16 %v2267
        %v2623 = vunpack.c.h.b16 %v2267
        %v2624 = vunpack.c.l.b16 %v2268
        %v2625 = vunpack.c.h.b16 %v2268
        %v2626 = vunpack.c.l.b16 %v2269
        %v2627 = vunpack.c.h.b16 %v2269
        %v2628 = vunpack.c.l.b16 %v2270
        %v2629 = vunpack.c.h.b16 %v2270
        %v2630 = vunpack.c.l.b16 %v2271
        %v2631 = vunpack.c.h.b16 %v2271
        %v2632 = vunpack.c.l.b16 %v2272
        %v2633 = vunpack.c.h.b16 %v2272
        %v2634 = vunpack.c.l.b16 %v2273
        %v2635 = vunpack.c.h.b16 %v2273
        %v2636 = vunpack.c.l.b16 %v2274
        %v2637 = vunpack.c.h.b16 %v2274
        %v2638 = vunpack.c.l.b16 %v2275
        %v2639 = vunpack.c.h.b16 %v2275
        %v2640 = vunpack.c.l.b16 %v2276
        %v2641 = vunpack.c.h.b16 %v2276
        %v2642 = vunpack.c.l.b16 %v2277
        %v2643 = vunpack.c.h.b16 %v2277
        %v2644 = vunpack.c.l.b16 %v2278
        %v2645 = vunpack.c.h.b16 %v2278
        %v2646 = vunpack.c.l.b16 %v2279
        %v2647 = vunpack.c.h.b16 %v2279
        %v2648 = vunpack.c.l.b16 %v2280
        %v2649 = vunpack.c.h.b16 %v2280
        %v2650 = vunpack.c.l.b16 %v2281
        %v2651 = vunpack.c.h.b16 %v2281
        %v2652 = vunpack.c.l.b16 %v2282
        %v2653 = vunpack.c.h.b16 %v2282
        %v2654 = vunpack.c.l.b16 %v2283
        %v2655 = vunpack.c.h.b16 %v2283
        %v2656 = vunpack.c.l.b16 %v2284
        %v2657 = vunpack.c.h.b16 %v2284
        %v2658 = vunpack.c.l.b16 %v2285
        %v2659 = vunpack.c.h.b16 %v2285
        %v2660 = vunpack.c.l.b16 %v2286
        %v2661 = vunpack.c.h.b16 %v2286
        %v2662 = vunpack.c.l.b16 %v2287
        %v2663 = vunpack.c.h.b16 %v2287
        %v2664 = vunpack.c.l.b16 %v2288
        %v2665 = vunpack.c.h.b16 %v2288
        %v2666 = vunpack.c.l.b16 %v2289
        %v2667 = vunpack.c.h.b16 %v2289
        %v2668 = vunpack.c.l.b16 %v2290
        %v2669 = vunpack.c.h.b16 %v2290
        %v2670 = vunpack.c.l.b16 %v2291
        %v2671 = vunpack.c.h.b16 %v2291
        %v2672 = vunpack.c.l.b16 %v2292
        %v2673 = vunpack.c.h.b16 %v2292
        %v2674 = vunpack.c.l.b16 %v2293
        %v2675 = vunpack.c.h.b16 %v2293
        %v2676 = vunpack.c.l.b16 %v2294
        %v2677 = vunpack.c.h.b16 %v2294
        %v2678 = vunpack.c.l.b16 %v2295
        %v2679 = vunpack.c.h.b16 %v2295
        %v2680 = vunpack.c.l.b16 %v2296
        %v2681 = vunpack.c.h.b16 %v2296
        %v2682 = vunpack.c.l.b16 %v2297
        %v2683 = vunpack.c.h.b16 %v2297
        %v2684 = vunpack.c.l.b16 %v2298
        %v2685 = vunpack.c.h.b16 %v2298
        %v2686 = vunpack.c.l.b16 %v2299
        %v2687 = vunpack.c.h.b16 %v2299
        %v2688 = vunpack.c.l.b16 %v2300
        %v2689 = vunpack.c.h.b16 %v2300
        %v2690 = vunpack.c.l.b16 %v2301
        %v2691 = vunpack.c.h.b16 %v2301
        %v2692 = vunpack.c.l.b16 %v2302
        %v2693 = vunpack.c.h.b16 %v2302
        %v2694 = vunpack.c.l.b16 %v2303
        %v2695 = vunpack.c.h.b16 %v2303
        %v2696 = vunpack.c.l.b16 %v2304
        %v2697 = vunpack.c.h.b16 %v2304
        %v2698 = vunpack.c.l.b16 %v2305
        %v2699 = vunpack.c.h.b16 %v2305
        %v2700 = vunpack.c.l.b16 %v2306
        %v2701 = vunpack.c.h.b16 %v2306
        %v2702 = vunpack.c.l.b16 %v2307
        %v2703 = vunpack.c.h.b16 %v2307
        %v2704 = vunpack.c.l.b16 %v2308
        %v2705 = vunpack.c.h.b16 %v2308
        %v2706 = vunpack.c.l.b16 %v2309
        %v2707 = vunpack.c.h.b16 %v2309
        %v2708 = vunpack.c.l.b16 %v2310
        %v2709 = vunpack.c.h.b16 %v2310
        %v2710 = vunpack.c.l.b16 %v2311
        %v2711 = vunpack.c.h.b16 %v2311
        %v2712 = vunpack.c.l.b16 %v2312
        %v2713 = vunpack.c.h.b16 %v2312
        %v2714 = vunpack.c.l.b16 %v2313
        %v2715 = vunpack.c.h.b16 %v2313
        %v2716 = vunpack.c.l.b16 %v2314
        %v2717 = vunpack.c.h.b16 %v2314
        %v2718 = vunpack.c.l.b16 %v2315
        %v2719 = vunpack.c.h.b16 %v2315
        %v2720 = vunpack.c.l.b16 %v2316
        %v2721 = vunpack.c.h.b16 %v2316
        %v2722 = vunpack.c.l.b16 %v2317
        %v2723 = vunpack.c.h.b16 %v2317
        %v2724 = vpack.c.b16 %v2472, %v2468
        %v2725 = vpack.c.b16 %v2473, %v2469
        %v2726 = vpack.c.b16 %v2474, %v2470
        %v2727 = vpack.c.b16 %v2475, %v2471
        %v2728 = vpack.c.b16 %v2480, %v2476
        %v2729 = vpack.c.b16 %v2481, %v2477
        %v2730 = vpack.c.b16 %v2482, %v2478
        %v2731 = vpack.c.b16 %v2483, %v2479
        %v2732 = vpack.c.b16 %v2488, %v2484
        %v2733 = vpack.c.b16 %v2489, %v2485
        %v2734 = vpack.c.b16 %v2490, %v2486
        %v2735 = vpack.c.b16 %v2491, %v2487
        %v2736 = vpack.c.b16 %v2496, %v2492
        %v2737 = vpack.c.b16 %v2497, %v2493
        %v2738 = vpack.c.b16 %v2498, %v2494
        %v2739 = vpack.c.b16 %v2499, %v2495
        %v2740 = vpack.c.b16 %v2504, %v2500
        %v2741 = vpack.c.b16 %v2505, %v2501
        %v2742 = vpack.c.b16 %v2506, %v2502
        %v2743 = vpack.c.b16 %v2507, %v2503
        %v2744 = vpack.c.b16 %v2512, %v2508
        %v2745 = vpack.c.b16 %v2513, %v2509
        %v2746 = vpack.c.b16 %v2514, %v2510
        %v2747 = vpack.c.b16 %v2515, %v2511
        %v2748 = vpack.c.b16 %v2520, %v2516
        %v2749 = vpack.c.b16 %v2521, %v2517
        %v2750 = vpack.c.b16 %v2522, %v2518
        %v2751 = vpack.c.b16 %v2523, %v2519
        %v2752 = vpack.c.b16 %v2528, %v2524
        %v2753 = vpack.c.b16 %v2529, %v2525
        %v2754 = vpack.c.b16 %v2530, %v2526
        %v2755 = vpack.c.b16 %v2531, %v2527
        %v2756 = vpack.c.b16 %v2536, %v2532
        %v2757 = vpack.c.b16 %v2537, %v2533
        %v2758 = vpack.c.b16 %v2538, %v2534
        %v2759 = vpack.c.b16 %v2539, %v2535
        %v2760 = vpack.c.b16 %v2544, %v2540
        %v2761 = vpack.c.b16 %v2545, %v2541
        %v2762 = vpack.c.b16 %v2546, %v2542
        %v2763 = vpack.c.b16 %v2547, %v2543
        %v2764 = vpack.c.b16 %v2552, %v2548
        %v2765 = vpack.c.b16 %v2553, %v2549
        %v2766 = vpack.c.b16 %v2554, %v2550
        %v2767 = vpack.c.b16 %v2555, %v2551
        %v2768 = vpack.c.b16 %v2560, %v2556
        %v2769 = vpack.c.b16 %v2561, %v2557
        %v2770 = vpack.c.b16 %v2562, %v2558
        %v2771 = vpack.c.b16 %v2563, %v2559
        %v2772 = vpack.c.b16 %v2568, %v2564
        %v2773 = vpack.c.b16 %v2569, %v2565
        %v2774 = vpack.c.b16 %v2570, %v2566
        %v2775 = vpack.c.b16 %v2571, %v2567
        %v2776 = vpack.c.b16 %v2576, %v2572
        %v2777 = vpack.c.b16 %v2577, %v2573
        %v2778 = vpack.c.b16 %v2578, %v2574
        %v2779 = vpack.c.b16 %v2579, %v2575
        %v2780 = vpack.c.b16 %v2584, %v2580
        %v2781 = vpack.c.b16 %v2585, %v2581
        %v2782 = vpack.c.b16 %v2586, %v2582
        %v2783 = vpack.c.b16 %v2587, %v2583
        %v2784 = vpack.c.b16 %v2592, %v2588
        %v2785 = vpack.c.b16 %v2593, %v2589
        %v2786 = vpack.c.b16 %v2594, %v2590
        %v2787 = vpack.c.b16 %v2595, %v2591
        %v2788 = vpack.c.b16 %v2600, %v2596
        %v2789 = vpack.c.b16 %v2601, %v2597
        %v2790 = vpack.c.b16 %v2602, %v2598
        %v2791 = vpack.c.b16 %v2603, %v2599
        %v2792 = vpack.c.b16 %v2608, %v2604
        %v2793 = vpack.c.b16 %v2609, %v2605
        %v2794 = vpack.c.b16 %v2610, %v2606
        %v2795 = vpack.c.b16 %v2611, %v2607
        %v2796 = vpack.c.b16 %v2616, %v2612
        %v2797 = vpack.c.b16 %v2617, %v2613
        %v2798 = vpack.c.b16 %v2618, %v2614
        %v2799 = vpack.c.b16 %v2619, %v2615
        %v2800 = vpack.c.b16 %v2624, %v2620
        %v2801 = vpack.c.b16 %v2625, %v2621
        %v2802 = vpack.c.b16 %v2626, %v2622
        %v2803 = vpack.c.b16 %v2627, %v2623
        %v2804 = vpack.c.b16 %v2632, %v2628
        %v2805 = vpack.c.b16 %v2633, %v2629
        %v2806 = vpack.c.b16 %v2634, %v2630
        %v2807 = vpack.c.b16 %v2635, %v2631
        %v2808 = vpack.c.b16 %v2640, %v2636
        %v2809 = vpack.c.b16 %v2641, %v2637
        %v2810 = vpack.c.b16 %v2642, %v2638
        %v2811 = vpack.c.b16 %v2643, %v2639
        %v2812 = vpack.c.b16 %v2648, %v2644
        %v2813 = vpack.c.b16 %v2649, %v2645
        %v2814 = vpack.c.b16 %v2650, %v2646
        %v2815 = vpack.c.b16 %v2651, %v2647
        %v2816 = vpack.c.b16 %v2656, %v2652
        %v2817 = vpack.c.b16 %v2657, %v2653
        %v2818 = vpack.c.b16 %v2658, %v2654
        %v2819 = vpack.c.b16 %v2659, %v2655
        %v2820 = vpack.c.b16 %v2664, %v2660
        %v2821 = vpack.c.b16 %v2665, %v2661
        %v2822 = vpack.c.b16 %v2666, %v2662
        %v2823 = vpack.c.b16 %v2667, %v2663
        %v2824 = vpack.c.b16 %v2672, %v2668
        %v2825 = vpack.c.b16 %v2673, %v2669
        %v2826 = vpack.c.b16 %v2674, %v2670
        %v2827 = vpack.c.b16 %v2675, %v2671
        %v2828 = vpack.c.b16 %v2680, %v2676
        %v2829 = vpack.c.b16 %v2681, %v2677
        %v2830 = vpack.c.b16 %v2682, %v2678
        %v2831 = vpack.c.b16 %v2683, %v2679
        %v2832 = vpack.c.b16 %v2688, %v2684
        %v2833 = vpack.c.b16 %v2689, %v2685
        %v2834 = vpack.c.b16 %v2690, %v2686
        %v2835 = vpack.c.b16 %v2691, %v2687
        %v2836 = vpack.c.b16 %v2696, %v2692
        %v2837 = vpack.c.b16 %v2697, %v2693
        %v2838 = vpack.c.b16 %v2698, %v2694
        %v2839 = vpack.c.b16 %v2699, %v2695
        %v2840 = vpack.c.b16 %v2704, %v2700
        %v2841 = vpack.c.b16 %v2705, %v2701
        %v2842 = vpack.c.b16 %v2706, %v2702
        %v2843 = vpack.c.b16 %v2707, %v2703
        %v2844 = vpack.c.b16 %v2712, %v2708
        %v2845 = vpack.c.b16 %v2713, %v2709
        %v2846 = vpack.c.b16 %v2714, %v2710
        %v2847 = vpack.c.b16 %v2715, %v2711
        %v2848 = vpack.c.b16 %v2720, %v2716
        %v2849 = vpack.c.b16 %v2721, %v2717
        %v2850 = vpack.c.b16 %v2722, %v2718
        %v2851 = vpack.c.b16 %v2723, %v2719
        %2980 = vmatprep.subr.bf16.mxu0 %v2725
        %2981 = vmatpush1.bf16.msra.mxu0 %v2724
        %2982 = vmatprep.subr.bf16.mxu0 %v2729
        %2983 = vmatpush1.bf16.msra.mxu0 %v2728
        %2984 = vmatprep.subr.bf16.mxu0 %v2733
        %2985 = vmatpush1.bf16.msra.mxu0 %v2732
        %2986 = vmatprep.subr.bf16.mxu0 %v2737
        %2987 = vmatpush1.bf16.msra.mxu0 %v2736
        %2988 = vmatprep.subr.bf16.mxu0 %v2741
        %2989 = vmatpush1.bf16.msra.mxu0 %v2740
        %2990 = vmatprep.subr.bf16.mxu0 %v2745
        %2991 = vmatpush1.bf16.msra.mxu0 %v2744
        %2992 = vmatprep.subr.bf16.mxu0 %v2749
        %2993 = vmatpush1.bf16.msra.mxu0 %v2748
        %2994 = vmatprep.subr.bf16.mxu0 %v2753
        %2995 = vmatpush1.bf16.msra.mxu0 %v2752
        %2996 = vmatprep.subr.bf16.mxu0 %v2757
        %2997 = vmatpush1.bf16.msra.mxu0 %v2756
        %2998 = vmatprep.subr.bf16.mxu0 %v2761
        %2999 = vmatpush1.bf16.msra.mxu0 %v2760
        %3000 = vmatprep.subr.bf16.mxu0 %v2765
        %3001 = vmatpush1.bf16.msra.mxu0 %v2764
        %3002 = vmatprep.subr.bf16.mxu0 %v2769
        %3003 = vmatpush1.bf16.msra.mxu0 %v2768
        %3004 = vmatprep.subr.bf16.mxu0 %v2773
        %3005 = vmatpush1.bf16.msra.mxu0 %v2772
        %3006 = vmatprep.subr.bf16.mxu0 %v2777
        %3007 = vmatpush1.bf16.msra.mxu0 %v2776
        %3008 = vmatprep.subr.bf16.mxu0 %v2781
        %3009 = vmatpush1.bf16.msra.mxu0 %v2780
        %3010 = vmatprep.subr.bf16.mxu0 %v2785
        %3011 = vmatpush1.bf16.msra.mxu0 %v2784
        %3012 = vmatprep.mubr.bf16.mxu0 %v2159
        %3013 = vmatmul.mubr.bf16.gmra.mrb[0].mxu0 %v2158
        %v3014 = vpop.f32.mrb[0].mxu0
        %v3015 = vadd.f32 %v2323, %v3014
        %v3016 = vpop.f32.mrb[0].mxu0
        %v3017 = vadd.f32 %v2327, %v3016
        %v3018 = vpop.f32.mrb[0].mxu0
        %v3019 = vadd.f32 %v2323, %v3018
        %v3020 = vpop.f32.mrb[0].mxu0
        %v3021 = vadd.f32 %v2327, %v3020
        %3022 = vmatprep.mubr.bf16.mxu0 %v2163
        %3023 = vmatmul.mubr.bf16.gmra.mrb[0].mxu0 %v2162
        %v3024 = vpop.f32.mrb[0].mxu0
        %v3025 = vadd.f32 %v2323, %v3024
        %v3026 = vpop.f32.mrb[0].mxu0
        %v3027 = vadd.f32 %v2327, %v3026
        %v3028 = vpop.f32.mrb[0].mxu0
        %v3029 = vadd.f32 %v2323, %v3028
        %v3030 = vpop.f32.mrb[0].mxu0
        %v3031 = vadd.f32 %v2327, %v3030
        %3032 = vmatprep.mubr.bf16.mxu0 %v2167
        %3033 = vmatmul.mubr.bf16.gmra.mrb[0].mxu0 %v2166
        %v3034 = vpop.f32.mrb[0].mxu0
        %v3035 = vadd.f32 %v2323, %v3034
        %v3036 = vpop.f32.mrb[0].mxu0
        %v3037 = vadd.f32 %v2327, %v3036
        %v3038 = vpop.f32.mrb[0].mxu0
        %v3039 = vadd.f32 %v2323, %v3038
        %v3040 = vpop.f32.mrb[0].mxu0
        %v3041 = vadd.f32 %v2327, %v3040
        %3042 = vmatprep.mubr.bf16.mxu0 %v2171
        %3043 = vmatmul.mubr.bf16.gmra.mrb[0].mxu0 %v2170
        %v3044 = vpop.f32.mrb[0].mxu0
        %v3045 = vadd.f32 %v2323, %v3044
        %v3046 = vpop.f32.mrb[0].mxu0
        %v3047 = vadd.f32 %v2327, %v3046
        %v3048 = vpop.f32.mrb[0].mxu0
        %v3049 = vadd.f32 %v2323, %v3048
        %v3050 = vpop.f32.mrb[0].mxu0
        %v3051 = vadd.f32 %v2327, %v3050
        %3052 = vmatprep.mubr.bf16.mxu0 %v2175
        %3053 = vmatmul.mubr.bf16.gmra.mrb[0].mxu0 %v2174
        %v3054 = vpop.f32.mrb[0].mxu0
        %v3055 = vadd.f32 %v2323, %v3054
        %v3056 = vpop.f32.mrb[0].mxu0
        %v3057 = vadd.f32 %v2327, %v3056
        %v3058 = vpop.f32.mrb[0].mxu0
        %v3059 = vadd.f32 %v2323, %v3058
        %v3060 = vpop.f32.mrb[0].mxu0
        %v3061 = vadd.f32 %v2327, %v3060
        %3062 = vmatprep.mubr.bf16.mxu0 %v2179
        %3063 = vmatmul.mubr.bf16.gmra.mrb[0].mxu0 %v2178
        %v3064 = vpop.f32.mrb[0].mxu0
        %v3065 = vadd.f32 %v2323, %v3064
        %v3066 = vpop.f32.mrb[0].mxu0
        %v3067 = vadd.f32 %v2327, %v3066
        %v3068 = vpop.f32.mrb[0].mxu0
        %v3069 = vadd.f32 %v2323, %v3068
        %v3070 = vpop.f32.mrb[0].mxu0
        %v3071 = vadd.f32 %v2327, %v3070
        %3072 = vmatprep.mubr.bf16.mxu0 %v2183
        %3073 = vmatmul.mubr.bf16.gmra.mrb[0].mxu0 %v2182
        %v3074 = vpop.f32.mrb[0].mxu0
        %v3075 = vadd.f32 %v2323, %v3074
        %v3076 = vpop.f32.mrb[0].mxu0
        %v3077 = vadd.f32 %v2327, %v3076
        %v3078 = vpop.f32.mrb[0].mxu0
        %v3079 = vadd.f32 %v2323, %v3078
        %v3080 = vpop.f32.mrb[0].mxu0
        %v3081 = vadd.f32 %v2327, %v3080
        %3082 = vmatprep.mubr.bf16.mxu0 %v2187
        %3083 = vmatmul.mubr.bf16.gmra.mrb[0].mxu0 %v2186
        %v3084 = vpop.f32.mrb[0].mxu0
        %v3085 = vadd.f32 %v2323, %v3084
        %v3086 = vpop.f32.mrb[0].mxu0
        %v3087 = vadd.f32 %v2327, %v3086
        %v3088 = vpop.f32.mrb[0].mxu0
        %v3089 = vadd.f32 %v2323, %v3088
        %v3090 = vpop.f32.mrb[0].mxu0
        %v3091 = vadd.f32 %v2327, %v3090
        %3092 = vdwg.mxu0
        %3093 = vmatprep.subr.bf16.mxu0 %v2789
        %3094 = vmatpush1.bf16.msra.mxu0 %v2788
        %3095 = vmatprep.subr.bf16.mxu0 %v2793
        %3096 = vmatpush1.bf16.msra.mxu0 %v2792
        %3097 = vmatprep.subr.bf16.mxu0 %v2797
        %3098 = vmatpush1.bf16.msra.mxu0 %v2796
        %3099 = vmatprep.subr.bf16.mxu0 %v2801
        %3100 = vmatpush1.bf16.msra.mxu0 %v2800
        %3101 = vmatprep.subr.bf16.mxu0 %v2805
        %3102 = vmatpush1.bf16.msra.mxu0 %v2804
        %3103 = vmatprep.subr.bf16.mxu0 %v2809
        %3104 = vmatpush1.bf16.msra.mxu0 %v2808
        %3105 = vmatprep.subr.bf16.mxu0 %v2813
        %3106 = vmatpush1.bf16.msra.mxu0 %v2812
        %3107 = vmatprep.subr.bf16.mxu0 %v2817
        %3108 = vmatpush1.bf16.msra.mxu0 %v2816
        %3109 = vmatprep.subr.bf16.mxu0 %v2821
        %3110 = vmatpush1.bf16.msra.mxu0 %v2820
        %3111 = vmatprep.subr.bf16.mxu0 %v2825
        %3112 = vmatpush1.bf16.msra.mxu0 %v2824
        %3113 = vmatprep.subr.bf16.mxu0 %v2829
        %3114 = vmatpush1.bf16.msra.mxu0 %v2828
        %3115 = vmatprep.subr.bf16.mxu0 %v2833
        %3116 = vmatpush1.bf16.msra.mxu0 %v2832
        %3117 = vmatprep.subr.bf16.mxu0 %v2837
        %3118 = vmatpush1.bf16.msra.mxu0 %v2836
        %3119 = vmatprep.subr.bf16.mxu0 %v2841
        %3120 = vmatpush1.bf16.msra.mxu0 %v2840
        %3121 = vmatprep.subr.bf16.mxu0 %v2845
        %3122 = vmatpush1.bf16.msra.mxu0 %v2844
        %3123 = vmatprep.subr.bf16.mxu0 %v2849
        %3124 = vmatpush1.bf16.msra.mxu0 %v2848
        %3125 = vmatprep.mubr.bf16.mxu0 %v2161
        %3126 = vmatmul.mubr.bf16.gmra.mrb[0].mxu0 %v2160
        %v3127 = vpop.f32.mrb[0].mxu0
        %v3128 = vadd.f32 %v3015, %v3127
        %v3129 = vpop.f32.mrb[0].mxu0
        %v3130 = vadd.f32 %v3017, %v3129
        %v3131 = vpop.f32.mrb[0].mxu0
        %v3132 = vadd.f32 %v3019, %v3131
        %v3133 = vpop.f32.mrb[0].mxu0
        %v3134 = vadd.f32 %v3021, %v3133
        %3135 = vmatprep.mubr.bf16.mxu0 %v2165
        %3136 = vmatmul.mubr.bf16.gmra.mrb[0].mxu0 %v2164
        %v3137 = vpop.f32.mrb[0].mxu0
        %v3138 = vadd.f32 %v3025, %v3137
        %v3139 = vpop.f32.mrb[0].mxu0
        %v3140 = vadd.f32 %v3027, %v3139
        %v3141 = vpop.f32.mrb[0].mxu0
        %v3142 = vadd.f32 %v3029, %v3141
        %v3143 = vpop.f32.mrb[0].mxu0
        %v3144 = vadd.f32 %v3031, %v3143
        %3145 = vmatprep.mubr.bf16.mxu0 %v2169
        %3146 = vmatmul.mubr.bf16.gmra.mrb[0].mxu0 %v2168
        %v3147 = vpop.f32.mrb[0].mxu0
        %v3148 = vadd.f32 %v3035, %v3147
        %v3149 = vpop.f32.mrb[0].mxu0
        %v3150 = vadd.f32 %v3037, %v3149
        %v3151 = vpop.f32.mrb[0].mxu0
        %v3152 = vadd.f32 %v3039, %v3151
        %v3153 = vpop.f32.mrb[0].mxu0
        %v3154 = vadd.f32 %v3041, %v3153
        %3155 = vmatprep.mubr.bf16.mxu0 %v2173
        %3156 = vmatmul.mubr.bf16.gmra.mrb[0].mxu0 %v2172
        %v3157 = vpop.f32.mrb[0].mxu0
        %v3158 = vadd.f32 %v3045, %v3157
        %v3159 = vpop.f32.mrb[0].mxu0
        %v3160 = vadd.f32 %v3047, %v3159
        %v3161 = vpop.f32.mrb[0].mxu0
        %v3162 = vadd.f32 %v3049, %v3161
        %v3163 = vpop.f32.mrb[0].mxu0
        %v3164 = vadd.f32 %v3051, %v3163
        %3165 = vmatprep.mubr.bf16.mxu0 %v2177
        %3166 = vmatmul.mubr.bf16.gmra.mrb[0].mxu0 %v2176
        %v3167 = vpop.f32.mrb[0].mxu0
        %v3168 = vadd.f32 %v3055, %v3167
        %v3169 = vpop.f32.mrb[0].mxu0
        %v3170 = vadd.f32 %v3057, %v3169
        %v3171 = vpop.f32.mrb[0].mxu0
        %v3172 = vadd.f32 %v3059, %v3171
        %v3173 = vpop.f32.mrb[0].mxu0
        %v3174 = vadd.f32 %v3061, %v3173
        %3175 = vmatprep.mubr.bf16.mxu0 %v2181
        %3176 = vmatmul.mubr.bf16.gmra.mrb[0].mxu0 %v2180
        %v3177 = vpop.f32.mrb[0].mxu0
        %v3178 = vadd.f32 %v3065, %v3177
        %v3179 = vpop.f32.mrb[0].mxu0
        %v3180 = vadd.f32 %v3067, %v3179
        %v3181 = vpop.f32.mrb[0].mxu0
        %v3182 = vadd.f32 %v3069, %v3181
        %v3183 = vpop.f32.mrb[0].mxu0
        %v3184 = vadd.f32 %v3071, %v3183
        %3185 = vmatprep.mubr.bf16.mxu0 %v2185
        %3186 = vmatmul.mubr.bf16.gmra.mrb[0].mxu0 %v2184
        %v3187 = vpop.f32.mrb[0].mxu0
        %v3188 = vadd.f32 %v3075, %v3187
        %v3189 = vpop.f32.mrb[0].mxu0
        %v3190 = vadd.f32 %v3077, %v3189
        %v3191 = vpop.f32.mrb[0].mxu0
        %v3192 = vadd.f32 %v3079, %v3191
        %v3193 = vpop.f32.mrb[0].mxu0
        %v3194 = vadd.f32 %v3081, %v3193
        %3195 = vmatprep.mubr.bf16.mxu0 %v2189
        %3196 = vmatmul.mubr.bf16.gmra.mrb[0].mxu0 %v2188
        %v3197 = vpop.f32.mrb[0].mxu0
        %v3198 = vadd.f32 %v3085, %v3197
        %v3199 = vpop.f32.mrb[0].mxu0
        %v3200 = vadd.f32 %v3087, %v3199
        %v3201 = vpop.f32.mrb[0].mxu0
        %v3202 = vadd.f32 %v3089, %v3201
        %v3203 = vpop.f32.mrb[0].mxu0
        %v3204 = vadd.f32 %v3091, %v3203
        %3205 = vdwg.mxu0
        %3206 = vmatprep.subr.bf16.mxu0 %v2727
        %3207 = vmatpush1.bf16.msra.mxu0 %v2726
        %3208 = vmatprep.subr.bf16.mxu0 %v2731
        %3209 = vmatpush1.bf16.msra.mxu0 %v2730
        %3210 = vmatprep.subr.bf16.mxu0 %v2735
        %3211 = vmatpush1.bf16.msra.mxu0 %v2734
        %3212 = vmatprep.subr.bf16.mxu0 %v2739
        %3213 = vmatpush1.bf16.msra.mxu0 %v2738
        %3214 = vmatprep.subr.bf16.mxu0 %v2743
        %3215 = vmatpush1.bf16.msra.mxu0 %v2742
        %3216 = vmatprep.subr.bf16.mxu0 %v2747
        %3217 = vmatpush1.bf16.msra.mxu0 %v2746
        %3218 = vmatprep.subr.bf16.mxu0 %v2751
        %3219 = vmatpush1.bf16.msra.mxu0 %v2750
        %3220 = vmatprep.subr.bf16.mxu0 %v2755
        %3221 = vmatpush1.bf16.msra.mxu0 %v2754
        %3222 = vmatprep.subr.bf16.mxu0 %v2759
        %3223 = vmatpush1.bf16.msra.mxu0 %v2758
        %3224 = vmatprep.subr.bf16.mxu0 %v2763
        %3225 = vmatpush1.bf16.msra.mxu0 %v2762
        %3226 = vmatprep.subr.bf16.mxu0 %v2767
        %3227 = vmatpush1.bf16.msra.mxu0 %v2766
        %3228 = vmatprep.subr.bf16.mxu0 %v2771
        %3229 = vmatpush1.bf16.msra.mxu0 %v2770
        %3230 = vmatprep.subr.bf16.mxu0 %v2775
        %3231 = vmatpush1.bf16.msra.mxu0 %v2774
        %3232 = vmatprep.subr.bf16.mxu0 %v2779
        %3233 = vmatpush1.bf16.msra.mxu0 %v2778
        %3234 = vmatprep.subr.bf16.mxu0 %v2783
        %3235 = vmatpush1.bf16.msra.mxu0 %v2782
        %3236 = vmatprep.subr.bf16.mxu0 %v2787
        %3237 = vmatpush1.bf16.msra.mxu0 %v2786
        %3238 = vmatprep.mubr.bf16.mxu0 %v2159
        %3239 = vmatmul.mubr.bf16.gmra.mrb[0].mxu0 %v2158
        %v3240 = vpop.f32.mrb[0].mxu0
        %v3241 = vadd.f32 %v2331, %v3240
        %v3242 = vpop.f32.mrb[0].mxu0
        %v3243 = vadd.f32 %v2335, %v3242
        %v3244 = vpop.f32.mrb[0].mxu0
        %v3245 = vadd.f32 %v2331, %v3244
        %v3246 = vpop.f32.mrb[0].mxu0
        %v3247 = vadd.f32 %v2335, %v3246
        %3248 = vmatprep.mubr.bf16.mxu0 %v2163
        %3249 = vmatmul.mubr.bf16.gmra.mrb[0].mxu0 %v2162
        %v3250 = vpop.f32.mrb[0].mxu0
        %v3251 = vadd.f32 %v2331, %v3250
        %v3252 = vpop.f32.mrb[0].mxu0
        %v3253 = vadd.f32 %v2335, %v3252
        %v3254 = vpop.f32.mrb[0].mxu0
        %v3255 = vadd.f32 %v2331, %v3254
        %v3256 = vpop.f32.mrb[0].mxu0
        %v3257 = vadd.f32 %v2335, %v3256
        %3258 = vmatprep.mubr.bf16.mxu0 %v2167
        %3259 = vmatmul.mubr.bf16.gmra.mrb[0].mxu0 %v2166
        %v3260 = vpop.f32.mrb[0].mxu0
        %v3261 = vadd.f32 %v2331, %v3260
        %v3262 = vpop.f32.mrb[0].mxu0
        %v3263 = vadd.f32 %v2335, %v3262
        %v3264 = vpop.f32.mrb[0].mxu0
        %v3265 = vadd.f32 %v2331, %v3264
        %v3266 = vpop.f32.mrb[0].mxu0
        %v3267 = vadd.f32 %v2335, %v3266
        %3268 = vmatprep.mubr.bf16.mxu0 %v2171
        %3269 = vmatmul.mubr.bf16.gmra.mrb[0].mxu0 %v2170
        %v3270 = vpop.f32.mrb[0].mxu0
        %v3271 = vadd.f32 %v2331, %v3270
        %v3272 = vpop.f32.mrb[0].mxu0
        %v3273 = vadd.f32 %v2335, %v3272
        %v3274 = vpop.f32.mrb[0].mxu0
        %v3275 = vadd.f32 %v2331, %v3274
        %v3276 = vpop.f32.mrb[0].mxu0
        %v3277 = vadd.f32 %v2335, %v3276
        %3278 = vmatprep.mubr.bf16.mxu0 %v2175
        %3279 = vmatmul.mubr.bf16.gmra.mrb[0].mxu0 %v2174
        %v3280 = vpop.f32.mrb[0].mxu0
        %v3281 = vadd.f32 %v2331, %v3280
        %v3282 = vpop.f32.mrb[0].mxu0
        %v3283 = vadd.f32 %v2335, %v3282
        %v3284 = vpop.f32.mrb[0].mxu0
        %v3285 = vadd.f32 %v2331, %v3284
        %v3286 = vpop.f32.mrb[0].mxu0
        %v3287 = vadd.f32 %v2335, %v3286
        %3288 = vmatprep.mubr.bf16.mxu0 %v2179
        %3289 = vmatmul.mubr.bf16.gmra.mrb[0].mxu0 %v2178
        %v3290 = vpop.f32.mrb[0].mxu0
        %v3291 = vadd.f32 %v2331, %v3290
        %v3292 = vpop.f32.mrb[0].mxu0
        %v3293 = vadd.f32 %v2335, %v3292
        %v3294 = vpop.f32.mrb[0].mxu0
        %v3295 = vadd.f32 %v2331, %v3294
        %v3296 = vpop.f32.mrb[0].mxu0
        %v3297 = vadd.f32 %v2335, %v3296
        %3298 = vmatprep.mubr.bf16.mxu0 %v2183
        %3299 = vmatmul.mubr.bf16.gmra.mrb[0].mxu0 %v2182
        %v3300 = vpop.f32.mrb[0].mxu0
        %v3301 = vadd.f32 %v2331, %v3300
        %v3302 = vpop.f32.mrb[0].mxu0
        %v3303 = vadd.f32 %v2335, %v3302
        %v3304 = vpop.f32.mrb[0].mxu0
        %v3305 = vadd.f32 %v2331, %v3304
        %v3306 = vpop.f32.mrb[0].mxu0
        %v3307 = vadd.f32 %v2335, %v3306
        %3308 = vmatprep.mubr.bf16.mxu0 %v2187
        %3309 = vmatmul.mubr.bf16.gmra.mrb[0].mxu0 %v2186
        %v3310 = vpop.f32.mrb[0].mxu0
        %v3311 = vadd.f32 %v2331, %v3310
        %v3312 = vpop.f32.mrb[0].mxu0
        %v3313 = vadd.f32 %v2335, %v3312
        %v3314 = vpop.f32.mrb[0].mxu0
        %v3315 = vadd.f32 %v2331, %v3314
        %v3316 = vpop.f32.mrb[0].mxu0
        %v3317 = vadd.f32 %v2335, %v3316
        %3318 = vdwg.mxu0
        %3319 = vmatprep.subr.bf16.mxu0 %v2791
        %3320 = vmatpush1.bf16.msra.mxu0 %v2790
        %3321 = vmatprep.subr.bf16.mxu0 %v2795
        %3322 = vmatpush1.bf16.msra.mxu0 %v2794
        %3323 = vmatprep.subr.bf16.mxu0 %v2799
        %3324 = vmatpush1.bf16.msra.mxu0 %v2798
        %3325 = vmatprep.subr.bf16.mxu0 %v2803
        %3326 = vmatpush1.bf16.msra.mxu0 %v2802
        %3327 = vmatprep.subr.bf16.mxu0 %v2807
        %3328 = vmatpush1.bf16.msra.mxu0 %v2806
        %3329 = vmatprep.subr.bf16.mxu0 %v2811
        %3330 = vmatpush1.bf16.msra.mxu0 %v2810
        %3331 = vmatprep.subr.bf16.mxu0 %v2815
        %3332 = vmatpush1.bf16.msra.mxu0 %v2814
        %3333 = vmatprep.subr.bf16.mxu0 %v2819
        %3334 = vmatpush1.bf16.msra.mxu0 %v2818
        %3335 = vmatprep.subr.bf16.mxu0 %v2823
        %3336 = vmatpush1.bf16.msra.mxu0 %v2822
        %3337 = vmatprep.subr.bf16.mxu0 %v2827
        %3338 = vmatpush1.bf16.msra.mxu0 %v2826
        %3339 = vmatprep.subr.bf16.mxu0 %v2831
        %3340 = vmatpush1.bf16.msra.mxu0 %v2830
        %3341 = vmatprep.subr.bf16.mxu0 %v2835
        %3342 = vmatpush1.bf16.msra.mxu0 %v2834
        %3343 = vmatprep.subr.bf16.mxu0 %v2839
        %3344 = vmatpush1.bf16.msra.mxu0 %v2838
        %3345 = vmatprep.subr.bf16.mxu0 %v2843
        %3346 = vmatpush1.bf16.msra.mxu0 %v2842
        %3347 = vmatprep.subr.bf16.mxu0 %v2847
        %3348 = vmatpush1.bf16.msra.mxu0 %v2846
        %3349 = vmatprep.subr.bf16.mxu0 %v2851
        %3350 = vmatpush1.bf16.msra.mxu0 %v2850
        %3351 = vmatprep.mubr.bf16.mxu0 %v2161
        %3352 = vmatmul.mubr.bf16.gmra.mrb[0].mxu0 %v2160
        %v3353 = vpop.f32.mrb[0].mxu0
        %v3354 = vadd.f32 %v3241, %v3353
        %v3355 = vpop.f32.mrb[0].mxu0
        %v3356 = vadd.f32 %v3243, %v3355
        %v3357 = vpop.f32.mrb[0].mxu0
        %v3358 = vadd.f32 %v3245, %v3357
        %v3359 = vpop.f32.mrb[0].mxu0
        %v3360 = vadd.f32 %v3247, %v3359
        %3361 = vmatprep.mubr.bf16.mxu0 %v2165
        %3362 = vmatmul.mubr.bf16.gmra.mrb[0].mxu0 %v2164
        %v3363 = vpop.f32.mrb[0].mxu0
        %v3364 = vadd.f32 %v3251, %v3363
        %v3365 = vpop.f32.mrb[0].mxu0
        %v3366 = vadd.f32 %v3253, %v3365
        %v3367 = vpop.f32.mrb[0].mxu0
        %v3368 = vadd.f32 %v3255, %v3367
        %v3369 = vpop.f32.mrb[0].mxu0
        %v3370 = vadd.f32 %v3257, %v3369
        %3371 = vmatprep.mubr.bf16.mxu0 %v2169
        %3372 = vmatmul.mubr.bf16.gmra.mrb[0].mxu0 %v2168
        %v3373 = vpop.f32.mrb[0].mxu0
        %v3374 = vadd.f32 %v3261, %v3373
        %v3375 = vpop.f32.mrb[0].mxu0
        %v3376 = vadd.f32 %v3263, %v3375
        %v3377 = vpop.f32.mrb[0].mxu0
        %v3378 = vadd.f32 %v3265, %v3377
        %v3379 = vpop.f32.mrb[0].mxu0
        %v3380 = vadd.f32 %v3267, %v3379
        %3381 = vmatprep.mubr.bf16.mxu0 %v2173
        %3382 = vmatmul.mubr.bf16.gmra.mrb[0].mxu0 %v2172
        %v3383 = vpop.f32.mrb[0].mxu0
        %v3384 = vadd.f32 %v3271, %v3383
        %v3385 = vpop.f32.mrb[0].mxu0
        %v3386 = vadd.f32 %v3273, %v3385
        %v3387 = vpop.f32.mrb[0].mxu0
        %v3388 = vadd.f32 %v3275, %v3387
        %v3389 = vpop.f32.mrb[0].mxu0
        %v3390 = vadd.f32 %v3277, %v3389
        %3391 = vmatprep.mubr.bf16.mxu0 %v2177
        %3392 = vmatmul.mubr.bf16.gmra.mrb[0].mxu0 %v2176
        %v3393 = vpop.f32.mrb[0].mxu0
        %v3394 = vadd.f32 %v3281, %v3393
        %v3395 = vpop.f32.mrb[0].mxu0
        %v3396 = vadd.f32 %v3283, %v3395
        %v3397 = vpop.f32.mrb[0].mxu0
        %v3398 = vadd.f32 %v3285, %v3397
        %v3399 = vpop.f32.mrb[0].mxu0
        %v3400 = vadd.f32 %v3287, %v3399
        %3401 = vmatprep.mubr.bf16.mxu0 %v2181
        %3402 = vmatmul.mubr.bf16.gmra.mrb[0].mxu0 %v2180
        %v3403 = vpop.f32.mrb[0].mxu0
        %v3404 = vadd.f32 %v3291, %v3403
        %v3405 = vpop.f32.mrb[0].mxu0
        %v3406 = vadd.f32 %v3293, %v3405
        %v3407 = vpop.f32.mrb[0].mxu0
        %v3408 = vadd.f32 %v3295, %v3407
        %v3409 = vpop.f32.mrb[0].mxu0
        %v3410 = vadd.f32 %v3297, %v3409
        %3411 = vmatprep.mubr.bf16.mxu0 %v2185
        %3412 = vmatmul.mubr.bf16.gmra.mrb[0].mxu0 %v2184
        %v3413 = vpop.f32.mrb[0].mxu0
        %v3414 = vadd.f32 %v3301, %v3413
        %v3415 = vpop.f32.mrb[0].mxu0
        %v3416 = vadd.f32 %v3303, %v3415
        %v3417 = vpop.f32.mrb[0].mxu0
        %v3418 = vadd.f32 %v3305, %v3417
        %v3419 = vpop.f32.mrb[0].mxu0
        %v3420 = vadd.f32 %v3307, %v3419
        %3421 = vmatprep.mubr.bf16.mxu0 %v2189
        %3422 = vmatmul.mubr.bf16.gmra.mrb[0].mxu0 %v2188
        %v3423 = vpop.f32.mrb[0].mxu0
        %v3424 = vadd.f32 %v3311, %v3423
        %v3425 = vpop.f32.mrb[0].mxu0
        %v3426 = vadd.f32 %v3313, %v3425
        %v3427 = vpop.f32.mrb[0].mxu0
        %v3428 = vadd.f32 %v3315, %v3427
        %v3429 = vpop.f32.mrb[0].mxu0
        %v3430 = vadd.f32 %v3317, %v3429
        %3431 = vdwg.mxu0
        %v3432 = vmax.f32 %v3128, 0.0
        %v3433 = vmax.f32 %v3130, 0.0
        %v3434 = vmax.f32 %v3354, 0.0
        %v3435 = vmax.f32 %v3356, 0.0
        %v3436 = vmax.f32 %v3132, 0.0
        %v3437 = vmax.f32 %v3134, 0.0
        %v3438 = vmax.f32 %v3358, 0.0
        %v3439 = vmax.f32 %v3360, 0.0
        %v3440 = vmax.f32 %v3138, 0.0
        %v3441 = vmax.f32 %v3140, 0.0
        %v3442 = vmax.f32 %v3364, 0.0
        %v3443 = vmax.f32 %v3366, 0.0
        %v3444 = vmax.f32 %v3142, 0.0
        %v3445 = vmax.f32 %v3144, 0.0
        %v3446 = vmax.f32 %v3368, 0.0
        %v3447 = vmax.f32 %v3370, 0.0
        %v3448 = vmax.f32 %v3148, 0.0
        %v3449 = vmax.f32 %v3150, 0.0
        %v3450 = vmax.f32 %v3374, 0.0
        %v3451 = vmax.f32 %v3376, 0.0
        %v3452 = vmax.f32 %v3152, 0.0
        %v3453 = vmax.f32 %v3154, 0.0
        %v3454 = vmax.f32 %v3378, 0.0
        %v3455 = vmax.f32 %v3380, 0.0
        %v3456 = vmax.f32 %v3158, 0.0
        %v3457 = vmax.f32 %v3160, 0.0
        %v3458 = vmax.f32 %v3384, 0.0
        %v3459 = vmax.f32 %v3386, 0.0
        %v3460 = vmax.f32 %v3162, 0.0
        %v3461 = vmax.f32 %v3164, 0.0
        %v3462 = vmax.f32 %v3388, 0.0
        %v3463 = vmax.f32 %v3390, 0.0
        %v3464 = vmax.f32 %v3168, 0.0
        %v3465 = vmax.f32 %v3170, 0.0
        %v3466 = vmax.f32 %v3394, 0.0
        %v3467 = vmax.f32 %v3396, 0.0
        %v3468 = vmax.f32 %v3172, 0.0
        %v3469 = vmax.f32 %v3174, 0.0
        %v3470 = vmax.f32 %v3398, 0.0
        %v3471 = vmax.f32 %v3400, 0.0
        %v3472 = vmax.f32 %v3178, 0.0
        %v3473 = vmax.f32 %v3180, 0.0
        %v3474 = vmax.f32 %v3404, 0.0
        %v3475 = vmax.f32 %v3406, 0.0
        %v3476 = vmax.f32 %v3182, 0.0
        %v3477 = vmax.f32 %v3184, 0.0
        %v3478 = vmax.f32 %v3408, 0.0
        %v3479 = vmax.f32 %v3410, 0.0
        %v3480 = vmax.f32 %v3188, 0.0
        %v3481 = vmax.f32 %v3190, 0.0
        %v3482 = vmax.f32 %v3414, 0.0
        %v3483 = vmax.f32 %v3416, 0.0
        %v3484 = vmax.f32 %v3192, 0.0
        %v3485 = vmax.f32 %v3194, 0.0
        %v3486 = vmax.f32 %v3418, 0.0
        %v3487 = vmax.f32 %v3420, 0.0
        %v3488 = vmax.f32 %v3198, 0.0
        %v3489 = vmax.f32 %v3200, 0.0
        %v3490 = vmax.f32 %v3424, 0.0
        %v3491 = vmax.f32 %v3426, 0.0
        %v3492 = vmax.f32 %v3202, 0.0
        %v3493 = vmax.f32 %v3204, 0.0
        %v3494 = vmax.f32 %v3428, 0.0
        %v3495 = vmax.f32 %v3430, 0.0
        %v3496 = vpack.c.bf16 %v3436, %v3432
        %v3497 = vpack.c.bf16 %v3437, %v3433
        %v3498 = vpack.c.bf16 %v3438, %v3434
        %v3499 = vpack.c.bf16 %v3439, %v3435
        %v3500 = vpack.c.bf16 %v3444, %v3440
        %v3501 = vpack.c.bf16 %v3445, %v3441
        %v3502 = vpack.c.bf16 %v3446, %v3442
        %v3503 = vpack.c.bf16 %v3447, %v3443
        %v3504 = vpack.c.bf16 %v3452, %v3448
        %v3505 = vpack.c.bf16 %v3453, %v3449
        %v3506 = vpack.c.bf16 %v3454, %v3450
        %v3507 = vpack.c.bf16 %v3455, %v3451
        %v3508 = vpack.c.bf16 %v3460, %v3456
        %v3509 = vpack.c.bf16 %v3461, %v3457
        %v3510 = vpack.c.bf16 %v3462, %v3458
        %v3511 = vpack.c.bf16 %v3463, %v3459
        %v3512 = vpack.c.bf16 %v3468, %v3464
        %v3513 = vpack.c.bf16 %v3469, %v3465
        %v3514 = vpack.c.bf16 %v3470, %v3466
        %v3515 = vpack.c.bf16 %v3471, %v3467
        %v3516 = vpack.c.bf16 %v3476, %v3472
        %v3517 = vpack.c.bf16 %v3477, %v3473
        %v3518 = vpack.c.bf16 %v3478, %v3474
        %v3519 = vpack.c.bf16 %v3479, %v3475
        %v3520 = vpack.c.bf16 %v3484, %v3480
        %v3521 = vpack.c.bf16 %v3485, %v3481
        %v3522 = vpack.c.bf16 %v3486, %v3482
        %v3523 = vpack.c.bf16 %v3487, %v3483
        %v3524 = vpack.c.bf16 %v3492, %v3488
        %v3525 = vpack.c.bf16 %v3493, %v3489
        %v3526 = vpack.c.bf16 %v3494, %v3490
        %v3527 = vpack.c.bf16 %v3495, %v3491
        %v3528 = vld [vmem:[#allocation7] sm:$0xf]
        %v3529 = vld [vmem:[#allocation7 + $0x4] sm:$0xf]
        %v3530 = vld [vmem:[#allocation7 + $0x8] sm:$0xf]
        %v3531 = vld [vmem:[#allocation7 + $0xc] sm:$0xf]
        %v3532 = vld [vmem:[#allocation7 + $0x10] sm:$0xf]
        %v3533 = vld [vmem:[#allocation7 + $0x14] sm:$0xf]
        %v3534 = vld [vmem:[#allocation7 + $0x18] sm:$0xf]
        %v3535 = vld [vmem:[#allocation7 + $0x1c] sm:$0xf]
        %v3536 = vld [vmem:[#allocation7 + $0x20] sm:$0xf]
        %v3537 = vld [vmem:[#allocation7 + $0x24] sm:$0xf]
        %v3538 = vld [vmem:[#allocation7 + $0x28] sm:$0xf]
        %v3539 = vld [vmem:[#allocation7 + $0x2c] sm:$0xf]
        %v3540 = vld [vmem:[#allocation7 + $0x30] sm:$0xf]
        %v3541 = vld [vmem:[#allocation7 + $0x34] sm:$0xf]
        %v3542 = vld [vmem:[#allocation7 + $0x38] sm:$0xf]
        %v3543 = vld [vmem:[#allocation7 + $0x3c] sm:$0xf]
        %v3544 = vld [vmem:[#allocation7 + $0x40] sm:$0xf]
        %v3545 = vld [vmem:[#allocation7 + $0x44] sm:$0xf]
        %v3546 = vld [vmem:[#allocation7 + $0x48] sm:$0xf]
        %v3547 = vld [vmem:[#allocation7 + $0x4c] sm:$0xf]
        %v3548 = vld [vmem:[#allocation7 + $0x50] sm:$0xf]
        %v3549 = vld [vmem:[#allocation7 + $0x54] sm:$0xf]
        %v3550 = vld [vmem:[#allocation7 + $0x58] sm:$0xf]
        %v3551 = vld [vmem:[#allocation7 + $0x5c] sm:$0xf]
        %v3552 = vld [vmem:[#allocation7 + $0x60] sm:$0xf]
        %v3553 = vld [vmem:[#allocation7 + $0x64] sm:$0xf]
        %v3554 = vld [vmem:[#allocation7 + $0x68] sm:$0xf]
        %v3555 = vld [vmem:[#allocation7 + $0x6c] sm:$0xf]
        %v3556 = vld [vmem:[#allocation7 + $0x70] sm:$0xf]
        %v3557 = vld [vmem:[#allocation7 + $0x74] sm:$0xf]
        %v3558 = vld [vmem:[#allocation7 + $0x78] sm:$0xf]
        %v3559 = vld [vmem:[#allocation7 + $0x7c] sm:$0xf]
        %v3560 = vld [vmem:[#allocation7 + $0x80] sm:$0xf]
        %v3561 = vld [vmem:[#allocation7 + $0x84] sm:$0xf]
        %v3562 = vld [vmem:[#allocation7 + $0x88] sm:$0xf]
        %v3563 = vld [vmem:[#allocation7 + $0x8c] sm:$0xf]
        %v3564 = vld [vmem:[#allocation7 + $0x90] sm:$0xf]
        %v3565 = vld [vmem:[#allocation7 + $0x94] sm:$0xf]
        %v3566 = vld [vmem:[#allocation7 + $0x98] sm:$0xf]
        %v3567 = vld [vmem:[#allocation7 + $0x9c] sm:$0xf]
        %v3568 = vld [vmem:[#allocation7 + $0xa0] sm:$0xf]
        %v3569 = vld [vmem:[#allocation7 + $0xa4] sm:$0xf]
        %v3570 = vld [vmem:[#allocation7 + $0xa8] sm:$0xf]
        %v3571 = vld [vmem:[#allocation7 + $0xac] sm:$0xf]
        %v3572 = vld [vmem:[#allocation7 + $0xb0] sm:$0xf]
        %v3573 = vld [vmem:[#allocation7 + $0xb4] sm:$0xf]
        %v3574 = vld [vmem:[#allocation7 + $0xb8] sm:$0xf]
        %v3575 = vld [vmem:[#allocation7 + $0xbc] sm:$0xf]
        %v3576 = vld [vmem:[#allocation7 + $0xc0] sm:$0xf]
        %v3577 = vld [vmem:[#allocation7 + $0xc4] sm:$0xf]
        %v3578 = vld [vmem:[#allocation7 + $0xc8] sm:$0xf]
        %v3579 = vld [vmem:[#allocation7 + $0xcc] sm:$0xf]
        %v3580 = vld [vmem:[#allocation7 + $0xd0] sm:$0xf]
        %v3581 = vld [vmem:[#allocation7 + $0xd4] sm:$0xf]
        %v3582 = vld [vmem:[#allocation7 + $0xd8] sm:$0xf]
        %v3583 = vld [vmem:[#allocation7 + $0xdc] sm:$0xf]
        %v3584 = vld [vmem:[#allocation7 + $0xe0] sm:$0xf]
        %v3585 = vld [vmem:[#allocation7 + $0xe4] sm:$0xf]
        %v3586 = vld [vmem:[#allocation7 + $0xe8] sm:$0xf]
        %v3587 = vld [vmem:[#allocation7 + $0xec] sm:$0xf]
        %v3588 = vld [vmem:[#allocation7 + $0xf0] sm:$0xf]
        %v3589 = vld [vmem:[#allocation7 + $0xf4] sm:$0xf]
        %v3590 = vld [vmem:[#allocation7 + $0xf8] sm:$0xf]
        %v3591 = vld [vmem:[#allocation7 + $0xfc] sm:$0xf]
        %v3592 = vld [vmem:[%s8] sm:$0x1]
        %v3594 = vlaneseq
        %v3595 = vshrl.u32 %v3594, 7
        %v3596 = vsub.s32 0, %v3595
        %v3597 = vrot.slane %v3592, %v3596
        %v3663 = vunpack.c.l.b16 %v3528
        %v3664 = vunpack.c.l.b16 %v3529
        %v3665 = vunpack.c.l.b16 %v3530
        %v3666 = vunpack.c.l.b16 %v3531
        %v3667 = vunpack.c.l.b16 %v3532
        %v3668 = vunpack.c.l.b16 %v3533
        %v3669 = vunpack.c.l.b16 %v3534
        %v3670 = vunpack.c.l.b16 %v3535
        %v3671 = vunpack.c.l.b16 %v3536
        %v3672 = vunpack.c.l.b16 %v3537
        %v3673 = vunpack.c.l.b16 %v3538
        %v3674 = vunpack.c.l.b16 %v3539
        %v3675 = vunpack.c.l.b16 %v3540
        %v3676 = vunpack.c.l.b16 %v3541
        %v3677 = vunpack.c.l.b16 %v3542
        %v3678 = vunpack.c.l.b16 %v3543
        %v3679 = vunpack.c.l.b16 %v3544
        %v3680 = vunpack.c.l.b16 %v3545
        %v3681 = vunpack.c.l.b16 %v3546
        %v3682 = vunpack.c.l.b16 %v3547
        %v3683 = vunpack.c.l.b16 %v3548
        %v3684 = vunpack.c.l.b16 %v3549
        %v3685 = vunpack.c.l.b16 %v3550
        %v3686 = vunpack.c.l.b16 %v3551
        %v3687 = vunpack.c.l.b16 %v3552
        %v3688 = vunpack.c.l.b16 %v3553
        %v3689 = vunpack.c.l.b16 %v3554
        %v3690 = vunpack.c.l.b16 %v3555
        %v3691 = vunpack.c.l.b16 %v3556
        %v3692 = vunpack.c.l.b16 %v3557
        %v3693 = vunpack.c.l.b16 %v3558
        %v3694 = vunpack.c.l.b16 %v3559
        %v3695 = vunpack.c.l.b16 %v3560
        %v3696 = vunpack.c.l.b16 %v3561
        %v3697 = vunpack.c.l.b16 %v3562
        %v3698 = vunpack.c.l.b16 %v3563
        %v3699 = vunpack.c.l.b16 %v3564
        %v3700 = vunpack.c.l.b16 %v3565
        %v3701 = vunpack.c.l.b16 %v3566
        %v3702 = vunpack.c.l.b16 %v3567
        %v3703 = vunpack.c.l.b16 %v3568
        %v3704 = vunpack.c.l.b16 %v3569
        %v3705 = vunpack.c.l.b16 %v3570
        %v3706 = vunpack.c.l.b16 %v3571
        %v3707 = vunpack.c.l.b16 %v3572
        %v3708 = vunpack.c.l.b16 %v3573
        %v3709 = vunpack.c.l.b16 %v3574
        %v3710 = vunpack.c.l.b16 %v3575
        %v3711 = vunpack.c.l.b16 %v3576
        %v3712 = vunpack.c.l.b16 %v3577
        %v3713 = vunpack.c.l.b16 %v3578
        %v3714 = vunpack.c.l.b16 %v3579
        %v3715 = vunpack.c.l.b16 %v3580
        %v3716 = vunpack.c.l.b16 %v3581
        %v3717 = vunpack.c.l.b16 %v3582
        %v3718 = vunpack.c.l.b16 %v3583
        %v3719 = vunpack.c.l.b16 %v3584
        %v3720 = vunpack.c.l.b16 %v3585
        %v3721 = vunpack.c.l.b16 %v3586
        %v3722 = vunpack.c.l.b16 %v3587
        %v3723 = vunpack.c.l.b16 %v3588
        %v3724 = vunpack.c.l.b16 %v3589
        %v3725 = vunpack.c.l.b16 %v3590
        %v3726 = vunpack.c.l.b16 %v3591
        %v3727 = vpack.c.b16 %v3664, %v3663
        %v3728 = vpack.c.b16 %v3666, %v3665
        %v3729 = vpack.c.b16 %v3668, %v3667
        %v3730 = vpack.c.b16 %v3670, %v3669
        %v3731 = vpack.c.b16 %v3672, %v3671
        %v3732 = vpack.c.b16 %v3674, %v3673
        %v3733 = vpack.c.b16 %v3676, %v3675
        %v3734 = vpack.c.b16 %v3678, %v3677
        %v3735 = vpack.c.b16 %v3680, %v3679
        %v3736 = vpack.c.b16 %v3682, %v3681
        %v3737 = vpack.c.b16 %v3684, %v3683
        %v3738 = vpack.c.b16 %v3686, %v3685
        %v3739 = vpack.c.b16 %v3688, %v3687
        %v3740 = vpack.c.b16 %v3690, %v3689
        %v3741 = vpack.c.b16 %v3692, %v3691
        %v3742 = vpack.c.b16 %v3694, %v3693
        %v3743 = vpack.c.b16 %v3696, %v3695
        %v3744 = vpack.c.b16 %v3698, %v3697
        %v3745 = vpack.c.b16 %v3700, %v3699
        %v3746 = vpack.c.b16 %v3702, %v3701
        %v3747 = vpack.c.b16 %v3704, %v3703
        %v3748 = vpack.c.b16 %v3706, %v3705
        %v3749 = vpack.c.b16 %v3708, %v3707
        %v3750 = vpack.c.b16 %v3710, %v3709
        %v3751 = vpack.c.b16 %v3712, %v3711
        %v3752 = vpack.c.b16 %v3714, %v3713
        %v3753 = vpack.c.b16 %v3716, %v3715
        %v3754 = vpack.c.b16 %v3718, %v3717
        %v3755 = vpack.c.b16 %v3720, %v3719
        %v3756 = vpack.c.b16 %v3722, %v3721
        %v3757 = vpack.c.b16 %v3724, %v3723
        %v3758 = vpack.c.b16 %v3726, %v3725
        %3791 = vmatprep.subr.bf16.mxu0 0
        %3792 = vmatpush1.bf16.msra.mxu0 %v3727
        %3793 = vmatprep.subr.bf16.mxu0 0
        %3794 = vmatpush1.bf16.msra.mxu0 %v3728
        %3795 = vmatprep.subr.bf16.mxu0 0
        %3796 = vmatpush1.bf16.msra.mxu0 %v3729
        %3797 = vmatprep.subr.bf16.mxu0 0
        %3798 = vmatpush1.bf16.msra.mxu0 %v3730
        %3799 = vmatprep.subr.bf16.mxu0 0
        %3800 = vmatpush1.bf16.msra.mxu0 %v3731
        %3801 = vmatprep.subr.bf16.mxu0 0
        %3802 = vmatpush1.bf16.msra.mxu0 %v3732
        %3803 = vmatprep.subr.bf16.mxu0 0
        %3804 = vmatpush1.bf16.msra.mxu0 %v3733
        %3805 = vmatprep.subr.bf16.mxu0 0
        %3806 = vmatpush1.bf16.msra.mxu0 %v3734
        %3807 = vmatprep.subr.bf16.mxu0 0
        %3808 = vmatpush1.bf16.msra.mxu0 %v3735
        %3809 = vmatprep.subr.bf16.mxu0 0
        %3810 = vmatpush1.bf16.msra.mxu0 %v3736
        %3811 = vmatprep.subr.bf16.mxu0 0
        %3812 = vmatpush1.bf16.msra.mxu0 %v3737
        %3813 = vmatprep.subr.bf16.mxu0 0
        %3814 = vmatpush1.bf16.msra.mxu0 %v3738
        %3815 = vmatprep.subr.bf16.mxu0 0
        %3816 = vmatpush1.bf16.msra.mxu0 %v3739
        %3817 = vmatprep.subr.bf16.mxu0 0
        %3818 = vmatpush1.bf16.msra.mxu0 %v3740
        %3819 = vmatprep.subr.bf16.mxu0 0
        %3820 = vmatpush1.bf16.msra.mxu0 %v3741
        %3821 = vmatprep.subr.bf16.mxu0 0
        %3822 = vmatpush1.bf16.msra.mxu0 %v3742
        %3823 = vmatprep.mubr.bf16.mxu0 %v3497
        %3824 = vmatmul.mubr.bf16.gmra.mrb[0].mxu0 %v3496
        %v3825 = vpop.f32.mrb[0].mxu0
        %v3826 = vadd.f32 %v3597, %v3825
        %v3827 = vpop.f32.mrb[0].mxu0
        %v3828 = vpop.f32.mrb[0].mxu0
        %v3829 = vadd.f32 %v3597, %v3828
        %v3830 = vpop.f32.mrb[0].mxu0
        %3831 = vmatprep.mubr.bf16.mxu0 %v3501
        %3832 = vmatmul.mubr.bf16.gmra.mrb[0].mxu0 %v3500
        %v3833 = vpop.f32.mrb[0].mxu0
        %v3834 = vadd.f32 %v3597, %v3833
        %v3835 = vpop.f32.mrb[0].mxu0
        %v3836 = vpop.f32.mrb[0].mxu0
        %v3837 = vadd.f32 %v3597, %v3836
        %v3838 = vpop.f32.mrb[0].mxu0
        %3839 = vmatprep.mubr.bf16.mxu0 %v3505
        %3840 = vmatmul.mubr.bf16.gmra.mrb[0].mxu0 %v3504
        %v3841 = vpop.f32.mrb[0].mxu0
        %v3842 = vadd.f32 %v3597, %v3841
        %v3843 = vpop.f32.mrb[0].mxu0
        %v3844 = vpop.f32.mrb[0].mxu0
        %v3845 = vadd.f32 %v3597, %v3844
        %v3846 = vpop.f32.mrb[0].mxu0
        %3847 = vmatprep.mubr.bf16.mxu0 %v3509
        %3848 = vmatmul.mubr.bf16.gmra.mrb[0].mxu0 %v3508
        %v3849 = vpop.f32.mrb[0].mxu0
        %v3850 = vadd.f32 %v3597, %v3849
        %v3851 = vpop.f32.mrb[0].mxu0
        %v3852 = vpop.f32.mrb[0].mxu0
        %v3853 = vadd.f32 %v3597, %v3852
        %v3854 = vpop.f32.mrb[0].mxu0
        %3855 = vmatprep.mubr.bf16.mxu0 %v3513
        %3856 = vmatmul.mubr.bf16.gmra.mrb[0].mxu0 %v3512
        %v3857 = vpop.f32.mrb[0].mxu0
        %v3858 = vadd.f32 %v3597, %v3857
        %v3859 = vpop.f32.mrb[0].mxu0
        %v3860 = vpop.f32.mrb[0].mxu0
        %v3861 = vadd.f32 %v3597, %v3860
        %v3862 = vpop.f32.mrb[0].mxu0
        %3863 = vmatprep.mubr.bf16.mxu0 %v3517
        %3864 = vmatmul.mubr.bf16.gmra.mrb[0].mxu0 %v3516
        %v3865 = vpop.f32.mrb[0].mxu0
        %v3866 = vadd.f32 %v3597, %v3865
        %v3867 = vpop.f32.mrb[0].mxu0
        %v3868 = vpop.f32.mrb[0].mxu0
        %v3869 = vadd.f32 %v3597, %v3868
        %v3870 = vpop.f32.mrb[0].mxu0
        %3871 = vmatprep.mubr.bf16.mxu0 %v3521
        %3872 = vmatmul.mubr.bf16.gmra.mrb[0].mxu0 %v3520
        %v3873 = vpop.f32.mrb[0].mxu0
        %v3874 = vadd.f32 %v3597, %v3873
        %v3875 = vpop.f32.mrb[0].mxu0
        %v3876 = vpop.f32.mrb[0].mxu0
        %v3877 = vadd.f32 %v3597, %v3876
        %v3878 = vpop.f32.mrb[0].mxu0
        %3879 = vmatprep.mubr.bf16.mxu0 %v3525
        %3880 = vmatmul.mubr.bf16.gmra.mrb[0].mxu0 %v3524
        %v3881 = vpop.f32.mrb[0].mxu0
        %v3882 = vadd.f32 %v3597, %v3881
        %v3883 = vpop.f32.mrb[0].mxu0
        %v3884 = vpop.f32.mrb[0].mxu0
        %v3885 = vadd.f32 %v3597, %v3884
        %v3886 = vpop.f32.mrb[0].mxu0
        %3887 = vdwg.mxu0
        %3888 = vmatprep.subr.bf16.mxu0 0
        %3889 = vmatpush1.bf16.msra.mxu0 %v3743
        %3890 = vmatprep.subr.bf16.mxu0 0
        %3891 = vmatpush1.bf16.msra.mxu0 %v3744
        %3892 = vmatprep.subr.bf16.mxu0 0
        %3893 = vmatpush1.bf16.msra.mxu0 %v3745
        %3894 = vmatprep.subr.bf16.mxu0 0
        %3895 = vmatpush1.bf16.msra.mxu0 %v3746
        %3896 = vmatprep.subr.bf16.mxu0 0
        %3897 = vmatpush1.bf16.msra.mxu0 %v3747
        %3898 = vmatprep.subr.bf16.mxu0 0
        %3899 = vmatpush1.bf16.msra.mxu0 %v3748
        %3900 = vmatprep.subr.bf16.mxu0 0
        %3901 = vmatpush1.bf16.msra.mxu0 %v3749
        %3902 = vmatprep.subr.bf16.mxu0 0
        %3903 = vmatpush1.bf16.msra.mxu0 %v3750
        %3904 = vmatprep.subr.bf16.mxu0 0
        %3905 = vmatpush1.bf16.msra.mxu0 %v3751
        %3906 = vmatprep.subr.bf16.mxu0 0
        %3907 = vmatpush1.bf16.msra.mxu0 %v3752
        %3908 = vmatprep.subr.bf16.mxu0 0
        %3909 = vmatpush1.bf16.msra.mxu0 %v3753
        %3910 = vmatprep.subr.bf16.mxu0 0
        %3911 = vmatpush1.bf16.msra.mxu0 %v3754
        %3912 = vmatprep.subr.bf16.mxu0 0
        %3913 = vmatpush1.bf16.msra.mxu0 %v3755
        %3914 = vmatprep.subr.bf16.mxu0 0
        %3915 = vmatpush1.bf16.msra.mxu0 %v3756
        %3916 = vmatprep.subr.bf16.mxu0 0
        %3917 = vmatpush1.bf16.msra.mxu0 %v3757
        %3918 = vmatprep.subr.bf16.mxu0 0
        %3919 = vmatpush1.bf16.msra.mxu0 %v3758
        %3920 = vmatprep.mubr.bf16.mxu0 %v3499
        %3921 = vmatmul.mubr.bf16.gmra.mrb[0].mxu0 %v3498
        %v3922 = vpop.f32.mrb[0].mxu0
        %v3923 = vadd.f32 %v3826, %v3922
        %v3924 = vpop.f32.mrb[0].mxu0
        %v3925 = vpop.f32.mrb[0].mxu0
        %v3926 = vadd.f32 %v3829, %v3925
        %v3927 = vpop.f32.mrb[0].mxu0
        %3928 = vmatprep.mubr.bf16.mxu0 %v3503
        %3929 = vmatmul.mubr.bf16.gmra.mrb[0].mxu0 %v3502
        %v3930 = vpop.f32.mrb[0].mxu0
        %v3931 = vadd.f32 %v3834, %v3930
        %v3932 = vpop.f32.mrb[0].mxu0
        %v3933 = vpop.f32.mrb[0].mxu0
        %v3934 = vadd.f32 %v3837, %v3933
        %v3935 = vpop.f32.mrb[0].mxu0
        %3936 = vmatprep.mubr.bf16.mxu0 %v3507
        %3937 = vmatmul.mubr.bf16.gmra.mrb[0].mxu0 %v3506
        %v3938 = vpop.f32.mrb[0].mxu0
        %v3939 = vadd.f32 %v3842, %v3938
        %v3940 = vpop.f32.mrb[0].mxu0
        %v3941 = vpop.f32.mrb[0].mxu0
        %v3942 = vadd.f32 %v3845, %v3941
        %v3943 = vpop.f32.mrb[0].mxu0
        %3944 = vmatprep.mubr.bf16.mxu0 %v3511
        %3945 = vmatmul.mubr.bf16.gmra.mrb[0].mxu0 %v3510
        %v3946 = vpop.f32.mrb[0].mxu0
        %v3947 = vadd.f32 %v3850, %v3946
        %v3948 = vpop.f32.mrb[0].mxu0
        %v3949 = vpop.f32.mrb[0].mxu0
        %v3950 = vadd.f32 %v3853, %v3949
        %v3951 = vpop.f32.mrb[0].mxu0
        %3952 = vmatprep.mubr.bf16.mxu0 %v3515
        %3953 = vmatmul.mubr.bf16.gmra.mrb[0].mxu0 %v3514
        %v3954 = vpop.f32.mrb[0].mxu0
        %v3955 = vadd.f32 %v3858, %v3954
        %v3956 = vpop.f32.mrb[0].mxu0
        %v3957 = vpop.f32.mrb[0].mxu0
        %v3958 = vadd.f32 %v3861, %v3957
        %v3959 = vpop.f32.mrb[0].mxu0
        %3960 = vmatprep.mubr.bf16.mxu0 %v3519
        %3961 = vmatmul.mubr.bf16.gmra.mrb[0].mxu0 %v3518
        %v3962 = vpop.f32.mrb[0].mxu0
        %v3963 = vadd.f32 %v3866, %v3962
        %v3964 = vpop.f32.mrb[0].mxu0
        %v3965 = vpop.f32.mrb[0].mxu0
        %v3966 = vadd.f32 %v3869, %v3965
        %v3967 = vpop.f32.mrb[0].mxu0
        %3968 = vmatprep.mubr.bf16.mxu0 %v3523
        %3969 = vmatmul.mubr.bf16.gmra.mrb[0].mxu0 %v3522
        %v3970 = vpop.f32.mrb[0].mxu0
        %v3971 = vadd.f32 %v3874, %v3970
        %v3972 = vpop.f32.mrb[0].mxu0
        %v3973 = vpop.f32.mrb[0].mxu0
        %v3974 = vadd.f32 %v3877, %v3973
        %v3975 = vpop.f32.mrb[0].mxu0
        %3976 = vmatprep.mubr.bf16.mxu0 %v3527
        %3977 = vmatmul.mubr.bf16.gmra.mrb[0].mxu0 %v3526
        %v3978 = vpop.f32.mrb[0].mxu0
        %v3979 = vadd.f32 %v3882, %v3978
        %v3980 = vpop.f32.mrb[0].mxu0
        %v3981 = vpop.f32.mrb[0].mxu0
        %v3982 = vadd.f32 %v3885, %v3981
        %v3983 = vpop.f32.mrb[0].mxu0
        %3984 = vdwg.mxu0
        %v3985 = vpack.c.bf16 %v3926, %v3923
        %v3986 = vpack.c.bf16 %v3934, %v3931
        %v3987 = vpack.c.bf16 %v3942, %v3939
        %v3988 = vpack.c.bf16 %v3950, %v3947
        %v3989 = vpack.c.bf16 %v3958, %v3955
        %v3990 = vpack.c.bf16 %v3966, %v3963
        %v3991 = vpack.c.bf16 %v3974, %v3971
        %v3992 = vpack.c.bf16 %v3982, %v3979
        %v4001 = vunpack.c.l.b16 %v3985
        %v4002 = vunpack.c.h.b16 %v3985
        %v4003 = vunpack.c.l.b16 %v3986
        %v4004 = vunpack.c.h.b16 %v3986
        %v4005 = vunpack.c.l.b16 %v3987
        %v4006 = vunpack.c.h.b16 %v3987
        %v4007 = vunpack.c.l.b16 %v3988
        %v4008 = vunpack.c.h.b16 %v3988
        %v4009 = vunpack.c.l.b16 %v3989
        %v4010 = vunpack.c.h.b16 %v3989
        %v4011 = vunpack.c.l.b16 %v3990
        %v4012 = vunpack.c.h.b16 %v3990
        %v4013 = vunpack.c.l.b16 %v3991
        %v4014 = vunpack.c.h.b16 %v3991
        %v4015 = vunpack.c.l.b16 %v3992
        %v4016 = vunpack.c.h.b16 %v3992
        %v4017 = vpack.c.b16 %v4001, %v4001
        %v4018 = vpack.c.b16 %v4002, %v4002
        %v4019 = vpack.c.b16 %v4003, %v4003
        %v4020 = vpack.c.b16 %v4004, %v4004
        %v4021 = vpack.c.b16 %v4005, %v4005
        %v4022 = vpack.c.b16 %v4006, %v4006
        %v4023 = vpack.c.b16 %v4007, %v4007
        %v4024 = vpack.c.b16 %v4008, %v4008
        %v4025 = vpack.c.b16 %v4009, %v4009
        %v4026 = vpack.c.b16 %v4010, %v4010
        %v4027 = vpack.c.b16 %v4011, %v4011
        %v4028 = vpack.c.b16 %v4012, %v4012
        %v4029 = vpack.c.b16 %v4013, %v4013
        %v4030 = vpack.c.b16 %v4014, %v4014
        %v4031 = vpack.c.b16 %v4015, %v4015
        %v4032 = vpack.c.b16 %v4016, %v4016
        %4049 = vst [vmem:[%s370] sm:$0xf] %v4017
        %4050 = vst [vmem:[%s370 + $0x4] sm:$0xf] %v4018
        %4051 = vst [vmem:[%s370 + $0x8] sm:$0xf] %v4019
        %4052 = vst [vmem:[%s370 + $0xc] sm:$0xf] %v4020
        %4053 = vst [vmem:[%s370 + $0x10] sm:$0xf] %v4021
        %4054 = vst [vmem:[%s370 + $0x14] sm:$0xf] %v4022
        %4055 = vst [vmem:[%s370 + $0x18] sm:$0xf] %v4023
        %4056 = vst [vmem:[%s370 + $0x1c] sm:$0xf] %v4024
        %4057 = vst [vmem:[%s370 + $0x20] sm:$0xf] %v4025
        %4058 = vst [vmem:[%s370 + $0x24] sm:$0xf] %v4026
        %4059 = vst [vmem:[%s370 + $0x28] sm:$0xf] %v4027
        %4060 = vst [vmem:[%s370 + $0x2c] sm:$0xf] %v4028
        %4061 = vst [vmem:[%s370 + $0x30] sm:$0xf] %v4029
        %4062 = vst [vmem:[%s370 + $0x34] sm:$0xf] %v4030
        %4063 = vst [vmem:[%s370 + $0x38] sm:$0xf] %v4031
        %4064 = vst [vmem:[%s370 + $0x3c] sm:$0xf] %v4032
        %s4065 = sand.u32 %s227, 1
        %s4066 = scalar_lea.sflag [#allocation4], %s4065
        %s4067 = sand.u32 %s227, 1
        %s4068 = smul.addr %s4067, 64
        %s4069 = scalar_lea.vmem [#allocation8], %s4068
        // Predicated region
        $region69: #{tpu_custom_call.1} parent=55 // pred_check
          %p4070 = pneg %p237
        $region70: #{tpu_custom_call.1} parent=55 // pred_check_branch
          %4072 = sbr.rel (%p4070) target = $region72
        $region71: #{tpu_custom_call.1} parent=55 // pred_region
          %s4073 = smul.u32 16, %s25
          %s4075 = ssub.s32 1024, 1024
          %4076 = vsyncadd %s4066, %s4075
          %s4077 = smul.addr %s4073, 64
          %s4078 = scalar_lea.hbm %s9, %s4077
          %s4079 = sshll.u32 %s4069, 4
          %s4080 = int_to_ptr.vmem [resolvable:$true] %s4079
          %4085 = dma.vmem_to_hbm [thread:$0]  %s4080, 1024, %s4078, %s4066, 64, 64, 4
        $region72: #{tpu_custom_call.1} parent=55 // pred_fallthru
          _
      $region56: #{tpu_custom_call.1} parent=5 // pred_fallthru
        _
      %p4086 = scmp.le.s32.totalorder 2, %s20
      // Predicated region
      $region73: #{tpu_custom_call.1} parent=5 // pred_check
        %p4087 = pneg %p4086
      $region74: #{tpu_custom_call.1} parent=5 // pred_check_branch
        %4089 = sbr.rel (%p4087) target = $region76
      $region75: #{tpu_custom_call.1} parent=5 // pred_region
        %s4090 = ssub.s32 %s20, 2
        // Predicated region
        $region77: #{tpu_custom_call.1} parent=75 // pred_check
          %p4091 = pneg %p243
        $region78: #{tpu_custom_call.1} parent=75 // pred_check_branch
          %4093 = sbr.rel (%p4091) target = $region80
        $region79: #{tpu_custom_call.1} parent=75 // pred_region
          %s4094 = sand.u32 %s228, 1
          %s4095 = scalar_lea.sflag [#allocation4], %s4094
          %s4096 = sand.u32 %s228, 1
          %s4097 = smul.addr %s4096, 64
          %s4098 = scalar_lea.vmem [#allocation8], %s4097
          %4099 = dma.done %s4095, 1024
        $region80: #{tpu_custom_call.1} parent=75 // pred_fallthru
          _
      $region76: #{tpu_custom_call.1} parent=5 // pred_fallthru
        _
    $region6: #{tpu_custom_call.1} parent=1 // loop_footer
      %s24 = sadd.s32 1, %s20
    $region7: #{tpu_custom_call.1} parent=1 // loop_footer_branch
      %19 = sbr.rel target = $region3
    $region8: #{tpu_custom_call.1} parent=1 // loop_exit
      _
    %4100 = vsyncpa [#allocation3], 1
    %s4101 = scalar_lea.sflag [#allocation3], 1
    %4102 = vsyncpa %s4101, 1
    %4103 = vsyncpa [#allocation6], 1
    %4104 = vsyncpa [#allocation4], 1
    %s4105 = scalar_lea.sflag [#allocation4], 1
    %4106 = vsyncpa %s4105, 1

</llo_original>
